<compile_context>
chip_gen: v5e
topology: v5e:2x2
jax: 0.10.0
libtpu: 0.0.40
codegen_flags: <defaults>
</compile_context>

<pallas_src>
import math

import jax
import jax.numpy as jnp
import numpy as np
from jax.experimental import pallas as pl
from jax.experimental.pallas import tpu as pltpu

IN_FEATURES = 32 * 32 * 3   # 3072
HIDDEN = 512
NUM_CLASSES = 10
OUT_PAD = 128               # lane-dense padded output width (multiple of 128)
NEG_SLOPE = 0.01            # torch.nn.LeakyReLU() default


def _leaky_relu(v):
    return jnp.where(v >= 0, v, NEG_SLOPE * v)


def _round_up(x, m):
    return ((x + m - 1) // m) * m


def mlp_kernel(x_ref, w1_ref, b1_ref, ws_ref, bs_ref, w2_ref, b2_ref, out_ref):
    # x_ref:  (TB, 3072) bf16      w1_ref: (3072, 512) bf16    b1_ref: (1, 512) f32
    # ws_ref: (bn, 512)  f32       bs_ref: (bn, 512)   f32
    # w2_ref: (bn, 512, 128) bf16  b2_ref: (1, 128)    f32     out_ref: (TB, 128) f32
    branch_num = ws_ref.shape[0]

    # First linear: bf16 MXU matmul with f32 accumulation; bias + LeakyReLU in f32.
    h = jnp.dot(x_ref[...], w1_ref[...], preferred_element_type=jnp.float32)
    h = _leaky_relu(h + b1_ref[...])

    # Hoist the small per-branch affine params out of the unrolled loop.
    ws = ws_ref[...]
    bs = bs_ref[...]

    # Per-branch affine -> LeakyReLU -> partial matmul accumulated over branches
    # (equivalent to branch-major concat along features + one (bn*512, 128) matmul).
    acc = jnp.zeros(out_ref.shape, dtype=jnp.float32)
    for i in range(branch_num):                     # static, small trip count
        branch = _leaky_relu(h * ws[i] + bs[i])     # f32 VPU work
        acc = acc + jnp.dot(branch.astype(jnp.bfloat16), w2_ref[i],
                            preferred_element_type=jnp.float32)

    out_ref[...] = acc + b2_ref[...]


def mlp_forward(x_nchw, params, *, block_b=256):
    """x_nchw: (B, 3, 32, 32) float32. Returns (B, 10) float32."""
    w1, b1, ws, bs, w2, b2 = params
    B = x_nchw.shape[0]
    branch_num = ws.shape[0]

    # Flatten in C,H,W order (same as torch .view(B, -1)); matmul operands are bf16.
    x_flat = x_nchw.reshape(B, -1).astype(jnp.bfloat16)

    # Batch tile: multiple of the MXU row dim at large B, rounded to the (8,128)
    # sublane constraint at small B. Pad the batch to a whole number of tiles.
    TB = block_b if B >= block_b else _round_up(B, 8)
    B_pad = _round_up(B, TB)
    if B_pad != B:
        x_flat = jnp.pad(x_flat, ((0, B_pad - B), (0, 0)))

    # Kernel-ready params: bf16 matmul weights, lane-dense (128-wide) last layer,
    # f32 for everything touched by the VPU.
    w1_k = w1.astype(jnp.bfloat16)
    b1_k = b1.reshape(1, HIDDEN).astype(jnp.float32)
    ws_k = ws.astype(jnp.float32)
    bs_k = bs.astype(jnp.float32)
    w2_k = jnp.pad(w2, ((0, 0), (0, 0), (0, OUT_PAD - NUM_CLASSES))).astype(jnp.bfloat16)
    b2_k = jnp.pad(b2.reshape(1, NUM_CLASSES),
                   ((0, 0), (0, OUT_PAD - NUM_CLASSES))).astype(jnp.float32)

    grid = (B_pad // TB,)
    flops = (2 * B_pad * HIDDEN * (IN_FEATURES + branch_num * OUT_PAD)
             + 8 * B_pad * branch_num * HIDDEN)      # matmuls + affine/leaky work
    bytes_accessed = (x_flat.size * 2 + w1_k.size * 2 + w2_k.size * 2
                      + (b1_k.size + ws_k.size + bs_k.size + b2_k.size) * 4
                      + B_pad * OUT_PAD * 4)

    out_padded = pl.pallas_call(
        mlp_kernel,
        out_shape=jax.ShapeDtypeStruct((B_pad, OUT_PAD), jnp.float32),
        grid=grid,
        in_specs=[
            pl.BlockSpec((TB, IN_FEATURES), lambda i: (i, 0)),               # x: batch tile
            pl.BlockSpec((IN_FEATURES, HIDDEN), lambda i: (0, 0)),           # w1: resident
            pl.BlockSpec((1, HIDDEN), lambda i: (0, 0)),                     # b1
            pl.BlockSpec((branch_num, HIDDEN), lambda i: (0, 0)),            # ws
            pl.BlockSpec((branch_num, HIDDEN), lambda i: (0, 0)),            # bs
            pl.BlockSpec((branch_num, HIDDEN, OUT_PAD), lambda i: (0, 0, 0)),  # w2
            pl.BlockSpec((1, OUT_PAD), lambda i: (0, 0)),                    # b2
        ],
        out_specs=pl.BlockSpec((TB, OUT_PAD), lambda i: (i, 0)),
        compiler_params=pltpu.CompilerParams(
            dimension_semantics=("parallel",),
            vmem_limit_bytes=32 * 1024 * 1024,
        ),
        cost_estimate=pl.CostEstimate(flops=flops, transcendentals=0,
                                      bytes_accessed=bytes_accessed),
    )(x_flat, w1_k, b1_k, ws_k, bs_k, w2_k, b2_k)

    # Drop batch padding and the lane padding of the 10-class output.
    return out_padded[:B, :NUM_CLASSES]


def init_params(key, branch_num):
    """Deterministic parameter init mirroring the PyTorch module's shapes.

    - layer:        Linear(3072, 512)          -> w1 (3072, 512) [pre-transposed], b1 (512,)
    - custom_ws/bs: My_3D_Parameter(bn, 512)   -> (bn, 512) each (kaiming-uniform-like)
    - layer_last:   Linear(bn*512, 10)         -> w2 (bn, 512, 10) [= W2.T reshaped], b2 (10,)
    """
    k1, k2, k3, k4, k5, k6 = jax.random.split(key, 6)

    def lin_init(kw, kb, fan_in, shape_w, shape_b):
        bound_w = 1.0 / math.sqrt(fan_in)
        w = jax.random.uniform(kw, shape_w, jnp.float32, -bound_w, bound_w)
        b = jax.random.uniform(kb, shape_b, jnp.float32, -bound_w, bound_w)
        return w, b

    w1, b1 = lin_init(k1, k2, IN_FEATURES, (IN_FEATURES, HIDDEN), (HIDDEN,))

    bound = 1.0 / math.sqrt(HIDDEN)
    ws = jax.random.uniform(k3, (branch_num, HIDDEN), jnp.float32, -bound, bound)
    bs = jax.random.uniform(k4, (branch_num, HIDDEN), jnp.float32, -bound, bound)

    w2_flat, b2 = lin_init(k5, k6, branch_num * HIDDEN,
                           (branch_num * HIDDEN, NUM_CLASSES), (NUM_CLASSES,))
    w2 = w2_flat.reshape(branch_num, HIDDEN, NUM_CLASSES)
    return w1, b1, ws, bs, w2, b2


def mlp_reference(x_nchw, params):
    """Pure-JAX reference reproducing the PyTorch forward (with the same bf16
    matmul-operand casts the kernel uses, f32 accumulation everywhere)."""
    w1, b1, ws, bs, w2, b2 = params
    B = x_nchw.shape[0]
    branch_num = ws.shape[0]
    x = x_nchw.reshape(B, -1)
    h = jnp.dot(x.astype(jnp.bfloat16), w1.astype(jnp.bfloat16),
                preferred_element_type=jnp.float32) + b1
    h = _leaky_relu(h)
    branches = h[:, None, :] * ws[None, :, :] + bs[None, :, :]   # (B, bn, 512)
    branches = _leaky_relu(branches)
    flat = branches.astype(jnp.bfloat16).reshape(B, branch_num * HIDDEN)  # branch-major
    return jnp.dot(flat,
                   w2.reshape(branch_num * HIDDEN, NUM_CLASSES).astype(jnp.bfloat16),
                   preferred_element_type=jnp.float32) + b2


if __name__ == "__main__":
    BATCH = 2
    BRANCH_NUM = 4

    key = jax.random.PRNGKey(0)
    kx, kp = jax.random.split(key)
    x = jax.random.normal(kx, (BATCH, 3, 32, 32), dtype=jnp.float32)
    params = init_params(kp, BRANCH_NUM)

    out = jax.block_until_ready(mlp_forward(x, params))

    ref = mlp_reference(x, params)
    assert out.shape == (BATCH, NUM_CLASSES)
    np.testing.assert_allclose(np.asarray(out), np.asarray(ref), rtol=2e-3, atol=2e-3)

    print("KERNEL_OK")
</pallas_src>

<mosaic_0001>
module attributes {stable_mosaic.version = 11 : i64} {
  func.func @mlp_kernel(%arg0: i32, %arg1: memref<8x3072xbf16, #tpu.memory_space<vmem>>, %arg2: memref<3072x512xbf16, #tpu.memory_space<vmem>>, %arg3: memref<1x512xf32, #tpu.memory_space<vmem>>, %arg4: memref<4x512xf32, #tpu.memory_space<vmem>>, %arg5: memref<4x512xf32, #tpu.memory_space<vmem>>, %arg6: memref<4x512x128xbf16, #tpu.memory_space<vmem>>, %arg7: memref<1x128xf32, #tpu.memory_space<vmem>>, %arg8: memref<8x128xf32, #tpu.memory_space<vmem>>) attributes {dimension_semantics = [#tpu.dimension_semantics<parallel>], iteration_bounds = array<i64: 1>, scalar_prefetch = 0 : i64, scratch_operands = 0 : i64, tpu.core_type = #tpu.core_type<tc>, window_params = [{transform_indices = @transform_0, window_bounds = array<i64: 8, 3072>}, {pipeline_mode = #tpu.pipeline_mode<synchronous>, transform_indices = @transform_1, window_bounds = array<i64: 3072, 512>}, {pipeline_mode = #tpu.pipeline_mode<synchronous>, transform_indices = @transform_2, window_bounds = array<i64: 1, 512>}, {pipeline_mode = #tpu.pipeline_mode<synchronous>, transform_indices = @transform_3, window_bounds = array<i64: 4, 512>}, {pipeline_mode = #tpu.pipeline_mode<synchronous>, transform_indices = @transform_4, window_bounds = array<i64: 4, 512>}, {pipeline_mode = #tpu.pipeline_mode<synchronous>, transform_indices = @transform_5, window_bounds = array<i64: 4, 512, 128>}, {pipeline_mode = #tpu.pipeline_mode<synchronous>, transform_indices = @transform_6, window_bounds = array<i64: 1, 128>}, {transform_indices = @transform_7, window_bounds = array<i64: 8, 128>}]} {
    %c0 = arith.constant 0 : index
    %c0_0 = arith.constant 0 : index
    %0 = vector.load %arg1[%c0, %c0_0] : memref<8x3072xbf16, #tpu.memory_space<vmem>>, vector<8x3072xbf16>
    %c0_1 = arith.constant 0 : index
    %c0_2 = arith.constant 0 : index
    %1 = vector.load %arg2[%c0_1, %c0_2] : memref<3072x512xbf16, #tpu.memory_space<vmem>>, vector<3072x512xbf16>
    %cst = arith.constant dense<0.000000e+00> : vector<8x512xf32>
    %2 = tpu.matmul %0, %1, %cst {dimension_numbers = #tpu.dot_dimension_numbers<[1], [0], [0], [1], [0, 0, 1, 1], [], []>} : vector<8x3072xbf16>, vector<3072x512xbf16>, vector<8x512xf32> -> vector<8x512xf32>
    %c0_3 = arith.constant 0 : index
    %c0_4 = arith.constant 0 : index
    %3 = vector.load %arg3[%c0_3, %c0_4] : memref<1x512xf32, #tpu.memory_space<vmem>>, vector<1x512xf32>
    %4 = vector.broadcast %3 : vector<1x512xf32> to vector<8x512xf32>
    %5 = arith.addf %2, %4 : vector<8x512xf32>
    %cst_5 = arith.constant 0.000000e+00 : f32
    %6 = vector.broadcast %cst_5 : f32 to vector<8x512xf32>
    %7 = arith.cmpf oge, %5, %6 : vector<8x512xf32>
    %cst_6 = arith.constant 0.00999999977 : f32
    %8 = vector.broadcast %cst_6 : f32 to vector<8x512xf32>
    %9 = arith.mulf %8, %5 : vector<8x512xf32>
    %10 = arith.select %7, %5, %9 : vector<8x512xi1>, vector<8x512xf32>
    %c0_7 = arith.constant 0 : index
    %c0_8 = arith.constant 0 : index
    %11 = vector.load %arg4[%c0_7, %c0_8] : memref<4x512xf32, #tpu.memory_space<vmem>>, vector<4x512xf32>
    %c0_9 = arith.constant 0 : index
    %c0_10 = arith.constant 0 : index
    %12 = vector.load %arg5[%c0_9, %c0_10] : memref<4x512xf32, #tpu.memory_space<vmem>>, vector<4x512xf32>
    %cst_11 = arith.constant 0.000000e+00 : f32
    %13 = vector.broadcast %cst_11 : f32 to vector<8x128xf32>
    %14 = vector.extract_strided_slice %11 {offsets = [0, 0], sizes = [1, 512], strides = [1, 1]} : vector<4x512xf32> to vector<1x512xf32>
    %15 = vector.shape_cast %14 : vector<1x512xf32> to vector<512xf32>
    %16 = vector.shape_cast %15 : vector<512xf32> to vector<1x512xf32>
    %17 = vector.broadcast %16 : vector<1x512xf32> to vector<8x512xf32>
    %18 = arith.mulf %10, %17 : vector<8x512xf32>
    %19 = vector.extract_strided_slice %12 {offsets = [0, 0], sizes = [1, 512], strides = [1, 1]} : vector<4x512xf32> to vector<1x512xf32>
    %20 = vector.shape_cast %19 : vector<1x512xf32> to vector<512xf32>
    %21 = vector.shape_cast %20 : vector<512xf32> to vector<1x512xf32>
    %22 = vector.broadcast %21 : vector<1x512xf32> to vector<8x512xf32>
    %23 = arith.addf %18, %22 : vector<8x512xf32>
    %cst_12 = arith.constant 0.000000e+00 : f32
    %24 = vector.broadcast %cst_12 : f32 to vector<8x512xf32>
    %25 = arith.cmpf oge, %23, %24 : vector<8x512xf32>
    %cst_13 = arith.constant 0.00999999977 : f32
    %26 = vector.broadcast %cst_13 : f32 to vector<8x512xf32>
    %27 = arith.mulf %26, %23 : vector<8x512xf32>
    %28 = arith.select %25, %23, %27 : vector<8x512xi1>, vector<8x512xf32>
    %29 = arith.truncf %28 : vector<8x512xf32> to vector<8x512xbf16>
    %c0_14 = arith.constant 0 : index
    %c0_15 = arith.constant 0 : index
    %c0_16 = arith.constant 0 : index
    %30 = vector.load %arg6[%c0_14, %c0_15, %c0_16] : memref<4x512x128xbf16, #tpu.memory_space<vmem>>, vector<1x512x128xbf16>
    %31 = vector.shape_cast %30 : vector<1x512x128xbf16> to vector<512x128xbf16>
    %cst_17 = arith.constant dense<0.000000e+00> : vector<8x128xf32>
    %32 = tpu.matmul %29, %31, %cst_17 {dimension_numbers = #tpu.dot_dimension_numbers<[1], [0], [0], [1], [0, 0, 1, 1], [], []>} : vector<8x512xbf16>, vector<512x128xbf16>, vector<8x128xf32> -> vector<8x128xf32>
    %33 = arith.addf %13, %32 : vector<8x128xf32>
    %34 = vector.extract_strided_slice %11 {offsets = [1, 0], sizes = [1, 512], strides = [1, 1]} : vector<4x512xf32> to vector<1x512xf32>
    %35 = vector.shape_cast %34 : vector<1x512xf32> to vector<512xf32>
    %36 = vector.shape_cast %35 : vector<512xf32> to vector<1x512xf32>
    %37 = vector.broadcast %36 : vector<1x512xf32> to vector<8x512xf32>
    %38 = arith.mulf %10, %37 : vector<8x512xf32>
    %39 = vector.extract_strided_slice %12 {offsets = [1, 0], sizes = [1, 512], strides = [1, 1]} : vector<4x512xf32> to vector<1x512xf32>
    %40 = vector.shape_cast %39 : vector<1x512xf32> to vector<512xf32>
    %41 = vector.shape_cast %40 : vector<512xf32> to vector<1x512xf32>
    %42 = vector.broadcast %41 : vector<1x512xf32> to vector<8x512xf32>
    %43 = arith.addf %38, %42 : vector<8x512xf32>
    %cst_18 = arith.constant 0.000000e+00 : f32
    %44 = vector.broadcast %cst_18 : f32 to vector<8x512xf32>
    %45 = arith.cmpf oge, %43, %44 : vector<8x512xf32>
    %cst_19 = arith.constant 0.00999999977 : f32
    %46 = vector.broadcast %cst_19 : f32 to vector<8x512xf32>
    %47 = arith.mulf %46, %43 : vector<8x512xf32>
    %48 = arith.select %45, %43, %47 : vector<8x512xi1>, vector<8x512xf32>
    %49 = arith.truncf %48 : vector<8x512xf32> to vector<8x512xbf16>
    %c1 = arith.constant 1 : index
    %c0_20 = arith.constant 0 : index
    %c0_21 = arith.constant 0 : index
    %50 = vector.load %arg6[%c1, %c0_20, %c0_21] : memref<4x512x128xbf16, #tpu.memory_space<vmem>>, vector<1x512x128xbf16>
    %51 = vector.shape_cast %50 : vector<1x512x128xbf16> to vector<512x128xbf16>
    %cst_22 = arith.constant dense<0.000000e+00> : vector<8x128xf32>
    %52 = tpu.matmul %49, %51, %cst_22 {dimension_numbers = #tpu.dot_dimension_numbers<[1], [0], [0], [1], [0, 0, 1, 1], [], []>} : vector<8x512xbf16>, vector<512x128xbf16>, vector<8x128xf32> -> vector<8x128xf32>
    %53 = arith.addf %33, %52 : vector<8x128xf32>
    %54 = vector.extract_strided_slice %11 {offsets = [2, 0], sizes = [1, 512], strides = [1, 1]} : vector<4x512xf32> to vector<1x512xf32>
    %55 = vector.shape_cast %54 : vector<1x512xf32> to vector<512xf32>
    %56 = vector.shape_cast %55 : vector<512xf32> to vector<1x512xf32>
    %57 = vector.broadcast %56 : vector<1x512xf32> to vector<8x512xf32>
    %58 = arith.mulf %10, %57 : vector<8x512xf32>
    %59 = vector.extract_strided_slice %12 {offsets = [2, 0], sizes = [1, 512], strides = [1, 1]} : vector<4x512xf32> to vector<1x512xf32>
    %60 = vector.shape_cast %59 : vector<1x512xf32> to vector<512xf32>
    %61 = vector.shape_cast %60 : vector<512xf32> to vector<1x512xf32>
    %62 = vector.broadcast %61 : vector<1x512xf32> to vector<8x512xf32>
    %63 = arith.addf %58, %62 : vector<8x512xf32>
    %cst_23 = arith.constant 0.000000e+00 : f32
    %64 = vector.broadcast %cst_23 : f32 to vector<8x512xf32>
    %65 = arith.cmpf oge, %63, %64 : vector<8x512xf32>
    %cst_24 = arith.constant 0.00999999977 : f32
    %66 = vector.broadcast %cst_24 : f32 to vector<8x512xf32>
    %67 = arith.mulf %66, %63 : vector<8x512xf32>
    %68 = arith.select %65, %63, %67 : vector<8x512xi1>, vector<8x512xf32>
    %69 = arith.truncf %68 : vector<8x512xf32> to vector<8x512xbf16>
    %c2 = arith.constant 2 : index
    %c0_25 = arith.constant 0 : index
    %c0_26 = arith.constant 0 : index
    %70 = vector.load %arg6[%c2, %c0_25, %c0_26] : memref<4x512x128xbf16, #tpu.memory_space<vmem>>, vector<1x512x128xbf16>
    %71 = vector.shape_cast %70 : vector<1x512x128xbf16> to vector<512x128xbf16>
    %cst_27 = arith.constant dense<0.000000e+00> : vector<8x128xf32>
    %72 = tpu.matmul %69, %71, %cst_27 {dimension_numbers = #tpu.dot_dimension_numbers<[1], [0], [0], [1], [0, 0, 1, 1], [], []>} : vector<8x512xbf16>, vector<512x128xbf16>, vector<8x128xf32> -> vector<8x128xf32>
    %73 = arith.addf %53, %72 : vector<8x128xf32>
    %74 = vector.extract_strided_slice %11 {offsets = [3, 0], sizes = [1, 512], strides = [1, 1]} : vector<4x512xf32> to vector<1x512xf32>
    %75 = vector.shape_cast %74 : vector<1x512xf32> to vector<512xf32>
    %76 = vector.shape_cast %75 : vector<512xf32> to vector<1x512xf32>
    %77 = vector.broadcast %76 : vector<1x512xf32> to vector<8x512xf32>
    %78 = arith.mulf %10, %77 : vector<8x512xf32>
    %79 = vector.extract_strided_slice %12 {offsets = [3, 0], sizes = [1, 512], strides = [1, 1]} : vector<4x512xf32> to vector<1x512xf32>
    %80 = vector.shape_cast %79 : vector<1x512xf32> to vector<512xf32>
    %81 = vector.shape_cast %80 : vector<512xf32> to vector<1x512xf32>
    %82 = vector.broadcast %81 : vector<1x512xf32> to vector<8x512xf32>
    %83 = arith.addf %78, %82 : vector<8x512xf32>
    %cst_28 = arith.constant 0.000000e+00 : f32
    %84 = vector.broadcast %cst_28 : f32 to vector<8x512xf32>
    %85 = arith.cmpf oge, %83, %84 : vector<8x512xf32>
    %cst_29 = arith.constant 0.00999999977 : f32
    %86 = vector.broadcast %cst_29 : f32 to vector<8x512xf32>
    %87 = arith.mulf %86, %83 : vector<8x512xf32>
    %88 = arith.select %85, %83, %87 : vector<8x512xi1>, vector<8x512xf32>
    %89 = arith.truncf %88 : vector<8x512xf32> to vector<8x512xbf16>
    %c3 = arith.constant 3 : index
    %c0_30 = arith.constant 0 : index
    %c0_31 = arith.constant 0 : index
    %90 = vector.load %arg6[%c3, %c0_30, %c0_31] : memref<4x512x128xbf16, #tpu.memory_space<vmem>>, vector<1x512x128xbf16>
    %91 = vector.shape_cast %90 : vector<1x512x128xbf16> to vector<512x128xbf16>
    %cst_32 = arith.constant dense<0.000000e+00> : vector<8x128xf32>
    %92 = tpu.matmul %89, %91, %cst_32 {dimension_numbers = #tpu.dot_dimension_numbers<[1], [0], [0], [1], [0, 0, 1, 1], [], []>} : vector<8x512xbf16>, vector<512x128xbf16>, vector<8x128xf32> -> vector<8x128xf32>
    %93 = arith.addf %73, %92 : vector<8x128xf32>
    %c0_33 = arith.constant 0 : index
    %c0_34 = arith.constant 0 : index
    %94 = vector.load %arg7[%c0_33, %c0_34] : memref<1x128xf32, #tpu.memory_space<vmem>>, vector<1x128xf32>
    %95 = vector.broadcast %94 : vector<1x128xf32> to vector<8x128xf32>
    %96 = arith.addf %93, %95 : vector<8x128xf32>
    %c0_35 = arith.constant 0 : index
    %c0_36 = arith.constant 0 : index
    %97 = vector.load %arg8[%c0_35, %c0_36] : memref<8x128xf32, #tpu.memory_space<vmem>>, vector<8x128xf32>
    tpu.vector_store %arg8[%c0_35, %c0_36], %96 {strides = array<i32>} : memref<8x128xf32, #tpu.memory_space<vmem>>, vector<8x128xf32>,
    return
  }
  func.func @transform_0(%arg0: i32) -> (i32, i32) {
    %c0_i32 = arith.constant 0 : i32
    %c0_i32_0 = arith.constant 0 : i32
    return %arg0, %c0_i32 : i32, i32
  }
  func.func @transform_1(%arg0: i32) -> (i32, i32) {
    %c0_i32 = arith.constant 0 : i32
    %c0_i32_0 = arith.constant 0 : i32
    %c0_i32_1 = arith.constant 0 : i32
    return %c0_i32, %c0_i32_0 : i32, i32
  }
  func.func @transform_2(%arg0: i32) -> (i32, i32) {
    %c0_i32 = arith.constant 0 : i32
    %c0_i32_0 = arith.constant 0 : i32
    %c0_i32_1 = arith.constant 0 : i32
    return %c0_i32, %c0_i32_0 : i32, i32
  }
  func.func @transform_3(%arg0: i32) -> (i32, i32) {
    %c0_i32 = arith.constant 0 : i32
    %c0_i32_0 = arith.constant 0 : i32
    %c0_i32_1 = arith.constant 0 : i32
    return %c0_i32, %c0_i32_0 : i32, i32
  }
  func.func @transform_4(%arg0: i32) -> (i32, i32) {
    %c0_i32 = arith.constant 0 : i32
    %c0_i32_0 = arith.constant 0 : i32
    %c0_i32_1 = arith.constant 0 : i32
    return %c0_i32, %c0_i32_0 : i32, i32
  }
  func.func @transform_5(%arg0: i32) -> (i32, i32, i32) {
    %c0_i32 = arith.constant 0 : i32
    %c0_i32_0 = arith.constant 0 : i32
    %c0_i32_1 = arith.constant 0 : i32
    %c0_i32_2 = arith.constant 0 : i32
    return %c0_i32, %c0_i32_0, %c0_i32_1 : i32, i32, i32
  }
  func.func @transform_6(%arg0: i32) -> (i32, i32) {
    %c0_i32 = arith.constant 0 : i32
    %c0_i32_0 = arith.constant 0 : i32
    %c0_i32_1 = arith.constant 0 : i32
    return %c0_i32, %c0_i32_0 : i32, i32
  }
  func.func @transform_7(%arg0: i32) -> (i32, i32) {
    %c0_i32 = arith.constant 0 : i32
    %c0_i32_0 = arith.constant 0 : i32
    return %arg0, %c0_i32 : i32, i32
  }
}

</mosaic_0001>

<llo_original>
// kernel: tpu_custom_call.1
$region0: #{tpu_custom_call.1}
  #allocation0 [shape = 'u32[]', space=smem, size = 0x4, offset = 0x4, fixed_abs, tag = 'smem constant byte address 0x4 - core index']
  #allocation1 [shape = 'u32[72,128]{1,0:T(1,128)}', space=vmem, size = 0x9000, scoped, tag = 'internal scratch']
  %s0 = inlined_call_operand.hbm [shape: bf16[8,3072], index: 0, kind: input, shape index: {}]
  %s1 = inlined_call_operand.hbm [shape: bf16[3072,512], index: 1, kind: input, shape index: {}]
  %s2 = inlined_call_operand.hbm [shape: f32[1,512], index: 2, kind: input, shape index: {}]
  %s3 = inlined_call_operand.hbm [shape: f32[4,512], index: 3, kind: input, shape index: {}]
  %s4 = inlined_call_operand.hbm [shape: f32[4,512], index: 4, kind: input, shape index: {}]
  %s5 = inlined_call_operand.hbm [shape: bf16[4,512,128], index: 5, kind: input, shape index: {}]
  %s6 = inlined_call_operand.hbm [shape: f32[1,128], index: 6, kind: input, shape index: {}]
  %s7 = inlined_call_operand.hbm [shape: f32[8,128], index: 7, kind: output, shape index: {}]
  %s8 = sld [smem:[#allocation0]]
  $region66: #{tpu_custom_call.1} parent=0
    _
  %s10 = ssub.s32 1, %s8
  %s11 = scalar_select 0, %s10, %s8
  $region1: #{tpu_custom_call.1} parent=0
    #allocation2 [shape = 'u8[49152]{0}', space=vmem, size = 0xc000, scoped, tag = 'input window, operand 0, single buffered']
    #allocation3 [shape = 's32[1]{0}', space=sflag, size = 0x4, scoped, tag = 'scoped memory for tpu_custom_call.1']
    #allocation4 [shape = 's32[1]{0}', space=sflag, size = 0x4, scoped, tag = 'scoped memory for tpu_custom_call.1']
    #allocation5 [shape = 'u8[3145728]{0}', space=vmem, size = 0x300000, scoped, tag = 'input window, operand 1, single buffered']
    #allocation6 [shape = 's32[1]{0}', space=sflag, size = 0x4, scoped, tag = 'scoped memory for tpu_custom_call.1']
    #allocation7 [shape = 'u8[2048]{0}', space=vmem, size = 0x800, scoped, tag = 'input window, operand 2, single buffered']
    #allocation8 [shape = 'u8[8192]{0}', space=vmem, size = 0x2000, scoped, tag = 'input window, operand 3, single buffered']
    #allocation9 [shape = 's32[1]{0}', space=sflag, size = 0x4, scoped, tag = 'scoped memory for tpu_custom_call.1']
    #allocation10 [shape = 'u8[8192]{0}', space=vmem, size = 0x2000, scoped, tag = 'input window, operand 4, single buffered']
    #allocation11 [shape = 'u8[524288]{0}', space=vmem, size = 0x80000, scoped, tag = 'input window, operand 5, single buffered']
    #allocation12 [shape = 's32[1]{0}', space=sflag, size = 0x4, scoped, tag = 'scoped memory for tpu_custom_call.1']
    #allocation13 [shape = 'u8[512]{0}', space=vmem, size = 0x400, scoped, tag = 'input window, operand 6, single buffered']
    #allocation14 [shape = 'u8[4096]{0}', space=vmem, size = 0x1000, scoped, tag = 'output window, operand 0, single buffered']
    %12 = vsyncpa [#allocation3], 0
    %13 = vsyncpa [#allocation6], 0
    %14 = vsyncpa [#allocation9], 0
    %15 = vsyncpa [#allocation12], 0
    %16 = vsyncpa [#allocation4], 0
    // Predicated region
    $region2: #{tpu_custom_call.1} parent=1 // pred_check
      _
    $region3: #{tpu_custom_call.1} parent=1 // pred_check_branch
      %18 = sbr.rel (0) target = $region5
    $region4: #{tpu_custom_call.1} parent=1 // pred_region
      %20 = vsyncadd [#allocation3], 0
      %s22 = sshll.u32 %s0, 4
      %s23 = int_to_ptr.hbm [resolvable:$true] %s22
      %s24 = sshll.u32 [#allocation2], 4
      %s25 = int_to_ptr.vmem [resolvable:$true] %s24
      %27 = dma.hbm_to_vmem [thread:$0]  %s23, 1536, %s25, [#allocation3]
    $region5: #{tpu_custom_call.1} parent=1 // pred_fallthru
      _
    // Predicated region
    $region6: #{tpu_custom_call.1} parent=1 // pred_check
      _
    $region7: #{tpu_custom_call.1} parent=1 // pred_check_branch
      %29 = sbr.rel (0) target = $region9
    $region8: #{tpu_custom_call.1} parent=1 // pred_region
      %31 = vsyncadd [#allocation6], 0
      %s32 = sshll.u32 %s1, 4
      %s33 = int_to_ptr.hbm [resolvable:$true] %s32
      %s34 = sshll.u32 [#allocation5], 4
      %s35 = int_to_ptr.vmem [resolvable:$true] %s34
      %40 = dma.hbm_to_vmem [thread:$0]  %s33, 98304, %s35, [#allocation6], 256, 256, 16
    $region9: #{tpu_custom_call.1} parent=1 // pred_fallthru
      _
    // Predicated region
    $region10: #{tpu_custom_call.1} parent=1 // pred_check
      _
    $region11: #{tpu_custom_call.1} parent=1 // pred_check_branch
      %42 = sbr.rel (0) target = $region13
    $region12: #{tpu_custom_call.1} parent=1 // pred_region
      %44 = vsyncadd [#allocation6], 0
      %s46 = sshll.u32 %s2, 4
      %s47 = int_to_ptr.hbm [resolvable:$true] %s46
      %s48 = sshll.u32 [#allocation7], 4
      %s49 = int_to_ptr.vmem [resolvable:$true] %s48
      %51 = dma.hbm_to_vmem [thread:$0]  %s47, 64, %s49, [#allocation6]
    $region13: #{tpu_custom_call.1} parent=1 // pred_fallthru
      _
    // Predicated region
    $region14: #{tpu_custom_call.1} parent=1 // pred_check
      _
    $region15: #{tpu_custom_call.1} parent=1 // pred_check_branch
      %53 = sbr.rel (0) target = $region17
    $region16: #{tpu_custom_call.1} parent=1 // pred_region
      %55 = vsyncadd [#allocation9], 0
      %s57 = sshll.u32 %s3, 4
      %s58 = int_to_ptr.hbm [resolvable:$true] %s57
      %s59 = sshll.u32 [#allocation8], 4
      %s60 = int_to_ptr.vmem [resolvable:$true] %s59
      %62 = dma.hbm_to_vmem [thread:$0]  %s58, 256, %s60, [#allocation9]
    $region17: #{tpu_custom_call.1} parent=1 // pred_fallthru
      _
    // Predicated region
    $region18: #{tpu_custom_call.1} parent=1 // pred_check
      _
    $region19: #{tpu_custom_call.1} parent=1 // pred_check_branch
      %64 = sbr.rel (0) target = $region21
    $region20: #{tpu_custom_call.1} parent=1 // pred_region
      %66 = vsyncadd [#allocation9], 0
      %s68 = sshll.u32 %s4, 4
      %s69 = int_to_ptr.hbm [resolvable:$true] %s68
      %s70 = sshll.u32 [#allocation10], 4
      %s71 = int_to_ptr.vmem [resolvable:$true] %s70
      %73 = dma.hbm_to_vmem [thread:$0]  %s69, 256, %s71, [#allocation9]
    $region21: #{tpu_custom_call.1} parent=1 // pred_fallthru
      _
    // Predicated region
    $region22: #{tpu_custom_call.1} parent=1 // pred_check
      _
    $region23: #{tpu_custom_call.1} parent=1 // pred_check_branch
      %75 = sbr.rel (0) target = $region25
    $region24: #{tpu_custom_call.1} parent=1 // pred_region
      %77 = vsyncadd [#allocation12], 0
      %s78 = sshll.u32 %s5, 4
      %s79 = int_to_ptr.hbm [resolvable:$true] %s78
      %s80 = sshll.u32 [#allocation11], 4
      %s81 = int_to_ptr.vmem [resolvable:$true] %s80
      %86 = dma.hbm_to_vmem [thread:$0]  %s79, 16384, %s81, [#allocation12], 64, 64, 4
    $region25: #{tpu_custom_call.1} parent=1 // pred_fallthru
      _
    // Predicated region
    $region26: #{tpu_custom_call.1} parent=1 // pred_check
      _
    $region27: #{tpu_custom_call.1} parent=1 // pred_check_branch
      %88 = sbr.rel (0) target = $region29
    $region28: #{tpu_custom_call.1} parent=1 // pred_region
      %90 = vsyncadd [#allocation12], 0
      %s92 = sshll.u32 %s6, 4
      %s93 = int_to_ptr.hbm [resolvable:$true] %s92
      %s94 = sshll.u32 [#allocation13], 4
      %s95 = int_to_ptr.vmem [resolvable:$true] %s94
      %97 = dma.hbm_to_vmem [thread:$0]  %s93, 16, %s95, [#allocation12]
    $region29: #{tpu_custom_call.1} parent=1 // pred_fallthru
      _
    // Predicated region
    $region30: #{tpu_custom_call.1} parent=1 // pred_check
      _
    $region31: #{tpu_custom_call.1} parent=1 // pred_check_branch
      %99 = sbr.rel (0) target = $region33
    $region32: #{tpu_custom_call.1} parent=1 // pred_region
      %101 = dma.done [#allocation3], 1536
    $region33: #{tpu_custom_call.1} parent=1 // pred_fallthru
      _
    // Predicated region
    $region34: #{tpu_custom_call.1} parent=1 // pred_check
      _
    $region35: #{tpu_custom_call.1} parent=1 // pred_check_branch
      %103 = sbr.rel (0) target = $region37
    $region36: #{tpu_custom_call.1} parent=1 // pred_region
      %105 = dma.done [#allocation6], 98304
    $region37: #{tpu_custom_call.1} parent=1 // pred_fallthru
      _
    // Predicated region
    $region38: #{tpu_custom_call.1} parent=1 // pred_check
      _
    $region39: #{tpu_custom_call.1} parent=1 // pred_check_branch
      %107 = sbr.rel (0) target = $region41
    $region40: #{tpu_custom_call.1} parent=1 // pred_region
      %109 = dma.done [#allocation6], 64
    $region41: #{tpu_custom_call.1} parent=1 // pred_fallthru
      _
    // Predicated region
    $region42: #{tpu_custom_call.1} parent=1 // pred_check
      _
    $region43: #{tpu_custom_call.1} parent=1 // pred_check_branch
      %111 = sbr.rel (0) target = $region45
    $region44: #{tpu_custom_call.1} parent=1 // pred_region
      %113 = dma.done [#allocation9], 256
    $region45: #{tpu_custom_call.1} parent=1 // pred_fallthru
      _
    // Predicated region
    $region46: #{tpu_custom_call.1} parent=1 // pred_check
      _
    $region47: #{tpu_custom_call.1} parent=1 // pred_check_branch
      %115 = sbr.rel (0) target = $region49
    $region48: #{tpu_custom_call.1} parent=1 // pred_region
      %117 = dma.done [#allocation9], 256
    $region49: #{tpu_custom_call.1} parent=1 // pred_fallthru
      _
    // Predicated region
    $region50: #{tpu_custom_call.1} parent=1 // pred_check
      _
    $region51: #{tpu_custom_call.1} parent=1 // pred_check_branch
      %119 = sbr.rel (0) target = $region53
    $region52: #{tpu_custom_call.1} parent=1 // pred_region
      %121 = dma.done [#allocation12], 16384
    $region53: #{tpu_custom_call.1} parent=1 // pred_fallthru
      _
    // Predicated region
    $region54: #{tpu_custom_call.1} parent=1 // pred_check
      _
    $region55: #{tpu_custom_call.1} parent=1 // pred_check_branch
      %123 = sbr.rel (0) target = $region57
    $region56: #{tpu_custom_call.1} parent=1 // pred_region
      %125 = dma.done [#allocation12], 16
    $region57: #{tpu_custom_call.1} parent=1 // pred_fallthru
      _
    %v126 = vld [vmem:[#allocation2] sm:$0xff]
    %v127 = vld [vmem:[#allocation2 + $0x8] sm:$0xff]
    %v128 = vld [vmem:[#allocation2 + $0x10] sm:$0xff]
    %v129 = vld [vmem:[#allocation2 + $0x18] sm:$0xff]
    %v130 = vld [vmem:[#allocation2 + $0x20] sm:$0xff]
    %v131 = vld [vmem:[#allocation2 + $0x28] sm:$0xff]
    %v132 = vld [vmem:[#allocation2 + $0x30] sm:$0xff]
    %v133 = vld [vmem:[#allocation2 + $0x38] sm:$0xff]
    %v134 = vld [vmem:[#allocation2 + $0x40] sm:$0xff]
    %v135 = vld [vmem:[#allocation2 + $0x48] sm:$0xff]
    %v136 = vld [vmem:[#allocation2 + $0x50] sm:$0xff]
    %v137 = vld [vmem:[#allocation2 + $0x58] sm:$0xff]
    %v138 = vld [vmem:[#allocation5] sm:$0xff]
    %v139 = vld [vmem:[#allocation5 + $0x8] sm:$0xff]
    %v140 = vld [vmem:[#allocation5 + $0x10] sm:$0xff]
    %v141 = vld [vmem:[#allocation5 + $0x18] sm:$0xff]
    %v142 = vld [vmem:[#allocation5 + $0x20] sm:$0xff]
    %v143 = vld [vmem:[#allocation5 + $0x28] sm:$0xff]
    %v144 = vld [vmem:[#allocation5 + $0x30] sm:$0xff]
    %v145 = vld [vmem:[#allocation5 + $0x38] sm:$0xff]
    %v146 = vld [vmem:[#allocation5 + $0x40] sm:$0xff]
    %v147 = vld [vmem:[#allocation5 + $0x48] sm:$0xff]
    %v148 = vld [vmem:[#allocation5 + $0x50] sm:$0xff]
    %v149 = vld [vmem:[#allocation5 + $0x58] sm:$0xff]
    %v150 = vld [vmem:[#allocation5 + $0x60] sm:$0xff]
    %v151 = vld [vmem:[#allocation5 + $0x68] sm:$0xff]
    %v152 = vld [vmem:[#allocation5 + $0x70] sm:$0xff]
    %v153 = vld [vmem:[#allocation5 + $0x78] sm:$0xff]
    %v154 = vld [vmem:[#allocation5 + $0x80] sm:$0xff]
    %v155 = vld [vmem:[#allocation5 + $0x88] sm:$0xff]
    %v156 = vld [vmem:[#allocation5 + $0x90] sm:$0xff]
    %v157 = vld [vmem:[#allocation5 + $0x98] sm:$0xff]
    %v158 = vld [vmem:[#allocation5 + $0xa0] sm:$0xff]
    %v159 = vld [vmem:[#allocation5 + $0xa8] sm:$0xff]
    %v160 = vld [vmem:[#allocation5 + $0xb0] sm:$0xff]
    %v161 = vld [vmem:[#allocation5 + $0xb8] sm:$0xff]
    %v162 = vld [vmem:[#allocation5 + $0xc0] sm:$0xff]
    %v163 = vld [vmem:[#allocation5 + $0xc8] sm:$0xff]
    %v164 = vld [vmem:[#allocation5 + $0xd0] sm:$0xff]
    %v165 = vld [vmem:[#allocation5 + $0xd8] sm:$0xff]
    %v166 = vld [vmem:[#allocation5 + $0xe0] sm:$0xff]
    %v167 = vld [vmem:[#allocation5 + $0xe8] sm:$0xff]
    %v168 = vld [vmem:[#allocation5 + $0xf0] sm:$0xff]
    %v169 = vld [vmem:[#allocation5 + $0xf8] sm:$0xff]
    %v170 = vld [vmem:[#allocation5 + $0x100] sm:$0xff]
    %v171 = vld [vmem:[#allocation5 + $0x108] sm:$0xff]
    %v172 = vld [vmem:[#allocation5 + $0x110] sm:$0xff]
    %v173 = vld [vmem:[#allocation5 + $0x118] sm:$0xff]
    %v174 = vld [vmem:[#allocation5 + $0x120] sm:$0xff]
    %v175 = vld [vmem:[#allocation5 + $0x128] sm:$0xff]
    %v176 = vld [vmem:[#allocation5 + $0x130] sm:$0xff]
    %v177 = vld [vmem:[#allocation5 + $0x138] sm:$0xff]
    %v178 = vld [vmem:[#allocation5 + $0x140] sm:$0xff]
    %v179 = vld [vmem:[#allocation5 + $0x148] sm:$0xff]
    %v180 = vld [vmem:[#allocation5 + $0x150] sm:$0xff]
    %v181 = vld [vmem:[#allocation5 + $0x158] sm:$0xff]
    %v182 = vld [vmem:[#allocation5 + $0x160] sm:$0xff]
    %v183 = vld [vmem:[#allocation5 + $0x168] sm:$0xff]
    %v184 = vld [vmem:[#allocation5 + $0x170] sm:$0xff]
    %v185 = vld [vmem:[#allocation5 + $0x178] sm:$0xff]
    %v186 = vld [vmem:[#allocation5 + $0x180] sm:$0xff]
    %v187 = vld [vmem:[#allocation5 + $0x188] sm:$0xff]
    %v188 = vld [vmem:[#allocation5 + $0x190] sm:$0xff]
    %v189 = vld [vmem:[#allocation5 + $0x198] sm:$0xff]
    %v190 = vld [vmem:[#allocation5 + $0x1a0] sm:$0xff]
    %v191 = vld [vmem:[#allocation5 + $0x1a8] sm:$0xff]
    %v192 = vld [vmem:[#allocation5 + $0x1b0] sm:$0xff]
    %v193 = vld [vmem:[#allocation5 + $0x1b8] sm:$0xff]
    %v194 = vld [vmem:[#allocation5 + $0x1c0] sm:$0xff]
    %v195 = vld [vmem:[#allocation5 + $0x1c8] sm:$0xff]
    %v196 = vld [vmem:[#allocation5 + $0x1d0] sm:$0xff]
    %v197 = vld [vmem:[#allocation5 + $0x1d8] sm:$0xff]
    %v198 = vld [vmem:[#allocation5 + $0x1e0] sm:$0xff]
    %v199 = vld [vmem:[#allocation5 + $0x1e8] sm:$0xff]
    %v200 = vld [vmem:[#allocation5 + $0x1f0] sm:$0xff]
    %v201 = vld [vmem:[#allocation5 + $0x1f8] sm:$0xff]
    %v202 = vld [vmem:[#allocation5 + $0x200] sm:$0xff]
    %v203 = vld [vmem:[#allocation5 + $0x208] sm:$0xff]
    %v204 = vld [vmem:[#allocation5 + $0x210] sm:$0xff]
    %v205 = vld [vmem:[#allocation5 + $0x218] sm:$0xff]
    %v206 = vld [vmem:[#allocation5 + $0x220] sm:$0xff]
    %v207 = vld [vmem:[#allocation5 + $0x228] sm:$0xff]
    %v208 = vld [vmem:[#allocation5 + $0x230] sm:$0xff]
    %v209 = vld [vmem:[#allocation5 + $0x238] sm:$0xff]
    %v210 = vld [vmem:[#allocation5 + $0x240] sm:$0xff]
    %v211 = vld [vmem:[#allocation5 + $0x248] sm:$0xff]
    %v212 = vld [vmem:[#allocation5 + $0x250] sm:$0xff]
    %v213 = vld [vmem:[#allocation5 + $0x258] sm:$0xff]
    %v214 = vld [vmem:[#allocation5 + $0x260] sm:$0xff]
    %v215 = vld [vmem:[#allocation5 + $0x268] sm:$0xff]
    %v216 = vld [vmem:[#allocation5 + $0x270] sm:$0xff]
    %v217 = vld [vmem:[#allocation5 + $0x278] sm:$0xff]
    %v218 = vld [vmem:[#allocation5 + $0x280] sm:$0xff]
    %v219 = vld [vmem:[#allocation5 + $0x288] sm:$0xff]
    %v220 = vld [vmem:[#allocation5 + $0x290] sm:$0xff]
    %v221 = vld [vmem:[#allocation5 + $0x298] sm:$0xff]
    %v222 = vld [vmem:[#allocation5 + $0x2a0] sm:$0xff]
    %v223 = vld [vmem:[#allocation5 + $0x2a8] sm:$0xff]
    %v224 = vld [vmem:[#allocation5 + $0x2b0] sm:$0xff]
    %v225 = vld [vmem:[#allocation5 + $0x2b8] sm:$0xff]
    %v226 = vld [vmem:[#allocation5 + $0x2c0] sm:$0xff]
    %v227 = vld [vmem:[#allocation5 + $0x2c8] sm:$0xff]
    %v228 = vld [vmem:[#allocation5 + $0x2d0] sm:$0xff]
    %v229 = vld [vmem:[#allocation5 + $0x2d8] sm:$0xff]
    %v230 = vld [vmem:[#allocation5 + $0x2e0] sm:$0xff]
    %v231 = vld [vmem:[#allocation5 + $0x2e8] sm:$0xff]
    %v232 = vld [vmem:[#allocation5 + $0x2f0] sm:$0xff]
    %v233 = vld [vmem:[#allocation5 + $0x2f8] sm:$0xff]
    %v234 = vld [vmem:[#allocation5 + $0x300] sm:$0xff]
    %v235 = vld [vmem:[#allocation5 + $0x308] sm:$0xff]
    %v236 = vld [vmem:[#allocation5 + $0x310] sm:$0xff]
    %v237 = vld [vmem:[#allocation5 + $0x318] sm:$0xff]
    %v238 = vld [vmem:[#allocation5 + $0x320] sm:$0xff]
    %v239 = vld [vmem:[#allocation5 + $0x328] sm:$0xff]
    %v240 = vld [vmem:[#allocation5 + $0x330] sm:$0xff]
    %v241 = vld [vmem:[#allocation5 + $0x338] sm:$0xff]
    %v242 = vld [vmem:[#allocation5 + $0x340] sm:$0xff]
    %v243 = vld [vmem:[#allocation5 + $0x348] sm:$0xff]
    %v244 = vld [vmem:[#allocation5 + $0x350] sm:$0xff]
    %v245 = vld [vmem:[#allocation5 + $0x358] sm:$0xff]
    %v246 = vld [vmem:[#allocation5 + $0x360] sm:$0xff]
    %v247 = vld [vmem:[#allocation5 + $0x368] sm:$0xff]
    %v248 = vld [vmem:[#allocation5 + $0x370] sm:$0xff]
    %v249 = vld [vmem:[#allocation5 + $0x378] sm:$0xff]
    %v250 = vld [vmem:[#allocation5 + $0x380] sm:$0xff]
    %v251 = vld [vmem:[#allocation5 + $0x388] sm:$0xff]
    %v252 = vld [vmem:[#allocation5 + $0x390] sm:$0xff]
    %v253 = vld [vmem:[#allocation5 + $0x398] sm:$0xff]
    %v254 = vld [vmem:[#allocation5 + $0x3a0] sm:$0xff]
    %v255 = vld [vmem:[#allocation5 + $0x3a8] sm:$0xff]
    %v256 = vld [vmem:[#allocation5 + $0x3b0] sm:$0xff]
    %v257 = vld [vmem:[#allocation5 + $0x3b8] sm:$0xff]
    %v258 = vld [vmem:[#allocation5 + $0x3c0] sm:$0xff]
    %v259 = vld [vmem:[#allocation5 + $0x3c8] sm:$0xff]
    %v260 = vld [vmem:[#allocation5 + $0x3d0] sm:$0xff]
    %v261 = vld [vmem:[#allocation5 + $0x3d8] sm:$0xff]
    %v262 = vld [vmem:[#allocation5 + $0x3e0] sm:$0xff]
    %v263 = vld [vmem:[#allocation5 + $0x3e8] sm:$0xff]
    %v264 = vld [vmem:[#allocation5 + $0x3f0] sm:$0xff]
    %v265 = vld [vmem:[#allocation5 + $0x3f8] sm:$0xff]
    %v266 = vld [vmem:[#allocation5 + $0x400] sm:$0xff]
    %v267 = vld [vmem:[#allocation5 + $0x408] sm:$0xff]
    %v268 = vld [vmem:[#allocation5 + $0x410] sm:$0xff]
    %v269 = vld [vmem:[#allocation5 + $0x418] sm:$0xff]
    %v270 = vld [vmem:[#allocation5 + $0x420] sm:$0xff]
    %v271 = vld [vmem:[#allocation5 + $0x428] sm:$0xff]
    %v272 = vld [vmem:[#allocation5 + $0x430] sm:$0xff]
    %v273 = vld [vmem:[#allocation5 + $0x438] sm:$0xff]
    %v274 = vld [vmem:[#allocation5 + $0x440] sm:$0xff]
    %v275 = vld [vmem:[#allocation5 + $0x448] sm:$0xff]
    %v276 = vld [vmem:[#allocation5 + $0x450] sm:$0xff]
    %v277 = vld [vmem:[#allocation5 + $0x458] sm:$0xff]
    %v278 = vld [vmem:[#allocation5 + $0x460] sm:$0xff]
    %v279 = vld [vmem:[#allocation5 + $0x468] sm:$0xff]
    %v280 = vld [vmem:[#allocation5 + $0x470] sm:$0xff]
    %v281 = vld [vmem:[#allocation5 + $0x478] sm:$0xff]
    %v282 = vld [vmem:[#allocation5 + $0x480] sm:$0xff]
    %v283 = vld [vmem:[#allocation5 + $0x488] sm:$0xff]
    %v284 = vld [vmem:[#allocation5 + $0x490] sm:$0xff]
    %v285 = vld [vmem:[#allocation5 + $0x498] sm:$0xff]
    %v286 = vld [vmem:[#allocation5 + $0x4a0] sm:$0xff]
    %v287 = vld [vmem:[#allocation5 + $0x4a8] sm:$0xff]
    %v288 = vld [vmem:[#allocation5 + $0x4b0] sm:$0xff]
    %v289 = vld [vmem:[#allocation5 + $0x4b8] sm:$0xff]
    %v290 = vld [vmem:[#allocation5 + $0x4c0] sm:$0xff]
    %v291 = vld [vmem:[#allocation5 + $0x4c8] sm:$0xff]
    %v292 = vld [vmem:[#allocation5 + $0x4d0] sm:$0xff]
    %v293 = vld [vmem:[#allocation5 + $0x4d8] sm:$0xff]
    %v294 = vld [vmem:[#allocation5 + $0x4e0] sm:$0xff]
    %v295 = vld [vmem:[#allocation5 + $0x4e8] sm:$0xff]
    %v296 = vld [vmem:[#allocation5 + $0x4f0] sm:$0xff]
    %v297 = vld [vmem:[#allocation5 + $0x4f8] sm:$0xff]
    %v298 = vld [vmem:[#allocation5 + $0x500] sm:$0xff]
    %v299 = vld [vmem:[#allocation5 + $0x508] sm:$0xff]
    %v300 = vld [vmem:[#allocation5 + $0x510] sm:$0xff]
    %v301 = vld [vmem:[#allocation5 + $0x518] sm:$0xff]
    %v302 = vld [vmem:[#allocation5 + $0x520] sm:$0xff]
    %v303 = vld [vmem:[#allocation5 + $0x528] sm:$0xff]
    %v304 = vld [vmem:[#allocation5 + $0x530] sm:$0xff]
    %v305 = vld [vmem:[#allocation5 + $0x538] sm:$0xff]
    %v306 = vld [vmem:[#allocation5 + $0x540] sm:$0xff]
    %v307 = vld [vmem:[#allocation5 + $0x548] sm:$0xff]
    %v308 = vld [vmem:[#allocation5 + $0x550] sm:$0xff]
    %v309 = vld [vmem:[#allocation5 + $0x558] sm:$0xff]
    %v310 = vld [vmem:[#allocation5 + $0x560] sm:$0xff]
    %v311 = vld [vmem:[#allocation5 + $0x568] sm:$0xff]
    %v312 = vld [vmem:[#allocation5 + $0x570] sm:$0xff]
    %v313 = vld [vmem:[#allocation5 + $0x578] sm:$0xff]
    %v314 = vld [vmem:[#allocation5 + $0x580] sm:$0xff]
    %v315 = vld [vmem:[#allocation5 + $0x588] sm:$0xff]
    %v316 = vld [vmem:[#allocation5 + $0x590] sm:$0xff]
    %v317 = vld [vmem:[#allocation5 + $0x598] sm:$0xff]
    %v318 = vld [vmem:[#allocation5 + $0x5a0] sm:$0xff]
    %v319 = vld [vmem:[#allocation5 + $0x5a8] sm:$0xff]
    %v320 = vld [vmem:[#allocation5 + $0x5b0] sm:$0xff]
    %v321 = vld [vmem:[#allocation5 + $0x5b8] sm:$0xff]
    %v322 = vld [vmem:[#allocation5 + $0x5c0] sm:$0xff]
    %v323 = vld [vmem:[#allocation5 + $0x5c8] sm:$0xff]
    %v324 = vld [vmem:[#allocation5 + $0x5d0] sm:$0xff]
    %v325 = vld [vmem:[#allocation5 + $0x5d8] sm:$0xff]
    %v326 = vld [vmem:[#allocation5 + $0x5e0] sm:$0xff]
    %v327 = vld [vmem:[#allocation5 + $0x5e8] sm:$0xff]
    %v328 = vld [vmem:[#allocation5 + $0x5f0] sm:$0xff]
    %v329 = vld [vmem:[#allocation5 + $0x5f8] sm:$0xff]
    %v330 = vld [vmem:[#allocation5 + $0x600] sm:$0xff]
    %v331 = vld [vmem:[#allocation5 + $0x608] sm:$0xff]
    %v332 = vld [vmem:[#allocation5 + $0x610] sm:$0xff]
    %v333 = vld [vmem:[#allocation5 + $0x618] sm:$0xff]
    %v334 = vld [vmem:[#allocation5 + $0x620] sm:$0xff]
    %v335 = vld [vmem:[#allocation5 + $0x628] sm:$0xff]
    %v336 = vld [vmem:[#allocation5 + $0x630] sm:$0xff]
    %v337 = vld [vmem:[#allocation5 + $0x638] sm:$0xff]
    %v338 = vld [vmem:[#allocation5 + $0x640] sm:$0xff]
    %v339 = vld [vmem:[#allocation5 + $0x648] sm:$0xff]
    %v340 = vld [vmem:[#allocation5 + $0x650] sm:$0xff]
    %v341 = vld [vmem:[#allocation5 + $0x658] sm:$0xff]
    %v342 = vld [vmem:[#allocation5 + $0x660] sm:$0xff]
    %v343 = vld [vmem:[#allocation5 + $0x668] sm:$0xff]
    %v344 = vld [vmem:[#allocation5 + $0x670] sm:$0xff]
    %v345 = vld [vmem:[#allocation5 + $0x678] sm:$0xff]
    %v346 = vld [vmem:[#allocation5 + $0x680] sm:$0xff]
    %v347 = vld [vmem:[#allocation5 + $0x688] sm:$0xff]
    %v348 = vld [vmem:[#allocation5 + $0x690] sm:$0xff]
    %v349 = vld [vmem:[#allocation5 + $0x698] sm:$0xff]
    %v350 = vld [vmem:[#allocation5 + $0x6a0] sm:$0xff]
    %v351 = vld [vmem:[#allocation5 + $0x6a8] sm:$0xff]
    %v352 = vld [vmem:[#allocation5 + $0x6b0] sm:$0xff]
    %v353 = vld [vmem:[#allocation5 + $0x6b8] sm:$0xff]
    %v354 = vld [vmem:[#allocation5 + $0x6c0] sm:$0xff]
    %v355 = vld [vmem:[#allocation5 + $0x6c8] sm:$0xff]
    %v356 = vld [vmem:[#allocation5 + $0x6d0] sm:$0xff]
    %v357 = vld [vmem:[#allocation5 + $0x6d8] sm:$0xff]
    %v358 = vld [vmem:[#allocation5 + $0x6e0] sm:$0xff]
    %v359 = vld [vmem:[#allocation5 + $0x6e8] sm:$0xff]
    %v360 = vld [vmem:[#allocation5 + $0x6f0] sm:$0xff]
    %v361 = vld [vmem:[#allocation5 + $0x6f8] sm:$0xff]
    %v362 = vld [vmem:[#allocation5 + $0x700] sm:$0xff]
    %v363 = vld [vmem:[#allocation5 + $0x708] sm:$0xff]
    %v364 = vld [vmem:[#allocation5 + $0x710] sm:$0xff]
    %v365 = vld [vmem:[#allocation5 + $0x718] sm:$0xff]
    %v366 = vld [vmem:[#allocation5 + $0x720] sm:$0xff]
    %v367 = vld [vmem:[#allocation5 + $0x728] sm:$0xff]
    %v368 = vld [vmem:[#allocation5 + $0x730] sm:$0xff]
    %v369 = vld [vmem:[#allocation5 + $0x738] sm:$0xff]
    %v370 = vld [vmem:[#allocation5 + $0x740] sm:$0xff]
    %v371 = vld [vmem:[#allocation5 + $0x748] sm:$0xff]
    %v372 = vld [vmem:[#allocation5 + $0x750] sm:$0xff]
    %v373 = vld [vmem:[#allocation5 + $0x758] sm:$0xff]
    %v374 = vld [vmem:[#allocation5 + $0x760] sm:$0xff]
    %v375 = vld [vmem:[#allocation5 + $0x768] sm:$0xff]
    %v376 = vld [vmem:[#allocation5 + $0x770] sm:$0xff]
    %v377 = vld [vmem:[#allocation5 + $0x778] sm:$0xff]
    %v378 = vld [vmem:[#allocation5 + $0x780] sm:$0xff]
    %v379 = vld [vmem:[#allocation5 + $0x788] sm:$0xff]
    %v380 = vld [vmem:[#allocation5 + $0x790] sm:$0xff]
    %v381 = vld [vmem:[#allocation5 + $0x798] sm:$0xff]
    %v382 = vld [vmem:[#allocation5 + $0x7a0] sm:$0xff]
    %v383 = vld [vmem:[#allocation5 + $0x7a8] sm:$0xff]
    %v384 = vld [vmem:[#allocation5 + $0x7b0] sm:$0xff]
    %v385 = vld [vmem:[#allocation5 + $0x7b8] sm:$0xff]
    %v386 = vld [vmem:[#allocation5 + $0x7c0] sm:$0xff]
    %v387 = vld [vmem:[#allocation5 + $0x7c8] sm:$0xff]
    %v388 = vld [vmem:[#allocation5 + $0x7d0] sm:$0xff]
    %v389 = vld [vmem:[#allocation5 + $0x7d8] sm:$0xff]
    %v390 = vld [vmem:[#allocation5 + $0x7e0] sm:$0xff]
    %v391 = vld [vmem:[#allocation5 + $0x7e8] sm:$0xff]
    %v392 = vld [vmem:[#allocation5 + $0x7f0] sm:$0xff]
    %v393 = vld [vmem:[#allocation5 + $0x7f8] sm:$0xff]
    %v394 = vld [vmem:[#allocation5 + $0x800] sm:$0xff]
    %v395 = vld [vmem:[#allocation5 + $0x808] sm:$0xff]
    %v396 = vld [vmem:[#allocation5 + $0x810] sm:$0xff]
    %v397 = vld [vmem:[#allocation5 + $0x818] sm:$0xff]
    %v398 = vld [vmem:[#allocation5 + $0x820] sm:$0xff]
    %v399 = vld [vmem:[#allocation5 + $0x828] sm:$0xff]
    %v400 = vld [vmem:[#allocation5 + $0x830] sm:$0xff]
    %v401 = vld [vmem:[#allocation5 + $0x838] sm:$0xff]
    %v402 = vld [vmem:[#allocation5 + $0x840] sm:$0xff]
    %v403 = vld [vmem:[#allocation5 + $0x848] sm:$0xff]
    %v404 = vld [vmem:[#allocation5 + $0x850] sm:$0xff]
    %v405 = vld [vmem:[#allocation5 + $0x858] sm:$0xff]
    %v406 = vld [vmem:[#allocation5 + $0x860] sm:$0xff]
    %v407 = vld [vmem:[#allocation5 + $0x868] sm:$0xff]
    %v408 = vld [vmem:[#allocation5 + $0x870] sm:$0xff]
    %v409 = vld [vmem:[#allocation5 + $0x878] sm:$0xff]
    %v410 = vld [vmem:[#allocation5 + $0x880] sm:$0xff]
    %v411 = vld [vmem:[#allocation5 + $0x888] sm:$0xff]
    %v412 = vld [vmem:[#allocation5 + $0x890] sm:$0xff]
    %v413 = vld [vmem:[#allocation5 + $0x898] sm:$0xff]
    %v414 = vld [vmem:[#allocation5 + $0x8a0] sm:$0xff]
    %v415 = vld [vmem:[#allocation5 + $0x8a8] sm:$0xff]
    %v416 = vld [vmem:[#allocation5 + $0x8b0] sm:$0xff]
    %v417 = vld [vmem:[#allocation5 + $0x8b8] sm:$0xff]
    %v418 = vld [vmem:[#allocation5 + $0x8c0] sm:$0xff]
    %v419 = vld [vmem:[#allocation5 + $0x8c8] sm:$0xff]
    %v420 = vld [vmem:[#allocation5 + $0x8d0] sm:$0xff]
    %v421 = vld [vmem:[#allocation5 + $0x8d8] sm:$0xff]
    %v422 = vld [vmem:[#allocation5 + $0x8e0] sm:$0xff]
    %v423 = vld [vmem:[#allocation5 + $0x8e8] sm:$0xff]
    %v424 = vld [vmem:[#allocation5 + $0x8f0] sm:$0xff]
    %v425 = vld [vmem:[#allocation5 + $0x8f8] sm:$0xff]
    %v426 = vld [vmem:[#allocation5 + $0x900] sm:$0xff]
    %v427 = vld [vmem:[#allocation5 + $0x908] sm:$0xff]
    %v428 = vld [vmem:[#allocation5 + $0x910] sm:$0xff]
    %v429 = vld [vmem:[#allocation5 + $0x918] sm:$0xff]
    %v430 = vld [vmem:[#allocation5 + $0x920] sm:$0xff]
    %v431 = vld [vmem:[#allocation5 + $0x928] sm:$0xff]
    %v432 = vld [vmem:[#allocation5 + $0x930] sm:$0xff]
    %v433 = vld [vmem:[#allocation5 + $0x938] sm:$0xff]
    %v434 = vld [vmem:[#allocation5 + $0x940] sm:$0xff]
    %v435 = vld [vmem:[#allocation5 + $0x948] sm:$0xff]
    %v436 = vld [vmem:[#allocation5 + $0x950] sm:$0xff]
    %v437 = vld [vmem:[#allocation5 + $0x958] sm:$0xff]
    %v438 = vld [vmem:[#allocation5 + $0x960] sm:$0xff]
    %v439 = vld [vmem:[#allocation5 + $0x968] sm:$0xff]
    %v440 = vld [vmem:[#allocation5 + $0x970] sm:$0xff]
    %v441 = vld [vmem:[#allocation5 + $0x978] sm:$0xff]
    %v442 = vld [vmem:[#allocation5 + $0x980] sm:$0xff]
    %v443 = vld [vmem:[#allocation5 + $0x988] sm:$0xff]
    %v444 = vld [vmem:[#allocation5 + $0x990] sm:$0xff]
    %v445 = vld [vmem:[#allocation5 + $0x998] sm:$0xff]
    %v446 = vld [vmem:[#allocation5 + $0x9a0] sm:$0xff]
    %v447 = vld [vmem:[#allocation5 + $0x9a8] sm:$0xff]
    %v448 = vld [vmem:[#allocation5 + $0x9b0] sm:$0xff]
    %v449 = vld [vmem:[#allocation5 + $0x9b8] sm:$0xff]
    %v450 = vld [vmem:[#allocation5 + $0x9c0] sm:$0xff]
    %v451 = vld [vmem:[#allocation5 + $0x9c8] sm:$0xff]
    %v452 = vld [vmem:[#allocation5 + $0x9d0] sm:$0xff]
    %v453 = vld [vmem:[#allocation5 + $0x9d8] sm:$0xff]
    %v454 = vld [vmem:[#allocation5 + $0x9e0] sm:$0xff]
    %v455 = vld [vmem:[#allocation5 + $0x9e8] sm:$0xff]
    %v456 = vld [vmem:[#allocation5 + $0x9f0] sm:$0xff]
    %v457 = vld [vmem:[#allocation5 + $0x9f8] sm:$0xff]
    %v458 = vld [vmem:[#allocation5 + $0xa00] sm:$0xff]
    %v459 = vld [vmem:[#allocation5 + $0xa08] sm:$0xff]
    %v460 = vld [vmem:[#allocation5 + $0xa10] sm:$0xff]
    %v461 = vld [vmem:[#allocation5 + $0xa18] sm:$0xff]
    %v462 = vld [vmem:[#allocation5 + $0xa20] sm:$0xff]
    %v463 = vld [vmem:[#allocation5 + $0xa28] sm:$0xff]
    %v464 = vld [vmem:[#allocation5 + $0xa30] sm:$0xff]
    %v465 = vld [vmem:[#allocation5 + $0xa38] sm:$0xff]
    %v466 = vld [vmem:[#allocation5 + $0xa40] sm:$0xff]
    %v467 = vld [vmem:[#allocation5 + $0xa48] sm:$0xff]
    %v468 = vld [vmem:[#allocation5 + $0xa50] sm:$0xff]
    %v469 = vld [vmem:[#allocation5 + $0xa58] sm:$0xff]
    %v470 = vld [vmem:[#allocation5 + $0xa60] sm:$0xff]
    %v471 = vld [vmem:[#allocation5 + $0xa68] sm:$0xff]
    %v472 = vld [vmem:[#allocation5 + $0xa70] sm:$0xff]
    %v473 = vld [vmem:[#allocation5 + $0xa78] sm:$0xff]
    %v474 = vld [vmem:[#allocation5 + $0xa80] sm:$0xff]
    %v475 = vld [vmem:[#allocation5 + $0xa88] sm:$0xff]
    %v476 = vld [vmem:[#allocation5 + $0xa90] sm:$0xff]
    %v477 = vld [vmem:[#allocation5 + $0xa98] sm:$0xff]
    %v478 = vld [vmem:[#allocation5 + $0xaa0] sm:$0xff]
    %v479 = vld [vmem:[#allocation5 + $0xaa8] sm:$0xff]
    %v480 = vld [vmem:[#allocation5 + $0xab0] sm:$0xff]
    %v481 = vld [vmem:[#allocation5 + $0xab8] sm:$0xff]
    %v482 = vld [vmem:[#allocation5 + $0xac0] sm:$0xff]
    %v483 = vld [vmem:[#allocation5 + $0xac8] sm:$0xff]
    %v484 = vld [vmem:[#allocation5 + $0xad0] sm:$0xff]
    %v485 = vld [vmem:[#allocation5 + $0xad8] sm:$0xff]
    %v486 = vld [vmem:[#allocation5 + $0xae0] sm:$0xff]
    %v487 = vld [vmem:[#allocation5 + $0xae8] sm:$0xff]
    %v488 = vld [vmem:[#allocation5 + $0xaf0] sm:$0xff]
    %v489 = vld [vmem:[#allocation5 + $0xaf8] sm:$0xff]
    %v490 = vld [vmem:[#allocation5 + $0xb00] sm:$0xff]
    %v491 = vld [vmem:[#allocation5 + $0xb08] sm:$0xff]
    %v492 = vld [vmem:[#allocation5 + $0xb10] sm:$0xff]
    %v493 = vld [vmem:[#allocation5 + $0xb18] sm:$0xff]
    %v494 = vld [vmem:[#allocation5 + $0xb20] sm:$0xff]
    %v495 = vld [vmem:[#allocation5 + $0xb28] sm:$0xff]
    %v496 = vld [vmem:[#allocation5 + $0xb30] sm:$0xff]
    %v497 = vld [vmem:[#allocation5 + $0xb38] sm:$0xff]
    %v498 = vld [vmem:[#allocation5 + $0xb40] sm:$0xff]
    %v499 = vld [vmem:[#allocation5 + $0xb48] sm:$0xff]
    %v500 = vld [vmem:[#allocation5 + $0xb50] sm:$0xff]
    %v501 = vld [vmem:[#allocation5 + $0xb58] sm:$0xff]
    %v502 = vld [vmem:[#allocation5 + $0xb60] sm:$0xff]
    %v503 = vld [vmem:[#allocation5 + $0xb68] sm:$0xff]
    %v504 = vld [vmem:[#allocation5 + $0xb70] sm:$0xff]
    %v505 = vld [vmem:[#allocation5 + $0xb78] sm:$0xff]
    %v506 = vld [vmem:[#allocation5 + $0xb80] sm:$0xff]
    %v507 = vld [vmem:[#allocation5 + $0xb88] sm:$0xff]
    %v508 = vld [vmem:[#allocation5 + $0xb90] sm:$0xff]
    %v509 = vld [vmem:[#allocation5 + $0xb98] sm:$0xff]
    %v510 = vld [vmem:[#allocation5 + $0xba0] sm:$0xff]
    %v511 = vld [vmem:[#allocation5 + $0xba8] sm:$0xff]
    %v512 = vld [vmem:[#allocation5 + $0xbb0] sm:$0xff]
    %v513 = vld [vmem:[#allocation5 + $0xbb8] sm:$0xff]
    %v514 = vld [vmem:[#allocation5 + $0xbc0] sm:$0xff]
    %v515 = vld [vmem:[#allocation5 + $0xbc8] sm:$0xff]
    %v516 = vld [vmem:[#allocation5 + $0xbd0] sm:$0xff]
    %v517 = vld [vmem:[#allocation5 + $0xbd8] sm:$0xff]
    %v518 = vld [vmem:[#allocation5 + $0xbe0] sm:$0xff]
    %v519 = vld [vmem:[#allocation5 + $0xbe8] sm:$0xff]
    %v520 = vld [vmem:[#allocation5 + $0xbf0] sm:$0xff]
    %v521 = vld [vmem:[#allocation5 + $0xbf8] sm:$0xff]
    %v522 = vld [vmem:[#allocation5 + $0xc00] sm:$0xff]
    %v523 = vld [vmem:[#allocation5 + $0xc08] sm:$0xff]
    %v524 = vld [vmem:[#allocation5 + $0xc10] sm:$0xff]
    %v525 = vld [vmem:[#allocation5 + $0xc18] sm:$0xff]
    %v526 = vld [vmem:[#allocation5 + $0xc20] sm:$0xff]
    %v527 = vld [vmem:[#allocation5 + $0xc28] sm:$0xff]
    %v528 = vld [vmem:[#allocation5 + $0xc30] sm:$0xff]
    %v529 = vld [vmem:[#allocation5 + $0xc38] sm:$0xff]
    %v530 = vld [vmem:[#allocation5 + $0xc40] sm:$0xff]
    %v531 = vld [vmem:[#allocation5 + $0xc48] sm:$0xff]
    %v532 = vld [vmem:[#allocation5 + $0xc50] sm:$0xff]
    %v533 = vld [vmem:[#allocation5 + $0xc58] sm:$0xff]
    %v534 = vld [vmem:[#allocation5 + $0xc60] sm:$0xff]
    %v535 = vld [vmem:[#allocation5 + $0xc68] sm:$0xff]
    %v536 = vld [vmem:[#allocation5 + $0xc70] sm:$0xff]
    %v537 = vld [vmem:[#allocation5 + $0xc78] sm:$0xff]
    %v538 = vld [vmem:[#allocation5 + $0xc80] sm:$0xff]
    %v539 = vld [vmem:[#allocation5 + $0xc88] sm:$0xff]
    %v540 = vld [vmem:[#allocation5 + $0xc90] sm:$0xff]
    %v541 = vld [vmem:[#allocation5 + $0xc98] sm:$0xff]
    %v542 = vld [vmem:[#allocation5 + $0xca0] sm:$0xff]
    %v543 = vld [vmem:[#allocation5 + $0xca8] sm:$0xff]
    %v544 = vld [vmem:[#allocation5 + $0xcb0] sm:$0xff]
    %v545 = vld [vmem:[#allocation5 + $0xcb8] sm:$0xff]
    %v546 = vld [vmem:[#allocation5 + $0xcc0] sm:$0xff]
    %v547 = vld [vmem:[#allocation5 + $0xcc8] sm:$0xff]
    %v548 = vld [vmem:[#allocation5 + $0xcd0] sm:$0xff]
    %v549 = vld [vmem:[#allocation5 + $0xcd8] sm:$0xff]
    %v550 = vld [vmem:[#allocation5 + $0xce0] sm:$0xff]
    %v551 = vld [vmem:[#allocation5 + $0xce8] sm:$0xff]
    %v552 = vld [vmem:[#allocation5 + $0xcf0] sm:$0xff]
    %v553 = vld [vmem:[#allocation5 + $0xcf8] sm:$0xff]
    %v554 = vld [vmem:[#allocation5 + $0xd00] sm:$0xff]
    %v555 = vld [vmem:[#allocation5 + $0xd08] sm:$0xff]
    %v556 = vld [vmem:[#allocation5 + $0xd10] sm:$0xff]
    %v557 = vld [vmem:[#allocation5 + $0xd18] sm:$0xff]
    %v558 = vld [vmem:[#allocation5 + $0xd20] sm:$0xff]
    %v559 = vld [vmem:[#allocation5 + $0xd28] sm:$0xff]
    %v560 = vld [vmem:[#allocation5 + $0xd30] sm:$0xff]
    %v561 = vld [vmem:[#allocation5 + $0xd38] sm:$0xff]
    %v562 = vld [vmem:[#allocation5 + $0xd40] sm:$0xff]
    %v563 = vld [vmem:[#allocation5 + $0xd48] sm:$0xff]
    %v564 = vld [vmem:[#allocation5 + $0xd50] sm:$0xff]
    %v565 = vld [vmem:[#allocation5 + $0xd58] sm:$0xff]
    %v566 = vld [vmem:[#allocation5 + $0xd60] sm:$0xff]
    %v567 = vld [vmem:[#allocation5 + $0xd68] sm:$0xff]
    %v568 = vld [vmem:[#allocation5 + $0xd70] sm:$0xff]
    %v569 = vld [vmem:[#allocation5 + $0xd78] sm:$0xff]
    %v570 = vld [vmem:[#allocation5 + $0xd80] sm:$0xff]
    %v571 = vld [vmem:[#allocation5 + $0xd88] sm:$0xff]
    %v572 = vld [vmem:[#allocation5 + $0xd90] sm:$0xff]
    %v573 = vld [vmem:[#allocation5 + $0xd98] sm:$0xff]
    %v574 = vld [vmem:[#allocation5 + $0xda0] sm:$0xff]
    %v575 = vld [vmem:[#allocation5 + $0xda8] sm:$0xff]
    %v576 = vld [vmem:[#allocation5 + $0xdb0] sm:$0xff]
    %v577 = vld [vmem:[#allocation5 + $0xdb8] sm:$0xff]
    %v578 = vld [vmem:[#allocation5 + $0xdc0] sm:$0xff]
    %v579 = vld [vmem:[#allocation5 + $0xdc8] sm:$0xff]
    %v580 = vld [vmem:[#allocation5 + $0xdd0] sm:$0xff]
    %v581 = vld [vmem:[#allocation5 + $0xdd8] sm:$0xff]
    %v582 = vld [vmem:[#allocation5 + $0xde0] sm:$0xff]
    %v583 = vld [vmem:[#allocation5 + $0xde8] sm:$0xff]
    %v584 = vld [vmem:[#allocation5 + $0xdf0] sm:$0xff]
    %v585 = vld [vmem:[#allocation5 + $0xdf8] sm:$0xff]
    %v586 = vld [vmem:[#allocation5 + $0xe00] sm:$0xff]
    %v587 = vld [vmem:[#allocation5 + $0xe08] sm:$0xff]
    %v588 = vld [vmem:[#allocation5 + $0xe10] sm:$0xff]
    %v589 = vld [vmem:[#allocation5 + $0xe18] sm:$0xff]
    %v590 = vld [vmem:[#allocation5 + $0xe20] sm:$0xff]
    %v591 = vld [vmem:[#allocation5 + $0xe28] sm:$0xff]
    %v592 = vld [vmem:[#allocation5 + $0xe30] sm:$0xff]
    %v593 = vld [vmem:[#allocation5 + $0xe38] sm:$0xff]
    %v594 = vld [vmem:[#allocation5 + $0xe40] sm:$0xff]
    %v595 = vld [vmem:[#allocation5 + $0xe48] sm:$0xff]
    %v596 = vld [vmem:[#allocation5 + $0xe50] sm:$0xff]
    %v597 = vld [vmem:[#allocation5 + $0xe58] sm:$0xff]
    %v598 = vld [vmem:[#allocation5 + $0xe60] sm:$0xff]
    %v599 = vld [vmem:[#allocation5 + $0xe68] sm:$0xff]
    %v600 = vld [vmem:[#allocation5 + $0xe70] sm:$0xff]
    %v601 = vld [vmem:[#allocation5 + $0xe78] sm:$0xff]
    %v602 = vld [vmem:[#allocation5 + $0xe80] sm:$0xff]
    %v603 = vld [vmem:[#allocation5 + $0xe88] sm:$0xff]
    %v604 = vld [vmem:[#allocation5 + $0xe90] sm:$0xff]
    %v605 = vld [vmem:[#allocation5 + $0xe98] sm:$0xff]
    %v606 = vld [vmem:[#allocation5 + $0xea0] sm:$0xff]
    %v607 = vld [vmem:[#allocation5 + $0xea8] sm:$0xff]
    %v608 = vld [vmem:[#allocation5 + $0xeb0] sm:$0xff]
    %v609 = vld [vmem:[#allocation5 + $0xeb8] sm:$0xff]
    %v610 = vld [vmem:[#allocation5 + $0xec0] sm:$0xff]
    %v611 = vld [vmem:[#allocation5 + $0xec8] sm:$0xff]
    %v612 = vld [vmem:[#allocation5 + $0xed0] sm:$0xff]
    %v613 = vld [vmem:[#allocation5 + $0xed8] sm:$0xff]
    %v614 = vld [vmem:[#allocation5 + $0xee0] sm:$0xff]
    %v615 = vld [vmem:[#allocation5 + $0xee8] sm:$0xff]
    %v616 = vld [vmem:[#allocation5 + $0xef0] sm:$0xff]
    %v617 = vld [vmem:[#allocation5 + $0xef8] sm:$0xff]
    %v618 = vld [vmem:[#allocation5 + $0xf00] sm:$0xff]
    %v619 = vld [vmem:[#allocation5 + $0xf08] sm:$0xff]
    %v620 = vld [vmem:[#allocation5 + $0xf10] sm:$0xff]
    %v621 = vld [vmem:[#allocation5 + $0xf18] sm:$0xff]
    %v622 = vld [vmem:[#allocation5 + $0xf20] sm:$0xff]
    %v623 = vld [vmem:[#allocation5 + $0xf28] sm:$0xff]
    %v624 = vld [vmem:[#allocation5 + $0xf30] sm:$0xff]
    %v625 = vld [vmem:[#allocation5 + $0xf38] sm:$0xff]
    %v626 = vld [vmem:[#allocation5 + $0xf40] sm:$0xff]
    %v627 = vld [vmem:[#allocation5 + $0xf48] sm:$0xff]
    %v628 = vld [vmem:[#allocation5 + $0xf50] sm:$0xff]
    %v629 = vld [vmem:[#allocation5 + $0xf58] sm:$0xff]
    %v630 = vld [vmem:[#allocation5 + $0xf60] sm:$0xff]
    %v631 = vld [vmem:[#allocation5 + $0xf68] sm:$0xff]
    %v632 = vld [vmem:[#allocation5 + $0xf70] sm:$0xff]
    %v633 = vld [vmem:[#allocation5 + $0xf78] sm:$0xff]
    %v634 = vld [vmem:[#allocation5 + $0xf80] sm:$0xff]
    %v635 = vld [vmem:[#allocation5 + $0xf88] sm:$0xff]
    %v636 = vld [vmem:[#allocation5 + $0xf90] sm:$0xff]
    %v637 = vld [vmem:[#allocation5 + $0xf98] sm:$0xff]
    %v638 = vld [vmem:[#allocation5 + $0xfa0] sm:$0xff]
    %v639 = vld [vmem:[#allocation5 + $0xfa8] sm:$0xff]
    %v640 = vld [vmem:[#allocation5 + $0xfb0] sm:$0xff]
    %v641 = vld [vmem:[#allocation5 + $0xfb8] sm:$0xff]
    %v642 = vld [vmem:[#allocation5 + $0xfc0] sm:$0xff]
    %v643 = vld [vmem:[#allocation5 + $0xfc8] sm:$0xff]
    %v644 = vld [vmem:[#allocation5 + $0xfd0] sm:$0xff]
    %v645 = vld [vmem:[#allocation5 + $0xfd8] sm:$0xff]
    %v646 = vld [vmem:[#allocation5 + $0xfe0] sm:$0xff]
    %v647 = vld [vmem:[#allocation5 + $0xfe8] sm:$0xff]
    %v648 = vld [vmem:[#allocation5 + $0xff0] sm:$0xff]
    %v649 = vld [vmem:[#allocation5 + $0xff8] sm:$0xff]
    %v650 = vld [vmem:[#allocation5 + $0x1000] sm:$0xff]
    %v651 = vld [vmem:[#allocation5 + $0x1008] sm:$0xff]
    %v652 = vld [vmem:[#allocation5 + $0x1010] sm:$0xff]
    %v653 = vld [vmem:[#allocation5 + $0x1018] sm:$0xff]
    %v654 = vld [vmem:[#allocation5 + $0x1020] sm:$0xff]
    %v655 = vld [vmem:[#allocation5 + $0x1028] sm:$0xff]
    %v656 = vld [vmem:[#allocation5 + $0x1030] sm:$0xff]
    %v657 = vld [vmem:[#allocation5 + $0x1038] sm:$0xff]
    %v658 = vld [vmem:[#allocation5 + $0x1040] sm:$0xff]
    %v659 = vld [vmem:[#allocation5 + $0x1048] sm:$0xff]
    %v660 = vld [vmem:[#allocation5 + $0x1050] sm:$0xff]
    %v661 = vld [vmem:[#allocation5 + $0x1058] sm:$0xff]
    %v662 = vld [vmem:[#allocation5 + $0x1060] sm:$0xff]
    %v663 = vld [vmem:[#allocation5 + $0x1068] sm:$0xff]
    %v664 = vld [vmem:[#allocation5 + $0x1070] sm:$0xff]
    %v665 = vld [vmem:[#allocation5 + $0x1078] sm:$0xff]
    %v666 = vld [vmem:[#allocation5 + $0x1080] sm:$0xff]
    %v667 = vld [vmem:[#allocation5 + $0x1088] sm:$0xff]
    %v668 = vld [vmem:[#allocation5 + $0x1090] sm:$0xff]
    %v669 = vld [vmem:[#allocation5 + $0x1098] sm:$0xff]
    %v670 = vld [vmem:[#allocation5 + $0x10a0] sm:$0xff]
    %v671 = vld [vmem:[#allocation5 + $0x10a8] sm:$0xff]
    %v672 = vld [vmem:[#allocation5 + $0x10b0] sm:$0xff]
    %v673 = vld [vmem:[#allocation5 + $0x10b8] sm:$0xff]
    %v674 = vld [vmem:[#allocation5 + $0x10c0] sm:$0xff]
    %v675 = vld [vmem:[#allocation5 + $0x10c8] sm:$0xff]
    %v676 = vld [vmem:[#allocation5 + $0x10d0] sm:$0xff]
    %v677 = vld [vmem:[#allocation5 + $0x10d8] sm:$0xff]
    %v678 = vld [vmem:[#allocation5 + $0x10e0] sm:$0xff]
    %v679 = vld [vmem:[#allocation5 + $0x10e8] sm:$0xff]
    %v680 = vld [vmem:[#allocation5 + $0x10f0] sm:$0xff]
    %v681 = vld [vmem:[#allocation5 + $0x10f8] sm:$0xff]
    %v682 = vld [vmem:[#allocation5 + $0x1100] sm:$0xff]
    %v683 = vld [vmem:[#allocation5 + $0x1108] sm:$0xff]
    %v684 = vld [vmem:[#allocation5 + $0x1110] sm:$0xff]
    %v685 = vld [vmem:[#allocation5 + $0x1118] sm:$0xff]
    %v686 = vld [vmem:[#allocation5 + $0x1120] sm:$0xff]
    %v687 = vld [vmem:[#allocation5 + $0x1128] sm:$0xff]
    %v688 = vld [vmem:[#allocation5 + $0x1130] sm:$0xff]
    %v689 = vld [vmem:[#allocation5 + $0x1138] sm:$0xff]
    %v690 = vld [vmem:[#allocation5 + $0x1140] sm:$0xff]
    %v691 = vld [vmem:[#allocation5 + $0x1148] sm:$0xff]
    %v692 = vld [vmem:[#allocation5 + $0x1150] sm:$0xff]
    %v693 = vld [vmem:[#allocation5 + $0x1158] sm:$0xff]
    %v694 = vld [vmem:[#allocation5 + $0x1160] sm:$0xff]
    %v695 = vld [vmem:[#allocation5 + $0x1168] sm:$0xff]
    %v696 = vld [vmem:[#allocation5 + $0x1170] sm:$0xff]
    %v697 = vld [vmem:[#allocation5 + $0x1178] sm:$0xff]
    %v698 = vld [vmem:[#allocation5 + $0x1180] sm:$0xff]
    %v699 = vld [vmem:[#allocation5 + $0x1188] sm:$0xff]
    %v700 = vld [vmem:[#allocation5 + $0x1190] sm:$0xff]
    %v701 = vld [vmem:[#allocation5 + $0x1198] sm:$0xff]
    %v702 = vld [vmem:[#allocation5 + $0x11a0] sm:$0xff]
    %v703 = vld [vmem:[#allocation5 + $0x11a8] sm:$0xff]
    %v704 = vld [vmem:[#allocation5 + $0x11b0] sm:$0xff]
    %v705 = vld [vmem:[#allocation5 + $0x11b8] sm:$0xff]
    %v706 = vld [vmem:[#allocation5 + $0x11c0] sm:$0xff]
    %v707 = vld [vmem:[#allocation5 + $0x11c8] sm:$0xff]
    %v708 = vld [vmem:[#allocation5 + $0x11d0] sm:$0xff]
    %v709 = vld [vmem:[#allocation5 + $0x11d8] sm:$0xff]
    %v710 = vld [vmem:[#allocation5 + $0x11e0] sm:$0xff]
    %v711 = vld [vmem:[#allocation5 + $0x11e8] sm:$0xff]
    %v712 = vld [vmem:[#allocation5 + $0x11f0] sm:$0xff]
    %v713 = vld [vmem:[#allocation5 + $0x11f8] sm:$0xff]
    %v714 = vld [vmem:[#allocation5 + $0x1200] sm:$0xff]
    %v715 = vld [vmem:[#allocation5 + $0x1208] sm:$0xff]
    %v716 = vld [vmem:[#allocation5 + $0x1210] sm:$0xff]
    %v717 = vld [vmem:[#allocation5 + $0x1218] sm:$0xff]
    %v718 = vld [vmem:[#allocation5 + $0x1220] sm:$0xff]
    %v719 = vld [vmem:[#allocation5 + $0x1228] sm:$0xff]
    %v720 = vld [vmem:[#allocation5 + $0x1230] sm:$0xff]
    %v721 = vld [vmem:[#allocation5 + $0x1238] sm:$0xff]
    %v722 = vld [vmem:[#allocation5 + $0x1240] sm:$0xff]
    %v723 = vld [vmem:[#allocation5 + $0x1248] sm:$0xff]
    %v724 = vld [vmem:[#allocation5 + $0x1250] sm:$0xff]
    %v725 = vld [vmem:[#allocation5 + $0x1258] sm:$0xff]
    %v726 = vld [vmem:[#allocation5 + $0x1260] sm:$0xff]
    %v727 = vld [vmem:[#allocation5 + $0x1268] sm:$0xff]
    %v728 = vld [vmem:[#allocation5 + $0x1270] sm:$0xff]
    %v729 = vld [vmem:[#allocation5 + $0x1278] sm:$0xff]
    %v730 = vld [vmem:[#allocation5 + $0x1280] sm:$0xff]
    %v731 = vld [vmem:[#allocation5 + $0x1288] sm:$0xff]
    %v732 = vld [vmem:[#allocation5 + $0x1290] sm:$0xff]
    %v733 = vld [vmem:[#allocation5 + $0x1298] sm:$0xff]
    %v734 = vld [vmem:[#allocation5 + $0x12a0] sm:$0xff]
    %v735 = vld [vmem:[#allocation5 + $0x12a8] sm:$0xff]
    %v736 = vld [vmem:[#allocation5 + $0x12b0] sm:$0xff]
    %v737 = vld [vmem:[#allocation5 + $0x12b8] sm:$0xff]
    %v738 = vld [vmem:[#allocation5 + $0x12c0] sm:$0xff]
    %v739 = vld [vmem:[#allocation5 + $0x12c8] sm:$0xff]
    %v740 = vld [vmem:[#allocation5 + $0x12d0] sm:$0xff]
    %v741 = vld [vmem:[#allocation5 + $0x12d8] sm:$0xff]
    %v742 = vld [vmem:[#allocation5 + $0x12e0] sm:$0xff]
    %v743 = vld [vmem:[#allocation5 + $0x12e8] sm:$0xff]
    %v744 = vld [vmem:[#allocation5 + $0x12f0] sm:$0xff]
    %v745 = vld [vmem:[#allocation5 + $0x12f8] sm:$0xff]
    %v746 = vld [vmem:[#allocation5 + $0x1300] sm:$0xff]
    %v747 = vld [vmem:[#allocation5 + $0x1308] sm:$0xff]
    %v748 = vld [vmem:[#allocation5 + $0x1310] sm:$0xff]
    %v749 = vld [vmem:[#allocation5 + $0x1318] sm:$0xff]
    %v750 = vld [vmem:[#allocation5 + $0x1320] sm:$0xff]
    %v751 = vld [vmem:[#allocation5 + $0x1328] sm:$0xff]
    %v752 = vld [vmem:[#allocation5 + $0x1330] sm:$0xff]
    %v753 = vld [vmem:[#allocation5 + $0x1338] sm:$0xff]
    %v754 = vld [vmem:[#allocation5 + $0x1340] sm:$0xff]
    %v755 = vld [vmem:[#allocation5 + $0x1348] sm:$0xff]
    %v756 = vld [vmem:[#allocation5 + $0x1350] sm:$0xff]
    %v757 = vld [vmem:[#allocation5 + $0x1358] sm:$0xff]
    %v758 = vld [vmem:[#allocation5 + $0x1360] sm:$0xff]
    %v759 = vld [vmem:[#allocation5 + $0x1368] sm:$0xff]
    %v760 = vld [vmem:[#allocation5 + $0x1370] sm:$0xff]
    %v761 = vld [vmem:[#allocation5 + $0x1378] sm:$0xff]
    %v762 = vld [vmem:[#allocation5 + $0x1380] sm:$0xff]
    %v763 = vld [vmem:[#allocation5 + $0x1388] sm:$0xff]
    %v764 = vld [vmem:[#allocation5 + $0x1390] sm:$0xff]
    %v765 = vld [vmem:[#allocation5 + $0x1398] sm:$0xff]
    %v766 = vld [vmem:[#allocation5 + $0x13a0] sm:$0xff]
    %v767 = vld [vmem:[#allocation5 + $0x13a8] sm:$0xff]
    %v768 = vld [vmem:[#allocation5 + $0x13b0] sm:$0xff]
    %v769 = vld [vmem:[#allocation5 + $0x13b8] sm:$0xff]
    %v770 = vld [vmem:[#allocation5 + $0x13c0] sm:$0xff]
    %v771 = vld [vmem:[#allocation5 + $0x13c8] sm:$0xff]
    %v772 = vld [vmem:[#allocation5 + $0x13d0] sm:$0xff]
    %v773 = vld [vmem:[#allocation5 + $0x13d8] sm:$0xff]
    %v774 = vld [vmem:[#allocation5 + $0x13e0] sm:$0xff]
    %v775 = vld [vmem:[#allocation5 + $0x13e8] sm:$0xff]
    %v776 = vld [vmem:[#allocation5 + $0x13f0] sm:$0xff]
    %v777 = vld [vmem:[#allocation5 + $0x13f8] sm:$0xff]
    %v778 = vld [vmem:[#allocation5 + $0x1400] sm:$0xff]
    %v779 = vld [vmem:[#allocation5 + $0x1408] sm:$0xff]
    %v780 = vld [vmem:[#allocation5 + $0x1410] sm:$0xff]
    %v781 = vld [vmem:[#allocation5 + $0x1418] sm:$0xff]
    %v782 = vld [vmem:[#allocation5 + $0x1420] sm:$0xff]
    %v783 = vld [vmem:[#allocation5 + $0x1428] sm:$0xff]
    %v784 = vld [vmem:[#allocation5 + $0x1430] sm:$0xff]
    %v785 = vld [vmem:[#allocation5 + $0x1438] sm:$0xff]
    %v786 = vld [vmem:[#allocation5 + $0x1440] sm:$0xff]
    %v787 = vld [vmem:[#allocation5 + $0x1448] sm:$0xff]
    %v788 = vld [vmem:[#allocation5 + $0x1450] sm:$0xff]
    %v789 = vld [vmem:[#allocation5 + $0x1458] sm:$0xff]
    %v790 = vld [vmem:[#allocation5 + $0x1460] sm:$0xff]
    %v791 = vld [vmem:[#allocation5 + $0x1468] sm:$0xff]
    %v792 = vld [vmem:[#allocation5 + $0x1470] sm:$0xff]
    %v793 = vld [vmem:[#allocation5 + $0x1478] sm:$0xff]
    %v794 = vld [vmem:[#allocation5 + $0x1480] sm:$0xff]
    %v795 = vld [vmem:[#allocation5 + $0x1488] sm:$0xff]
    %v796 = vld [vmem:[#allocation5 + $0x1490] sm:$0xff]
    %v797 = vld [vmem:[#allocation5 + $0x1498] sm:$0xff]
    %v798 = vld [vmem:[#allocation5 + $0x14a0] sm:$0xff]
    %v799 = vld [vmem:[#allocation5 + $0x14a8] sm:$0xff]
    %v800 = vld [vmem:[#allocation5 + $0x14b0] sm:$0xff]
    %v801 = vld [vmem:[#allocation5 + $0x14b8] sm:$0xff]
    %v802 = vld [vmem:[#allocation5 + $0x14c0] sm:$0xff]
    %v803 = vld [vmem:[#allocation5 + $0x14c8] sm:$0xff]
    %v804 = vld [vmem:[#allocation5 + $0x14d0] sm:$0xff]
    %v805 = vld [vmem:[#allocation5 + $0x14d8] sm:$0xff]
    %v806 = vld [vmem:[#allocation5 + $0x14e0] sm:$0xff]
    %v807 = vld [vmem:[#allocation5 + $0x14e8] sm:$0xff]
    %v808 = vld [vmem:[#allocation5 + $0x14f0] sm:$0xff]
    %v809 = vld [vmem:[#allocation5 + $0x14f8] sm:$0xff]
    %v810 = vld [vmem:[#allocation5 + $0x1500] sm:$0xff]
    %v811 = vld [vmem:[#allocation5 + $0x1508] sm:$0xff]
    %v812 = vld [vmem:[#allocation5 + $0x1510] sm:$0xff]
    %v813 = vld [vmem:[#allocation5 + $0x1518] sm:$0xff]
    %v814 = vld [vmem:[#allocation5 + $0x1520] sm:$0xff]
    %v815 = vld [vmem:[#allocation5 + $0x1528] sm:$0xff]
    %v816 = vld [vmem:[#allocation5 + $0x1530] sm:$0xff]
    %v817 = vld [vmem:[#allocation5 + $0x1538] sm:$0xff]
    %v818 = vld [vmem:[#allocation5 + $0x1540] sm:$0xff]
    %v819 = vld [vmem:[#allocation5 + $0x1548] sm:$0xff]
    %v820 = vld [vmem:[#allocation5 + $0x1550] sm:$0xff]
    %v821 = vld [vmem:[#allocation5 + $0x1558] sm:$0xff]
    %v822 = vld [vmem:[#allocation5 + $0x1560] sm:$0xff]
    %v823 = vld [vmem:[#allocation5 + $0x1568] sm:$0xff]
    %v824 = vld [vmem:[#allocation5 + $0x1570] sm:$0xff]
    %v825 = vld [vmem:[#allocation5 + $0x1578] sm:$0xff]
    %v826 = vld [vmem:[#allocation5 + $0x1580] sm:$0xff]
    %v827 = vld [vmem:[#allocation5 + $0x1588] sm:$0xff]
    %v828 = vld [vmem:[#allocation5 + $0x1590] sm:$0xff]
    %v829 = vld [vmem:[#allocation5 + $0x1598] sm:$0xff]
    %v830 = vld [vmem:[#allocation5 + $0x15a0] sm:$0xff]
    %v831 = vld [vmem:[#allocation5 + $0x15a8] sm:$0xff]
    %v832 = vld [vmem:[#allocation5 + $0x15b0] sm:$0xff]
    %v833 = vld [vmem:[#allocation5 + $0x15b8] sm:$0xff]
    %v834 = vld [vmem:[#allocation5 + $0x15c0] sm:$0xff]
    %v835 = vld [vmem:[#allocation5 + $0x15c8] sm:$0xff]
    %v836 = vld [vmem:[#allocation5 + $0x15d0] sm:$0xff]
    %v837 = vld [vmem:[#allocation5 + $0x15d8] sm:$0xff]
    %v838 = vld [vmem:[#allocation5 + $0x15e0] sm:$0xff]
    %v839 = vld [vmem:[#allocation5 + $0x15e8] sm:$0xff]
    %v840 = vld [vmem:[#allocation5 + $0x15f0] sm:$0xff]
    %v841 = vld [vmem:[#allocation5 + $0x15f8] sm:$0xff]
    %v842 = vld [vmem:[#allocation5 + $0x1600] sm:$0xff]
    %v843 = vld [vmem:[#allocation5 + $0x1608] sm:$0xff]
    %v844 = vld [vmem:[#allocation5 + $0x1610] sm:$0xff]
    %v845 = vld [vmem:[#allocation5 + $0x1618] sm:$0xff]
    %v846 = vld [vmem:[#allocation5 + $0x1620] sm:$0xff]
    %v847 = vld [vmem:[#allocation5 + $0x1628] sm:$0xff]
    %v848 = vld [vmem:[#allocation5 + $0x1630] sm:$0xff]
    %v849 = vld [vmem:[#allocation5 + $0x1638] sm:$0xff]
    %v850 = vld [vmem:[#allocation5 + $0x1640] sm:$0xff]
    %v851 = vld [vmem:[#allocation5 + $0x1648] sm:$0xff]
    %v852 = vld [vmem:[#allocation5 + $0x1650] sm:$0xff]
    %v853 = vld [vmem:[#allocation5 + $0x1658] sm:$0xff]
    %v854 = vld [vmem:[#allocation5 + $0x1660] sm:$0xff]
    %v855 = vld [vmem:[#allocation5 + $0x1668] sm:$0xff]
    %v856 = vld [vmem:[#allocation5 + $0x1670] sm:$0xff]
    %v857 = vld [vmem:[#allocation5 + $0x1678] sm:$0xff]
    %v858 = vld [vmem:[#allocation5 + $0x1680] sm:$0xff]
    %v859 = vld [vmem:[#allocation5 + $0x1688] sm:$0xff]
    %v860 = vld [vmem:[#allocation5 + $0x1690] sm:$0xff]
    %v861 = vld [vmem:[#allocation5 + $0x1698] sm:$0xff]
    %v862 = vld [vmem:[#allocation5 + $0x16a0] sm:$0xff]
    %v863 = vld [vmem:[#allocation5 + $0x16a8] sm:$0xff]
    %v864 = vld [vmem:[#allocation5 + $0x16b0] sm:$0xff]
    %v865 = vld [vmem:[#allocation5 + $0x16b8] sm:$0xff]
    %v866 = vld [vmem:[#allocation5 + $0x16c0] sm:$0xff]
    %v867 = vld [vmem:[#allocation5 + $0x16c8] sm:$0xff]
    %v868 = vld [vmem:[#allocation5 + $0x16d0] sm:$0xff]
    %v869 = vld [vmem:[#allocation5 + $0x16d8] sm:$0xff]
    %v870 = vld [vmem:[#allocation5 + $0x16e0] sm:$0xff]
    %v871 = vld [vmem:[#allocation5 + $0x16e8] sm:$0xff]
    %v872 = vld [vmem:[#allocation5 + $0x16f0] sm:$0xff]
    %v873 = vld [vmem:[#allocation5 + $0x16f8] sm:$0xff]
    %v874 = vld [vmem:[#allocation5 + $0x1700] sm:$0xff]
    %v875 = vld [vmem:[#allocation5 + $0x1708] sm:$0xff]
    %v876 = vld [vmem:[#allocation5 + $0x1710] sm:$0xff]
    %v877 = vld [vmem:[#allocation5 + $0x1718] sm:$0xff]
    %v878 = vld [vmem:[#allocation5 + $0x1720] sm:$0xff]
    %v879 = vld [vmem:[#allocation5 + $0x1728] sm:$0xff]
    %v880 = vld [vmem:[#allocation5 + $0x1730] sm:$0xff]
    %v881 = vld [vmem:[#allocation5 + $0x1738] sm:$0xff]
    %v882 = vld [vmem:[#allocation5 + $0x1740] sm:$0xff]
    %v883 = vld [vmem:[#allocation5 + $0x1748] sm:$0xff]
    %v884 = vld [vmem:[#allocation5 + $0x1750] sm:$0xff]
    %v885 = vld [vmem:[#allocation5 + $0x1758] sm:$0xff]
    %v886 = vld [vmem:[#allocation5 + $0x1760] sm:$0xff]
    %v887 = vld [vmem:[#allocation5 + $0x1768] sm:$0xff]
    %v888 = vld [vmem:[#allocation5 + $0x1770] sm:$0xff]
    %v889 = vld [vmem:[#allocation5 + $0x1778] sm:$0xff]
    %v890 = vld [vmem:[#allocation5 + $0x1780] sm:$0xff]
    %v891 = vld [vmem:[#allocation5 + $0x1788] sm:$0xff]
    %v892 = vld [vmem:[#allocation5 + $0x1790] sm:$0xff]
    %v893 = vld [vmem:[#allocation5 + $0x1798] sm:$0xff]
    %v894 = vld [vmem:[#allocation5 + $0x17a0] sm:$0xff]
    %v895 = vld [vmem:[#allocation5 + $0x17a8] sm:$0xff]
    %v896 = vld [vmem:[#allocation5 + $0x17b0] sm:$0xff]
    %v897 = vld [vmem:[#allocation5 + $0x17b8] sm:$0xff]
    %v898 = vld [vmem:[#allocation5 + $0x17c0] sm:$0xff]
    %v899 = vld [vmem:[#allocation5 + $0x17c8] sm:$0xff]
    %v900 = vld [vmem:[#allocation5 + $0x17d0] sm:$0xff]
    %v901 = vld [vmem:[#allocation5 + $0x17d8] sm:$0xff]
    %v902 = vld [vmem:[#allocation5 + $0x17e0] sm:$0xff]
    %v903 = vld [vmem:[#allocation5 + $0x17e8] sm:$0xff]
    %v904 = vld [vmem:[#allocation5 + $0x17f0] sm:$0xff]
    %v905 = vld [vmem:[#allocation5 + $0x17f8] sm:$0xff]
    %v906 = vld [vmem:[#allocation7] sm:$0xf]
    %v908 = vperm.slane %v906, 0
    %v909 = vperm.slane %v906, 1
    %v910 = vperm.slane %v906, 2
    %v911 = vperm.slane %v906, 3
    %v928 = vunpack.c.l.b16 %v126
    %v929 = vunpack.c.h.b16 %v126
    %v930 = vunpack.c.l.b16 %v127
    %v931 = vunpack.c.h.b16 %v127
    %v932 = vunpack.c.l.b16 %v128
    %v933 = vunpack.c.h.b16 %v128
    %v934 = vunpack.c.l.b16 %v129
    %v935 = vunpack.c.h.b16 %v129
    %v936 = vunpack.c.l.b16 %v130
    %v937 = vunpack.c.h.b16 %v130
    %v938 = vunpack.c.l.b16 %v131
    %v939 = vunpack.c.h.b16 %v131
    %v940 = vunpack.c.l.b16 %v132
    %v941 = vunpack.c.h.b16 %v132
    %v942 = vunpack.c.l.b16 %v133
    %v943 = vunpack.c.h.b16 %v133
    %v944 = vunpack.c.l.b16 %v134
    %v945 = vunpack.c.h.b16 %v134
    %v946 = vunpack.c.l.b16 %v135
    %v947 = vunpack.c.h.b16 %v135
    %v948 = vunpack.c.l.b16 %v136
    %v949 = vunpack.c.h.b16 %v136
    %v950 = vunpack.c.l.b16 %v137
    %v951 = vunpack.c.h.b16 %v137
    %v952 = vpack.c.b16 %v928, %v928
    %v953 = vpack.c.b16 %v929, %v929
    %v954 = vpack.c.b16 %v930, %v930
    %v955 = vpack.c.b16 %v931, %v931
    %v956 = vpack.c.b16 %v932, %v932
    %v957 = vpack.c.b16 %v933, %v933
    %v958 = vpack.c.b16 %v934, %v934
    %v959 = vpack.c.b16 %v935, %v935
    %v960 = vpack.c.b16 %v936, %v936
    %v961 = vpack.c.b16 %v937, %v937
    %v962 = vpack.c.b16 %v938, %v938
    %v963 = vpack.c.b16 %v939, %v939
    %v964 = vpack.c.b16 %v940, %v940
    %v965 = vpack.c.b16 %v941, %v941
    %v966 = vpack.c.b16 %v942, %v942
    %v967 = vpack.c.b16 %v943, %v943
    %v968 = vpack.c.b16 %v944, %v944
    %v969 = vpack.c.b16 %v945, %v945
    %v970 = vpack.c.b16 %v946, %v946
    %v971 = vpack.c.b16 %v947, %v947
    %v972 = vpack.c.b16 %v948, %v948
    %v973 = vpack.c.b16 %v949, %v949
    %v974 = vpack.c.b16 %v950, %v950
    %v975 = vpack.c.b16 %v951, %v951
    %v1768 = vunpack.c.l.b16 %v138
    %v1769 = vunpack.c.h.b16 %v138
    %v1770 = vunpack.c.l.b16 %v139
    %v1771 = vunpack.c.h.b16 %v139
    %v1772 = vunpack.c.l.b16 %v140
    %v1773 = vunpack.c.h.b16 %v140
    %v1774 = vunpack.c.l.b16 %v141
    %v1775 = vunpack.c.h.b16 %v141
    %v1776 = vunpack.c.l.b16 %v142
    %v1777 = vunpack.c.h.b16 %v142
    %v1778 = vunpack.c.l.b16 %v143
    %v1779 = vunpack.c.h.b16 %v143
    %v1780 = vunpack.c.l.b16 %v144
    %v1781 = vunpack.c.h.b16 %v144
    %v1782 = vunpack.c.l.b16 %v145
    %v1783 = vunpack.c.h.b16 %v145
    %v1784 = vunpack.c.l.b16 %v146
    %v1785 = vunpack.c.h.b16 %v146
    %v1786 = vunpack.c.l.b16 %v147
    %v1787 = vunpack.c.h.b16 %v147
    %v1788 = vunpack.c.l.b16 %v148
    %v1789 = vunpack.c.h.b16 %v148
    %v1790 = vunpack.c.l.b16 %v149
    %v1791 = vunpack.c.h.b16 %v149
    %v1792 = vunpack.c.l.b16 %v150
    %v1793 = vunpack.c.h.b16 %v150
    %v1794 = vunpack.c.l.b16 %v151
    %v1795 = vunpack.c.h.b16 %v151
    %v1796 = vunpack.c.l.b16 %v152
    %v1797 = vunpack.c.h.b16 %v152
    %v1798 = vunpack.c.l.b16 %v153
    %v1799 = vunpack.c.h.b16 %v153
    %v1800 = vunpack.c.l.b16 %v154
    %v1801 = vunpack.c.h.b16 %v154
    %v1802 = vunpack.c.l.b16 %v155
    %v1803 = vunpack.c.h.b16 %v155
    %v1804 = vunpack.c.l.b16 %v156
    %v1805 = vunpack.c.h.b16 %v156
    %v1806 = vunpack.c.l.b16 %v157
    %v1807 = vunpack.c.h.b16 %v157
    %v1808 = vunpack.c.l.b16 %v158
    %v1809 = vunpack.c.h.b16 %v158
    %v1810 = vunpack.c.l.b16 %v159
    %v1811 = vunpack.c.h.b16 %v159
    %v1812 = vunpack.c.l.b16 %v160
    %v1813 = vunpack.c.h.b16 %v160
    %v1814 = vunpack.c.l.b16 %v161
    %v1815 = vunpack.c.h.b16 %v161
    %v1816 = vunpack.c.l.b16 %v162
    %v1817 = vunpack.c.h.b16 %v162
    %v1818 = vunpack.c.l.b16 %v163
    %v1819 = vunpack.c.h.b16 %v163
    %v1820 = vunpack.c.l.b16 %v164
    %v1821 = vunpack.c.h.b16 %v164
    %v1822 = vunpack.c.l.b16 %v165
    %v1823 = vunpack.c.h.b16 %v165
    %v1824 = vunpack.c.l.b16 %v166
    %v1825 = vunpack.c.h.b16 %v166
    %v1826 = vunpack.c.l.b16 %v167
    %v1827 = vunpack.c.h.b16 %v167
    %v1828 = vunpack.c.l.b16 %v168
    %v1829 = vunpack.c.h.b16 %v168
    %v1830 = vunpack.c.l.b16 %v169
    %v1831 = vunpack.c.h.b16 %v169
    %v1832 = vunpack.c.l.b16 %v170
    %v1833 = vunpack.c.h.b16 %v170
    %v1834 = vunpack.c.l.b16 %v171
    %v1835 = vunpack.c.h.b16 %v171
    %v1836 = vunpack.c.l.b16 %v172
    %v1837 = vunpack.c.h.b16 %v172
    %v1838 = vunpack.c.l.b16 %v173
    %v1839 = vunpack.c.h.b16 %v173
    %v1840 = vunpack.c.l.b16 %v174
    %v1841 = vunpack.c.h.b16 %v174
    %v1842 = vunpack.c.l.b16 %v175
    %v1843 = vunpack.c.h.b16 %v175
    %v1844 = vunpack.c.l.b16 %v176
    %v1845 = vunpack.c.h.b16 %v176
    %v1846 = vunpack.c.l.b16 %v177
    %v1847 = vunpack.c.h.b16 %v177
    %v1848 = vunpack.c.l.b16 %v178
    %v1849 = vunpack.c.h.b16 %v178
    %v1850 = vunpack.c.l.b16 %v179
    %v1851 = vunpack.c.h.b16 %v179
    %v1852 = vunpack.c.l.b16 %v180
    %v1853 = vunpack.c.h.b16 %v180
    %v1854 = vunpack.c.l.b16 %v181
    %v1855 = vunpack.c.h.b16 %v181
    %v1856 = vunpack.c.l.b16 %v182
    %v1857 = vunpack.c.h.b16 %v182
    %v1858 = vunpack.c.l.b16 %v183
    %v1859 = vunpack.c.h.b16 %v183
    %v1860 = vunpack.c.l.b16 %v184
    %v1861 = vunpack.c.h.b16 %v184
    %v1862 = vunpack.c.l.b16 %v185
    %v1863 = vunpack.c.h.b16 %v185
    %v1864 = vunpack.c.l.b16 %v186
    %v1865 = vunpack.c.h.b16 %v186
    %v1866 = vunpack.c.l.b16 %v187
    %v1867 = vunpack.c.h.b16 %v187
    %v1868 = vunpack.c.l.b16 %v188
    %v1869 = vunpack.c.h.b16 %v188
    %v1870 = vunpack.c.l.b16 %v189
    %v1871 = vunpack.c.h.b16 %v189
    %v1872 = vunpack.c.l.b16 %v190
    %v1873 = vunpack.c.h.b16 %v190
    %v1874 = vunpack.c.l.b16 %v191
    %v1875 = vunpack.c.h.b16 %v191
    %v1876 = vunpack.c.l.b16 %v192
    %v1877 = vunpack.c.h.b16 %v192
    %v1878 = vunpack.c.l.b16 %v193
    %v1879 = vunpack.c.h.b16 %v193
    %v1880 = vunpack.c.l.b16 %v194
    %v1881 = vunpack.c.h.b16 %v194
    %v1882 = vunpack.c.l.b16 %v195
    %v1883 = vunpack.c.h.b16 %v195
    %v1884 = vunpack.c.l.b16 %v196
    %v1885 = vunpack.c.h.b16 %v196
    %v1886 = vunpack.c.l.b16 %v197
    %v1887 = vunpack.c.h.b16 %v197
    %v1888 = vunpack.c.l.b16 %v198
    %v1889 = vunpack.c.h.b16 %v198
    %v1890 = vunpack.c.l.b16 %v199
    %v1891 = vunpack.c.h.b16 %v199
    %v1892 = vunpack.c.l.b16 %v200
    %v1893 = vunpack.c.h.b16 %v200
    %v1894 = vunpack.c.l.b16 %v201
    %v1895 = vunpack.c.h.b16 %v201
    %v1896 = vunpack.c.l.b16 %v202
    %v1897 = vunpack.c.h.b16 %v202
    %v1898 = vunpack.c.l.b16 %v203
    %v1899 = vunpack.c.h.b16 %v203
    %v1900 = vunpack.c.l.b16 %v204
    %v1901 = vunpack.c.h.b16 %v204
    %v1902 = vunpack.c.l.b16 %v205
    %v1903 = vunpack.c.h.b16 %v205
    %v1904 = vunpack.c.l.b16 %v206
    %v1905 = vunpack.c.h.b16 %v206
    %v1906 = vunpack.c.l.b16 %v207
    %v1907 = vunpack.c.h.b16 %v207
    %v1908 = vunpack.c.l.b16 %v208
    %v1909 = vunpack.c.h.b16 %v208
    %v1910 = vunpack.c.l.b16 %v209
    %v1911 = vunpack.c.h.b16 %v209
    %v1912 = vunpack.c.l.b16 %v210
    %v1913 = vunpack.c.h.b16 %v210
    %v1914 = vunpack.c.l.b16 %v211
    %v1915 = vunpack.c.h.b16 %v211
    %v1916 = vunpack.c.l.b16 %v212
    %v1917 = vunpack.c.h.b16 %v212
    %v1918 = vunpack.c.l.b16 %v213
    %v1919 = vunpack.c.h.b16 %v213
    %v1920 = vunpack.c.l.b16 %v214
    %v1921 = vunpack.c.h.b16 %v214
    %v1922 = vunpack.c.l.b16 %v215
    %v1923 = vunpack.c.h.b16 %v215
    %v1924 = vunpack.c.l.b16 %v216
    %v1925 = vunpack.c.h.b16 %v216
    %v1926 = vunpack.c.l.b16 %v217
    %v1927 = vunpack.c.h.b16 %v217
    %v1928 = vunpack.c.l.b16 %v218
    %v1929 = vunpack.c.h.b16 %v218
    %v1930 = vunpack.c.l.b16 %v219
    %v1931 = vunpack.c.h.b16 %v219
    %v1932 = vunpack.c.l.b16 %v220
    %v1933 = vunpack.c.h.b16 %v220
    %v1934 = vunpack.c.l.b16 %v221
    %v1935 = vunpack.c.h.b16 %v221
    %v1936 = vunpack.c.l.b16 %v222
    %v1937 = vunpack.c.h.b16 %v222
    %v1938 = vunpack.c.l.b16 %v223
    %v1939 = vunpack.c.h.b16 %v223
    %v1940 = vunpack.c.l.b16 %v224
    %v1941 = vunpack.c.h.b16 %v224
    %v1942 = vunpack.c.l.b16 %v225
    %v1943 = vunpack.c.h.b16 %v225
    %v1944 = vunpack.c.l.b16 %v226
    %v1945 = vunpack.c.h.b16 %v226
    %v1946 = vunpack.c.l.b16 %v227
    %v1947 = vunpack.c.h.b16 %v227
    %v1948 = vunpack.c.l.b16 %v228
    %v1949 = vunpack.c.h.b16 %v228
    %v1950 = vunpack.c.l.b16 %v229
    %v1951 = vunpack.c.h.b16 %v229
    %v1952 = vunpack.c.l.b16 %v230
    %v1953 = vunpack.c.h.b16 %v230
    %v1954 = vunpack.c.l.b16 %v231
    %v1955 = vunpack.c.h.b16 %v231
    %v1956 = vunpack.c.l.b16 %v232
    %v1957 = vunpack.c.h.b16 %v232
    %v1958 = vunpack.c.l.b16 %v233
    %v1959 = vunpack.c.h.b16 %v233
    %v1960 = vunpack.c.l.b16 %v234
    %v1961 = vunpack.c.h.b16 %v234
    %v1962 = vunpack.c.l.b16 %v235
    %v1963 = vunpack.c.h.b16 %v235
    %v1964 = vunpack.c.l.b16 %v236
    %v1965 = vunpack.c.h.b16 %v236
    %v1966 = vunpack.c.l.b16 %v237
    %v1967 = vunpack.c.h.b16 %v237
    %v1968 = vunpack.c.l.b16 %v238
    %v1969 = vunpack.c.h.b16 %v238
    %v1970 = vunpack.c.l.b16 %v239
    %v1971 = vunpack.c.h.b16 %v239
    %v1972 = vunpack.c.l.b16 %v240
    %v1973 = vunpack.c.h.b16 %v240
    %v1974 = vunpack.c.l.b16 %v241
    %v1975 = vunpack.c.h.b16 %v241
    %v1976 = vunpack.c.l.b16 %v242
    %v1977 = vunpack.c.h.b16 %v242
    %v1978 = vunpack.c.l.b16 %v243
    %v1979 = vunpack.c.h.b16 %v243
    %v1980 = vunpack.c.l.b16 %v244
    %v1981 = vunpack.c.h.b16 %v244
    %v1982 = vunpack.c.l.b16 %v245
    %v1983 = vunpack.c.h.b16 %v245
    %v1984 = vunpack.c.l.b16 %v246
    %v1985 = vunpack.c.h.b16 %v246
    %v1986 = vunpack.c.l.b16 %v247
    %v1987 = vunpack.c.h.b16 %v247
    %v1988 = vunpack.c.l.b16 %v248
    %v1989 = vunpack.c.h.b16 %v248
    %v1990 = vunpack.c.l.b16 %v249
    %v1991 = vunpack.c.h.b16 %v249
    %v1992 = vunpack.c.l.b16 %v250
    %v1993 = vunpack.c.h.b16 %v250
    %v1994 = vunpack.c.l.b16 %v251
    %v1995 = vunpack.c.h.b16 %v251
    %v1996 = vunpack.c.l.b16 %v252
    %v1997 = vunpack.c.h.b16 %v252
    %v1998 = vunpack.c.l.b16 %v253
    %v1999 = vunpack.c.h.b16 %v253
    %v2000 = vunpack.c.l.b16 %v254
    %v2001 = vunpack.c.h.b16 %v254
    %v2002 = vunpack.c.l.b16 %v255
    %v2003 = vunpack.c.h.b16 %v255
    %v2004 = vunpack.c.l.b16 %v256
    %v2005 = vunpack.c.h.b16 %v256
    %v2006 = vunpack.c.l.b16 %v257
    %v2007 = vunpack.c.h.b16 %v257
    %v2008 = vunpack.c.l.b16 %v258
    %v2009 = vunpack.c.h.b16 %v258
    %v2010 = vunpack.c.l.b16 %v259
    %v2011 = vunpack.c.h.b16 %v259
    %v2012 = vunpack.c.l.b16 %v260
    %v2013 = vunpack.c.h.b16 %v260
    %v2014 = vunpack.c.l.b16 %v261
    %v2015 = vunpack.c.h.b16 %v261
    %v2016 = vunpack.c.l.b16 %v262
    %v2017 = vunpack.c.h.b16 %v262
    %v2018 = vunpack.c.l.b16 %v263
    %v2019 = vunpack.c.h.b16 %v263
    %v2020 = vunpack.c.l.b16 %v264
    %v2021 = vunpack.c.h.b16 %v264
    %v2022 = vunpack.c.l.b16 %v265
    %v2023 = vunpack.c.h.b16 %v265
    %v2024 = vunpack.c.l.b16 %v266
    %v2025 = vunpack.c.h.b16 %v266
    %v2026 = vunpack.c.l.b16 %v267
    %v2027 = vunpack.c.h.b16 %v267
    %v2028 = vunpack.c.l.b16 %v268
    %v2029 = vunpack.c.h.b16 %v268
    %v2030 = vunpack.c.l.b16 %v269
    %v2031 = vunpack.c.h.b16 %v269
    %v2032 = vunpack.c.l.b16 %v270
    %v2033 = vunpack.c.h.b16 %v270
    %v2034 = vunpack.c.l.b16 %v271
    %v2035 = vunpack.c.h.b16 %v271
    %v2036 = vunpack.c.l.b16 %v272
    %v2037 = vunpack.c.h.b16 %v272
    %v2038 = vunpack.c.l.b16 %v273
    %v2039 = vunpack.c.h.b16 %v273
    %v2040 = vunpack.c.l.b16 %v274
    %v2041 = vunpack.c.h.b16 %v274
    %v2042 = vunpack.c.l.b16 %v275
    %v2043 = vunpack.c.h.b16 %v275
    %v2044 = vunpack.c.l.b16 %v276
    %v2045 = vunpack.c.h.b16 %v276
    %v2046 = vunpack.c.l.b16 %v277
    %v2047 = vunpack.c.h.b16 %v277
    %v2048 = vunpack.c.l.b16 %v278
    %v2049 = vunpack.c.h.b16 %v278
    %v2050 = vunpack.c.l.b16 %v279
    %v2051 = vunpack.c.h.b16 %v279
    %v2052 = vunpack.c.l.b16 %v280
    %v2053 = vunpack.c.h.b16 %v280
    %v2054 = vunpack.c.l.b16 %v281
    %v2055 = vunpack.c.h.b16 %v281
    %v2056 = vunpack.c.l.b16 %v282
    %v2057 = vunpack.c.h.b16 %v282
    %v2058 = vunpack.c.l.b16 %v283
    %v2059 = vunpack.c.h.b16 %v283
    %v2060 = vunpack.c.l.b16 %v284
    %v2061 = vunpack.c.h.b16 %v284
    %v2062 = vunpack.c.l.b16 %v285
    %v2063 = vunpack.c.h.b16 %v285
    %v2064 = vunpack.c.l.b16 %v286
    %v2065 = vunpack.c.h.b16 %v286
    %v2066 = vunpack.c.l.b16 %v287
    %v2067 = vunpack.c.h.b16 %v287
    %v2068 = vunpack.c.l.b16 %v288
    %v2069 = vunpack.c.h.b16 %v288
    %v2070 = vunpack.c.l.b16 %v289
    %v2071 = vunpack.c.h.b16 %v289
    %v2072 = vunpack.c.l.b16 %v290
    %v2073 = vunpack.c.h.b16 %v290
    %v2074 = vunpack.c.l.b16 %v291
    %v2075 = vunpack.c.h.b16 %v291
    %v2076 = vunpack.c.l.b16 %v292
    %v2077 = vunpack.c.h.b16 %v292
    %v2078 = vunpack.c.l.b16 %v293
    %v2079 = vunpack.c.h.b16 %v293
    %v2080 = vunpack.c.l.b16 %v294
    %v2081 = vunpack.c.h.b16 %v294
    %v2082 = vunpack.c.l.b16 %v295
    %v2083 = vunpack.c.h.b16 %v295
    %v2084 = vunpack.c.l.b16 %v296
    %v2085 = vunpack.c.h.b16 %v296
    %v2086 = vunpack.c.l.b16 %v297
    %v2087 = vunpack.c.h.b16 %v297
    %v2088 = vunpack.c.l.b16 %v298
    %v2089 = vunpack.c.h.b16 %v298
    %v2090 = vunpack.c.l.b16 %v299
    %v2091 = vunpack.c.h.b16 %v299
    %v2092 = vunpack.c.l.b16 %v300
    %v2093 = vunpack.c.h.b16 %v300
    %v2094 = vunpack.c.l.b16 %v301
    %v2095 = vunpack.c.h.b16 %v301
    %v2096 = vunpack.c.l.b16 %v302
    %v2097 = vunpack.c.h.b16 %v302
    %v2098 = vunpack.c.l.b16 %v303
    %v2099 = vunpack.c.h.b16 %v303
    %v2100 = vunpack.c.l.b16 %v304
    %v2101 = vunpack.c.h.b16 %v304
    %v2102 = vunpack.c.l.b16 %v305
    %v2103 = vunpack.c.h.b16 %v305
    %v2104 = vunpack.c.l.b16 %v306
    %v2105 = vunpack.c.h.b16 %v306
    %v2106 = vunpack.c.l.b16 %v307
    %v2107 = vunpack.c.h.b16 %v307
    %v2108 = vunpack.c.l.b16 %v308
    %v2109 = vunpack.c.h.b16 %v308
    %v2110 = vunpack.c.l.b16 %v309
    %v2111 = vunpack.c.h.b16 %v309
    %v2112 = vunpack.c.l.b16 %v310
    %v2113 = vunpack.c.h.b16 %v310
    %v2114 = vunpack.c.l.b16 %v311
    %v2115 = vunpack.c.h.b16 %v311
    %v2116 = vunpack.c.l.b16 %v312
    %v2117 = vunpack.c.h.b16 %v312
    %v2118 = vunpack.c.l.b16 %v313
    %v2119 = vunpack.c.h.b16 %v313
    %v2120 = vunpack.c.l.b16 %v314
    %v2121 = vunpack.c.h.b16 %v314
    %v2122 = vunpack.c.l.b16 %v315
    %v2123 = vunpack.c.h.b16 %v315
    %v2124 = vunpack.c.l.b16 %v316
    %v2125 = vunpack.c.h.b16 %v316
    %v2126 = vunpack.c.l.b16 %v317
    %v2127 = vunpack.c.h.b16 %v317
    %v2128 = vunpack.c.l.b16 %v318
    %v2129 = vunpack.c.h.b16 %v318
    %v2130 = vunpack.c.l.b16 %v319
    %v2131 = vunpack.c.h.b16 %v319
    %v2132 = vunpack.c.l.b16 %v320
    %v2133 = vunpack.c.h.b16 %v320
    %v2134 = vunpack.c.l.b16 %v321
    %v2135 = vunpack.c.h.b16 %v321
    %v2136 = vunpack.c.l.b16 %v322
    %v2137 = vunpack.c.h.b16 %v322
    %v2138 = vunpack.c.l.b16 %v323
    %v2139 = vunpack.c.h.b16 %v323
    %v2140 = vunpack.c.l.b16 %v324
    %v2141 = vunpack.c.h.b16 %v324
    %v2142 = vunpack.c.l.b16 %v325
    %v2143 = vunpack.c.h.b16 %v325
    %v2144 = vunpack.c.l.b16 %v326
    %v2145 = vunpack.c.h.b16 %v326
    %v2146 = vunpack.c.l.b16 %v327
    %v2147 = vunpack.c.h.b16 %v327
    %v2148 = vunpack.c.l.b16 %v328
    %v2149 = vunpack.c.h.b16 %v328
    %v2150 = vunpack.c.l.b16 %v329
    %v2151 = vunpack.c.h.b16 %v329
    %v2152 = vunpack.c.l.b16 %v330
    %v2153 = vunpack.c.h.b16 %v330
    %v2154 = vunpack.c.l.b16 %v331
    %v2155 = vunpack.c.h.b16 %v331
    %v2156 = vunpack.c.l.b16 %v332
    %v2157 = vunpack.c.h.b16 %v332
    %v2158 = vunpack.c.l.b16 %v333
    %v2159 = vunpack.c.h.b16 %v333
    %v2160 = vunpack.c.l.b16 %v334
    %v2161 = vunpack.c.h.b16 %v334
    %v2162 = vunpack.c.l.b16 %v335
    %v2163 = vunpack.c.h.b16 %v335
    %v2164 = vunpack.c.l.b16 %v336
    %v2165 = vunpack.c.h.b16 %v336
    %v2166 = vunpack.c.l.b16 %v337
    %v2167 = vunpack.c.h.b16 %v337
    %v2168 = vunpack.c.l.b16 %v338
    %v2169 = vunpack.c.h.b16 %v338
    %v2170 = vunpack.c.l.b16 %v339
    %v2171 = vunpack.c.h.b16 %v339
    %v2172 = vunpack.c.l.b16 %v340
    %v2173 = vunpack.c.h.b16 %v340
    %v2174 = vunpack.c.l.b16 %v341
    %v2175 = vunpack.c.h.b16 %v341
    %v2176 = vunpack.c.l.b16 %v342
    %v2177 = vunpack.c.h.b16 %v342
    %v2178 = vunpack.c.l.b16 %v343
    %v2179 = vunpack.c.h.b16 %v343
    %v2180 = vunpack.c.l.b16 %v344
    %v2181 = vunpack.c.h.b16 %v344
    %v2182 = vunpack.c.l.b16 %v345
    %v2183 = vunpack.c.h.b16 %v345
    %v2184 = vunpack.c.l.b16 %v346
    %v2185 = vunpack.c.h.b16 %v346
    %v2186 = vunpack.c.l.b16 %v347
    %v2187 = vunpack.c.h.b16 %v347
    %v2188 = vunpack.c.l.b16 %v348
    %v2189 = vunpack.c.h.b16 %v348
    %v2190 = vunpack.c.l.b16 %v349
    %v2191 = vunpack.c.h.b16 %v349
    %v2192 = vunpack.c.l.b16 %v350
    %v2193 = vunpack.c.h.b16 %v350
    %v2194 = vunpack.c.l.b16 %v351
    %v2195 = vunpack.c.h.b16 %v351
    %v2196 = vunpack.c.l.b16 %v352
    %v2197 = vunpack.c.h.b16 %v352
    %v2198 = vunpack.c.l.b16 %v353
    %v2199 = vunpack.c.h.b16 %v353
    %v2200 = vunpack.c.l.b16 %v354
    %v2201 = vunpack.c.h.b16 %v354
    %v2202 = vunpack.c.l.b16 %v355
    %v2203 = vunpack.c.h.b16 %v355
    %v2204 = vunpack.c.l.b16 %v356
    %v2205 = vunpack.c.h.b16 %v356
    %v2206 = vunpack.c.l.b16 %v357
    %v2207 = vunpack.c.h.b16 %v357
    %v2208 = vunpack.c.l.b16 %v358
    %v2209 = vunpack.c.h.b16 %v358
    %v2210 = vunpack.c.l.b16 %v359
    %v2211 = vunpack.c.h.b16 %v359
    %v2212 = vunpack.c.l.b16 %v360
    %v2213 = vunpack.c.h.b16 %v360
    %v2214 = vunpack.c.l.b16 %v361
    %v2215 = vunpack.c.h.b16 %v361
    %v2216 = vunpack.c.l.b16 %v362
    %v2217 = vunpack.c.h.b16 %v362
    %v2218 = vunpack.c.l.b16 %v363
    %v2219 = vunpack.c.h.b16 %v363
    %v2220 = vunpack.c.l.b16 %v364
    %v2221 = vunpack.c.h.b16 %v364
    %v2222 = vunpack.c.l.b16 %v365
    %v2223 = vunpack.c.h.b16 %v365
    %v2224 = vunpack.c.l.b16 %v366
    %v2225 = vunpack.c.h.b16 %v366
    %v2226 = vunpack.c.l.b16 %v367
    %v2227 = vunpack.c.h.b16 %v367
    %v2228 = vunpack.c.l.b16 %v368
    %v2229 = vunpack.c.h.b16 %v368
    %v2230 = vunpack.c.l.b16 %v369
    %v2231 = vunpack.c.h.b16 %v369
    %v2232 = vunpack.c.l.b16 %v370
    %v2233 = vunpack.c.h.b16 %v370
    %v2234 = vunpack.c.l.b16 %v371
    %v2235 = vunpack.c.h.b16 %v371
    %v2236 = vunpack.c.l.b16 %v372
    %v2237 = vunpack.c.h.b16 %v372
    %v2238 = vunpack.c.l.b16 %v373
    %v2239 = vunpack.c.h.b16 %v373
    %v2240 = vunpack.c.l.b16 %v374
    %v2241 = vunpack.c.h.b16 %v374
    %v2242 = vunpack.c.l.b16 %v375
    %v2243 = vunpack.c.h.b16 %v375
    %v2244 = vunpack.c.l.b16 %v376
    %v2245 = vunpack.c.h.b16 %v376
    %v2246 = vunpack.c.l.b16 %v377
    %v2247 = vunpack.c.h.b16 %v377
    %v2248 = vunpack.c.l.b16 %v378
    %v2249 = vunpack.c.h.b16 %v378
    %v2250 = vunpack.c.l.b16 %v379
    %v2251 = vunpack.c.h.b16 %v379
    %v2252 = vunpack.c.l.b16 %v380
    %v2253 = vunpack.c.h.b16 %v380
    %v2254 = vunpack.c.l.b16 %v381
    %v2255 = vunpack.c.h.b16 %v381
    %v2256 = vunpack.c.l.b16 %v382
    %v2257 = vunpack.c.h.b16 %v382
    %v2258 = vunpack.c.l.b16 %v383
    %v2259 = vunpack.c.h.b16 %v383
    %v2260 = vunpack.c.l.b16 %v384
    %v2261 = vunpack.c.h.b16 %v384
    %v2262 = vunpack.c.l.b16 %v385
    %v2263 = vunpack.c.h.b16 %v385
    %v2264 = vunpack.c.l.b16 %v386
    %v2265 = vunpack.c.h.b16 %v386
    %v2266 = vunpack.c.l.b16 %v387
    %v2267 = vunpack.c.h.b16 %v387
    %v2268 = vunpack.c.l.b16 %v388
    %v2269 = vunpack.c.h.b16 %v388
    %v2270 = vunpack.c.l.b16 %v389
    %v2271 = vunpack.c.h.b16 %v389
    %v2272 = vunpack.c.l.b16 %v390
    %v2273 = vunpack.c.h.b16 %v390
    %v2274 = vunpack.c.l.b16 %v391
    %v2275 = vunpack.c.h.b16 %v391
    %v2276 = vunpack.c.l.b16 %v392
    %v2277 = vunpack.c.h.b16 %v392
    %v2278 = vunpack.c.l.b16 %v393
    %v2279 = vunpack.c.h.b16 %v393
    %v2280 = vunpack.c.l.b16 %v394
    %v2281 = vunpack.c.h.b16 %v394
    %v2282 = vunpack.c.l.b16 %v395
    %v2283 = vunpack.c.h.b16 %v395
    %v2284 = vunpack.c.l.b16 %v396
    %v2285 = vunpack.c.h.b16 %v396
    %v2286 = vunpack.c.l.b16 %v397
    %v2287 = vunpack.c.h.b16 %v397
    %v2288 = vunpack.c.l.b16 %v398
    %v2289 = vunpack.c.h.b16 %v398
    %v2290 = vunpack.c.l.b16 %v399
    %v2291 = vunpack.c.h.b16 %v399
    %v2292 = vunpack.c.l.b16 %v400
    %v2293 = vunpack.c.h.b16 %v400
    %v2294 = vunpack.c.l.b16 %v401
    %v2295 = vunpack.c.h.b16 %v401
    %v2296 = vunpack.c.l.b16 %v402
    %v2297 = vunpack.c.h.b16 %v402
    %v2298 = vunpack.c.l.b16 %v403
    %v2299 = vunpack.c.h.b16 %v403
    %v2300 = vunpack.c.l.b16 %v404
    %v2301 = vunpack.c.h.b16 %v404
    %v2302 = vunpack.c.l.b16 %v405
    %v2303 = vunpack.c.h.b16 %v405
    %v2304 = vunpack.c.l.b16 %v406
    %v2305 = vunpack.c.h.b16 %v406
    %v2306 = vunpack.c.l.b16 %v407
    %v2307 = vunpack.c.h.b16 %v407
    %v2308 = vunpack.c.l.b16 %v408
    %v2309 = vunpack.c.h.b16 %v408
    %v2310 = vunpack.c.l.b16 %v409
    %v2311 = vunpack.c.h.b16 %v409
    %v2312 = vunpack.c.l.b16 %v410
    %v2313 = vunpack.c.h.b16 %v410
    %v2314 = vunpack.c.l.b16 %v411
    %v2315 = vunpack.c.h.b16 %v411
    %v2316 = vunpack.c.l.b16 %v412
    %v2317 = vunpack.c.h.b16 %v412
    %v2318 = vunpack.c.l.b16 %v413
    %v2319 = vunpack.c.h.b16 %v413
    %v2320 = vunpack.c.l.b16 %v414
    %v2321 = vunpack.c.h.b16 %v414
    %v2322 = vunpack.c.l.b16 %v415
    %v2323 = vunpack.c.h.b16 %v415
    %v2324 = vunpack.c.l.b16 %v416
    %v2325 = vunpack.c.h.b16 %v416
    %v2326 = vunpack.c.l.b16 %v417
    %v2327 = vunpack.c.h.b16 %v417
    %v2328 = vunpack.c.l.b16 %v418
    %v2329 = vunpack.c.h.b16 %v418
    %v2330 = vunpack.c.l.b16 %v419
    %v2331 = vunpack.c.h.b16 %v419
    %v2332 = vunpack.c.l.b16 %v420
    %v2333 = vunpack.c.h.b16 %v420
    %v2334 = vunpack.c.l.b16 %v421
    %v2335 = vunpack.c.h.b16 %v421
    %v2336 = vunpack.c.l.b16 %v422
    %v2337 = vunpack.c.h.b16 %v422
    %v2338 = vunpack.c.l.b16 %v423
    %v2339 = vunpack.c.h.b16 %v423
    %v2340 = vunpack.c.l.b16 %v424
    %v2341 = vunpack.c.h.b16 %v424
    %v2342 = vunpack.c.l.b16 %v425
    %v2343 = vunpack.c.h.b16 %v425
    %v2344 = vunpack.c.l.b16 %v426
    %v2345 = vunpack.c.h.b16 %v426
    %v2346 = vunpack.c.l.b16 %v427
    %v2347 = vunpack.c.h.b16 %v427
    %v2348 = vunpack.c.l.b16 %v428
    %v2349 = vunpack.c.h.b16 %v428
    %v2350 = vunpack.c.l.b16 %v429
    %v2351 = vunpack.c.h.b16 %v429
    %v2352 = vunpack.c.l.b16 %v430
    %v2353 = vunpack.c.h.b16 %v430
    %v2354 = vunpack.c.l.b16 %v431
    %v2355 = vunpack.c.h.b16 %v431
    %v2356 = vunpack.c.l.b16 %v432
    %v2357 = vunpack.c.h.b16 %v432
    %v2358 = vunpack.c.l.b16 %v433
    %v2359 = vunpack.c.h.b16 %v433
    %v2360 = vunpack.c.l.b16 %v434
    %v2361 = vunpack.c.h.b16 %v434
    %v2362 = vunpack.c.l.b16 %v435
    %v2363 = vunpack.c.h.b16 %v435
    %v2364 = vunpack.c.l.b16 %v436
    %v2365 = vunpack.c.h.b16 %v436
    %v2366 = vunpack.c.l.b16 %v437
    %v2367 = vunpack.c.h.b16 %v437
    %v2368 = vunpack.c.l.b16 %v438
    %v2369 = vunpack.c.h.b16 %v438
    %v2370 = vunpack.c.l.b16 %v439
    %v2371 = vunpack.c.h.b16 %v439
    %v2372 = vunpack.c.l.b16 %v440
    %v2373 = vunpack.c.h.b16 %v440
    %v2374 = vunpack.c.l.b16 %v441
    %v2375 = vunpack.c.h.b16 %v441
    %v2376 = vunpack.c.l.b16 %v442
    %v2377 = vunpack.c.h.b16 %v442
    %v2378 = vunpack.c.l.b16 %v443
    %v2379 = vunpack.c.h.b16 %v443
    %v2380 = vunpack.c.l.b16 %v444
    %v2381 = vunpack.c.h.b16 %v444
    %v2382 = vunpack.c.l.b16 %v445
    %v2383 = vunpack.c.h.b16 %v445
    %v2384 = vunpack.c.l.b16 %v446
    %v2385 = vunpack.c.h.b16 %v446
    %v2386 = vunpack.c.l.b16 %v447
    %v2387 = vunpack.c.h.b16 %v447
    %v2388 = vunpack.c.l.b16 %v448
    %v2389 = vunpack.c.h.b16 %v448
    %v2390 = vunpack.c.l.b16 %v449
    %v2391 = vunpack.c.h.b16 %v449
    %v2392 = vunpack.c.l.b16 %v450
    %v2393 = vunpack.c.h.b16 %v450
    %v2394 = vunpack.c.l.b16 %v451
    %v2395 = vunpack.c.h.b16 %v451
    %v2396 = vunpack.c.l.b16 %v452
    %v2397 = vunpack.c.h.b16 %v452
    %v2398 = vunpack.c.l.b16 %v453
    %v2399 = vunpack.c.h.b16 %v453
    %v2400 = vunpack.c.l.b16 %v454
    %v2401 = vunpack.c.h.b16 %v454
    %v2402 = vunpack.c.l.b16 %v455
    %v2403 = vunpack.c.h.b16 %v455
    %v2404 = vunpack.c.l.b16 %v456
    %v2405 = vunpack.c.h.b16 %v456
    %v2406 = vunpack.c.l.b16 %v457
    %v2407 = vunpack.c.h.b16 %v457
    %v2408 = vunpack.c.l.b16 %v458
    %v2409 = vunpack.c.h.b16 %v458
    %v2410 = vunpack.c.l.b16 %v459
    %v2411 = vunpack.c.h.b16 %v459
    %v2412 = vunpack.c.l.b16 %v460
    %v2413 = vunpack.c.h.b16 %v460
    %v2414 = vunpack.c.l.b16 %v461
    %v2415 = vunpack.c.h.b16 %v461
    %v2416 = vunpack.c.l.b16 %v462
    %v2417 = vunpack.c.h.b16 %v462
    %v2418 = vunpack.c.l.b16 %v463
    %v2419 = vunpack.c.h.b16 %v463
    %v2420 = vunpack.c.l.b16 %v464
    %v2421 = vunpack.c.h.b16 %v464
    %v2422 = vunpack.c.l.b16 %v465
    %v2423 = vunpack.c.h.b16 %v465
    %v2424 = vunpack.c.l.b16 %v466
    %v2425 = vunpack.c.h.b16 %v466
    %v2426 = vunpack.c.l.b16 %v467
    %v2427 = vunpack.c.h.b16 %v467
    %v2428 = vunpack.c.l.b16 %v468
    %v2429 = vunpack.c.h.b16 %v468
    %v2430 = vunpack.c.l.b16 %v469
    %v2431 = vunpack.c.h.b16 %v469
    %v2432 = vunpack.c.l.b16 %v470
    %v2433 = vunpack.c.h.b16 %v470
    %v2434 = vunpack.c.l.b16 %v471
    %v2435 = vunpack.c.h.b16 %v471
    %v2436 = vunpack.c.l.b16 %v472
    %v2437 = vunpack.c.h.b16 %v472
    %v2438 = vunpack.c.l.b16 %v473
    %v2439 = vunpack.c.h.b16 %v473
    %v2440 = vunpack.c.l.b16 %v474
    %v2441 = vunpack.c.h.b16 %v474
    %v2442 = vunpack.c.l.b16 %v475
    %v2443 = vunpack.c.h.b16 %v475
    %v2444 = vunpack.c.l.b16 %v476
    %v2445 = vunpack.c.h.b16 %v476
    %v2446 = vunpack.c.l.b16 %v477
    %v2447 = vunpack.c.h.b16 %v477
    %v2448 = vunpack.c.l.b16 %v478
    %v2449 = vunpack.c.h.b16 %v478
    %v2450 = vunpack.c.l.b16 %v479
    %v2451 = vunpack.c.h.b16 %v479
    %v2452 = vunpack.c.l.b16 %v480
    %v2453 = vunpack.c.h.b16 %v480
    %v2454 = vunpack.c.l.b16 %v481
    %v2455 = vunpack.c.h.b16 %v481
    %v2456 = vunpack.c.l.b16 %v482
    %v2457 = vunpack.c.h.b16 %v482
    %v2458 = vunpack.c.l.b16 %v483
    %v2459 = vunpack.c.h.b16 %v483
    %v2460 = vunpack.c.l.b16 %v484
    %v2461 = vunpack.c.h.b16 %v484
    %v2462 = vunpack.c.l.b16 %v485
    %v2463 = vunpack.c.h.b16 %v485
    %v2464 = vunpack.c.l.b16 %v486
    %v2465 = vunpack.c.h.b16 %v486
    %v2466 = vunpack.c.l.b16 %v487
    %v2467 = vunpack.c.h.b16 %v487
    %v2468 = vunpack.c.l.b16 %v488
    %v2469 = vunpack.c.h.b16 %v488
    %v2470 = vunpack.c.l.b16 %v489
    %v2471 = vunpack.c.h.b16 %v489
    %v2472 = vunpack.c.l.b16 %v490
    %v2473 = vunpack.c.h.b16 %v490
    %v2474 = vunpack.c.l.b16 %v491
    %v2475 = vunpack.c.h.b16 %v491
    %v2476 = vunpack.c.l.b16 %v492
    %v2477 = vunpack.c.h.b16 %v492
    %v2478 = vunpack.c.l.b16 %v493
    %v2479 = vunpack.c.h.b16 %v493
    %v2480 = vunpack.c.l.b16 %v494
    %v2481 = vunpack.c.h.b16 %v494
    %v2482 = vunpack.c.l.b16 %v495
    %v2483 = vunpack.c.h.b16 %v495
    %v2484 = vunpack.c.l.b16 %v496
    %v2485 = vunpack.c.h.b16 %v496
    %v2486 = vunpack.c.l.b16 %v497
    %v2487 = vunpack.c.h.b16 %v497
    %v2488 = vunpack.c.l.b16 %v498
    %v2489 = vunpack.c.h.b16 %v498
    %v2490 = vunpack.c.l.b16 %v499
    %v2491 = vunpack.c.h.b16 %v499
    %v2492 = vunpack.c.l.b16 %v500
    %v2493 = vunpack.c.h.b16 %v500
    %v2494 = vunpack.c.l.b16 %v501
    %v2495 = vunpack.c.h.b16 %v501
    %v2496 = vunpack.c.l.b16 %v502
    %v2497 = vunpack.c.h.b16 %v502
    %v2498 = vunpack.c.l.b16 %v503
    %v2499 = vunpack.c.h.b16 %v503
    %v2500 = vunpack.c.l.b16 %v504
    %v2501 = vunpack.c.h.b16 %v504
    %v2502 = vunpack.c.l.b16 %v505
    %v2503 = vunpack.c.h.b16 %v505
    %v2504 = vunpack.c.l.b16 %v506
    %v2505 = vunpack.c.h.b16 %v506
    %v2506 = vunpack.c.l.b16 %v507
    %v2507 = vunpack.c.h.b16 %v507
    %v2508 = vunpack.c.l.b16 %v508
    %v2509 = vunpack.c.h.b16 %v508
    %v2510 = vunpack.c.l.b16 %v509
    %v2511 = vunpack.c.h.b16 %v509
    %v2512 = vunpack.c.l.b16 %v510
    %v2513 = vunpack.c.h.b16 %v510
    %v2514 = vunpack.c.l.b16 %v511
    %v2515 = vunpack.c.h.b16 %v511
    %v2516 = vunpack.c.l.b16 %v512
    %v2517 = vunpack.c.h.b16 %v512
    %v2518 = vunpack.c.l.b16 %v513
    %v2519 = vunpack.c.h.b16 %v513
    %v2520 = vunpack.c.l.b16 %v514
    %v2521 = vunpack.c.h.b16 %v514
    %v2522 = vunpack.c.l.b16 %v515
    %v2523 = vunpack.c.h.b16 %v515
    %v2524 = vunpack.c.l.b16 %v516
    %v2525 = vunpack.c.h.b16 %v516
    %v2526 = vunpack.c.l.b16 %v517
    %v2527 = vunpack.c.h.b16 %v517
    %v2528 = vunpack.c.l.b16 %v518
    %v2529 = vunpack.c.h.b16 %v518
    %v2530 = vunpack.c.l.b16 %v519
    %v2531 = vunpack.c.h.b16 %v519
    %v2532 = vunpack.c.l.b16 %v520
    %v2533 = vunpack.c.h.b16 %v520
    %v2534 = vunpack.c.l.b16 %v521
    %v2535 = vunpack.c.h.b16 %v521
    %v2536 = vunpack.c.l.b16 %v522
    %v2537 = vunpack.c.h.b16 %v522
    %v2538 = vunpack.c.l.b16 %v523
    %v2539 = vunpack.c.h.b16 %v523
    %v2540 = vunpack.c.l.b16 %v524
    %v2541 = vunpack.c.h.b16 %v524
    %v2542 = vunpack.c.l.b16 %v525
    %v2543 = vunpack.c.h.b16 %v525
    %v2544 = vunpack.c.l.b16 %v526
    %v2545 = vunpack.c.h.b16 %v526
    %v2546 = vunpack.c.l.b16 %v527
    %v2547 = vunpack.c.h.b16 %v527
    %v2548 = vunpack.c.l.b16 %v528
    %v2549 = vunpack.c.h.b16 %v528
    %v2550 = vunpack.c.l.b16 %v529
    %v2551 = vunpack.c.h.b16 %v529
    %v2552 = vunpack.c.l.b16 %v530
    %v2553 = vunpack.c.h.b16 %v530
    %v2554 = vunpack.c.l.b16 %v531
    %v2555 = vunpack.c.h.b16 %v531
    %v2556 = vunpack.c.l.b16 %v532
    %v2557 = vunpack.c.h.b16 %v532
    %v2558 = vunpack.c.l.b16 %v533
    %v2559 = vunpack.c.h.b16 %v533
    %v2560 = vunpack.c.l.b16 %v534
    %v2561 = vunpack.c.h.b16 %v534
    %v2562 = vunpack.c.l.b16 %v535
    %v2563 = vunpack.c.h.b16 %v535
    %v2564 = vunpack.c.l.b16 %v536
    %v2565 = vunpack.c.h.b16 %v536
    %v2566 = vunpack.c.l.b16 %v537
    %v2567 = vunpack.c.h.b16 %v537
    %v2568 = vunpack.c.l.b16 %v538
    %v2569 = vunpack.c.h.b16 %v538
    %v2570 = vunpack.c.l.b16 %v539
    %v2571 = vunpack.c.h.b16 %v539
    %v2572 = vunpack.c.l.b16 %v540
    %v2573 = vunpack.c.h.b16 %v540
    %v2574 = vunpack.c.l.b16 %v541
    %v2575 = vunpack.c.h.b16 %v541
    %v2576 = vunpack.c.l.b16 %v542
    %v2577 = vunpack.c.h.b16 %v542
    %v2578 = vunpack.c.l.b16 %v543
    %v2579 = vunpack.c.h.b16 %v543
    %v2580 = vunpack.c.l.b16 %v544
    %v2581 = vunpack.c.h.b16 %v544
    %v2582 = vunpack.c.l.b16 %v545
    %v2583 = vunpack.c.h.b16 %v545
    %v2584 = vunpack.c.l.b16 %v546
    %v2585 = vunpack.c.h.b16 %v546
    %v2586 = vunpack.c.l.b16 %v547
    %v2587 = vunpack.c.h.b16 %v547
    %v2588 = vunpack.c.l.b16 %v548
    %v2589 = vunpack.c.h.b16 %v548
    %v2590 = vunpack.c.l.b16 %v549
    %v2591 = vunpack.c.h.b16 %v549
    %v2592 = vunpack.c.l.b16 %v550
    %v2593 = vunpack.c.h.b16 %v550
    %v2594 = vunpack.c.l.b16 %v551
    %v2595 = vunpack.c.h.b16 %v551
    %v2596 = vunpack.c.l.b16 %v552
    %v2597 = vunpack.c.h.b16 %v552
    %v2598 = vunpack.c.l.b16 %v553
    %v2599 = vunpack.c.h.b16 %v553
    %v2600 = vunpack.c.l.b16 %v554
    %v2601 = vunpack.c.h.b16 %v554
    %v2602 = vunpack.c.l.b16 %v555
    %v2603 = vunpack.c.h.b16 %v555
    %v2604 = vunpack.c.l.b16 %v556
    %v2605 = vunpack.c.h.b16 %v556
    %v2606 = vunpack.c.l.b16 %v557
    %v2607 = vunpack.c.h.b16 %v557
    %v2608 = vunpack.c.l.b16 %v558
    %v2609 = vunpack.c.h.b16 %v558
    %v2610 = vunpack.c.l.b16 %v559
    %v2611 = vunpack.c.h.b16 %v559
    %v2612 = vunpack.c.l.b16 %v560
    %v2613 = vunpack.c.h.b16 %v560
    %v2614 = vunpack.c.l.b16 %v561
    %v2615 = vunpack.c.h.b16 %v561
    %v2616 = vunpack.c.l.b16 %v562
    %v2617 = vunpack.c.h.b16 %v562
    %v2618 = vunpack.c.l.b16 %v563
    %v2619 = vunpack.c.h.b16 %v563
    %v2620 = vunpack.c.l.b16 %v564
    %v2621 = vunpack.c.h.b16 %v564
    %v2622 = vunpack.c.l.b16 %v565
    %v2623 = vunpack.c.h.b16 %v565
    %v2624 = vunpack.c.l.b16 %v566
    %v2625 = vunpack.c.h.b16 %v566
    %v2626 = vunpack.c.l.b16 %v567
    %v2627 = vunpack.c.h.b16 %v567
    %v2628 = vunpack.c.l.b16 %v568
    %v2629 = vunpack.c.h.b16 %v568
    %v2630 = vunpack.c.l.b16 %v569
    %v2631 = vunpack.c.h.b16 %v569
    %v2632 = vunpack.c.l.b16 %v570
    %v2633 = vunpack.c.h.b16 %v570
    %v2634 = vunpack.c.l.b16 %v571
    %v2635 = vunpack.c.h.b16 %v571
    %v2636 = vunpack.c.l.b16 %v572
    %v2637 = vunpack.c.h.b16 %v572
    %v2638 = vunpack.c.l.b16 %v573
    %v2639 = vunpack.c.h.b16 %v573
    %v2640 = vunpack.c.l.b16 %v574
    %v2641 = vunpack.c.h.b16 %v574
    %v2642 = vunpack.c.l.b16 %v575
    %v2643 = vunpack.c.h.b16 %v575
    %v2644 = vunpack.c.l.b16 %v576
    %v2645 = vunpack.c.h.b16 %v576
    %v2646 = vunpack.c.l.b16 %v577
    %v2647 = vunpack.c.h.b16 %v577
    %v2648 = vunpack.c.l.b16 %v578
    %v2649 = vunpack.c.h.b16 %v578
    %v2650 = vunpack.c.l.b16 %v579
    %v2651 = vunpack.c.h.b16 %v579
    %v2652 = vunpack.c.l.b16 %v580
    %v2653 = vunpack.c.h.b16 %v580
    %v2654 = vunpack.c.l.b16 %v581
    %v2655 = vunpack.c.h.b16 %v581
    %v2656 = vunpack.c.l.b16 %v582
    %v2657 = vunpack.c.h.b16 %v582
    %v2658 = vunpack.c.l.b16 %v583
    %v2659 = vunpack.c.h.b16 %v583
    %v2660 = vunpack.c.l.b16 %v584
    %v2661 = vunpack.c.h.b16 %v584
    %v2662 = vunpack.c.l.b16 %v585
    %v2663 = vunpack.c.h.b16 %v585
    %v2664 = vunpack.c.l.b16 %v586
    %v2665 = vunpack.c.h.b16 %v586
    %v2666 = vunpack.c.l.b16 %v587
    %v2667 = vunpack.c.h.b16 %v587
    %v2668 = vunpack.c.l.b16 %v588
    %v2669 = vunpack.c.h.b16 %v588
    %v2670 = vunpack.c.l.b16 %v589
    %v2671 = vunpack.c.h.b16 %v589
    %v2672 = vunpack.c.l.b16 %v590
    %v2673 = vunpack.c.h.b16 %v590
    %v2674 = vunpack.c.l.b16 %v591
    %v2675 = vunpack.c.h.b16 %v591
    %v2676 = vunpack.c.l.b16 %v592
    %v2677 = vunpack.c.h.b16 %v592
    %v2678 = vunpack.c.l.b16 %v593
    %v2679 = vunpack.c.h.b16 %v593
    %v2680 = vunpack.c.l.b16 %v594
    %v2681 = vunpack.c.h.b16 %v594
    %v2682 = vunpack.c.l.b16 %v595
    %v2683 = vunpack.c.h.b16 %v595
    %v2684 = vunpack.c.l.b16 %v596
    %v2685 = vunpack.c.h.b16 %v596
    %v2686 = vunpack.c.l.b16 %v597
    %v2687 = vunpack.c.h.b16 %v597
    %v2688 = vunpack.c.l.b16 %v598
    %v2689 = vunpack.c.h.b16 %v598
    %v2690 = vunpack.c.l.b16 %v599
    %v2691 = vunpack.c.h.b16 %v599
    %v2692 = vunpack.c.l.b16 %v600
    %v2693 = vunpack.c.h.b16 %v600
    %v2694 = vunpack.c.l.b16 %v601
    %v2695 = vunpack.c.h.b16 %v601
    %v2696 = vunpack.c.l.b16 %v602
    %v2697 = vunpack.c.h.b16 %v602
    %v2698 = vunpack.c.l.b16 %v603
    %v2699 = vunpack.c.h.b16 %v603
    %v2700 = vunpack.c.l.b16 %v604
    %v2701 = vunpack.c.h.b16 %v604
    %v2702 = vunpack.c.l.b16 %v605
    %v2703 = vunpack.c.h.b16 %v605
    %v2704 = vunpack.c.l.b16 %v606
    %v2705 = vunpack.c.h.b16 %v606
    %v2706 = vunpack.c.l.b16 %v607
    %v2707 = vunpack.c.h.b16 %v607
    %v2708 = vunpack.c.l.b16 %v608
    %v2709 = vunpack.c.h.b16 %v608
    %v2710 = vunpack.c.l.b16 %v609
    %v2711 = vunpack.c.h.b16 %v609
    %v2712 = vunpack.c.l.b16 %v610
    %v2713 = vunpack.c.h.b16 %v610
    %v2714 = vunpack.c.l.b16 %v611
    %v2715 = vunpack.c.h.b16 %v611
    %v2716 = vunpack.c.l.b16 %v612
    %v2717 = vunpack.c.h.b16 %v612
    %v2718 = vunpack.c.l.b16 %v613
    %v2719 = vunpack.c.h.b16 %v613
    %v2720 = vunpack.c.l.b16 %v614
    %v2721 = vunpack.c.h.b16 %v614
    %v2722 = vunpack.c.l.b16 %v615
    %v2723 = vunpack.c.h.b16 %v615
    %v2724 = vunpack.c.l.b16 %v616
    %v2725 = vunpack.c.h.b16 %v616
    %v2726 = vunpack.c.l.b16 %v617
    %v2727 = vunpack.c.h.b16 %v617
    %v2728 = vunpack.c.l.b16 %v618
    %v2729 = vunpack.c.h.b16 %v618
    %v2730 = vunpack.c.l.b16 %v619
    %v2731 = vunpack.c.h.b16 %v619
    %v2732 = vunpack.c.l.b16 %v620
    %v2733 = vunpack.c.h.b16 %v620
    %v2734 = vunpack.c.l.b16 %v621
    %v2735 = vunpack.c.h.b16 %v621
    %v2736 = vunpack.c.l.b16 %v622
    %v2737 = vunpack.c.h.b16 %v622
    %v2738 = vunpack.c.l.b16 %v623
    %v2739 = vunpack.c.h.b16 %v623
    %v2740 = vunpack.c.l.b16 %v624
    %v2741 = vunpack.c.h.b16 %v624
    %v2742 = vunpack.c.l.b16 %v625
    %v2743 = vunpack.c.h.b16 %v625
    %v2744 = vunpack.c.l.b16 %v626
    %v2745 = vunpack.c.h.b16 %v626
    %v2746 = vunpack.c.l.b16 %v627
    %v2747 = vunpack.c.h.b16 %v627
    %v2748 = vunpack.c.l.b16 %v628
    %v2749 = vunpack.c.h.b16 %v628
    %v2750 = vunpack.c.l.b16 %v629
    %v2751 = vunpack.c.h.b16 %v629
    %v2752 = vunpack.c.l.b16 %v630
    %v2753 = vunpack.c.h.b16 %v630
    %v2754 = vunpack.c.l.b16 %v631
    %v2755 = vunpack.c.h.b16 %v631
    %v2756 = vunpack.c.l.b16 %v632
    %v2757 = vunpack.c.h.b16 %v632
    %v2758 = vunpack.c.l.b16 %v633
    %v2759 = vunpack.c.h.b16 %v633
    %v2760 = vunpack.c.l.b16 %v634
    %v2761 = vunpack.c.h.b16 %v634
    %v2762 = vunpack.c.l.b16 %v635
    %v2763 = vunpack.c.h.b16 %v635
    %v2764 = vunpack.c.l.b16 %v636
    %v2765 = vunpack.c.h.b16 %v636
    %v2766 = vunpack.c.l.b16 %v637
    %v2767 = vunpack.c.h.b16 %v637
    %v2768 = vunpack.c.l.b16 %v638
    %v2769 = vunpack.c.h.b16 %v638
    %v2770 = vunpack.c.l.b16 %v639
    %v2771 = vunpack.c.h.b16 %v639
    %v2772 = vunpack.c.l.b16 %v640
    %v2773 = vunpack.c.h.b16 %v640
    %v2774 = vunpack.c.l.b16 %v641
    %v2775 = vunpack.c.h.b16 %v641
    %v2776 = vunpack.c.l.b16 %v642
    %v2777 = vunpack.c.h.b16 %v642
    %v2778 = vunpack.c.l.b16 %v643
    %v2779 = vunpack.c.h.b16 %v643
    %v2780 = vunpack.c.l.b16 %v644
    %v2781 = vunpack.c.h.b16 %v644
    %v2782 = vunpack.c.l.b16 %v645
    %v2783 = vunpack.c.h.b16 %v645
    %v2784 = vunpack.c.l.b16 %v646
    %v2785 = vunpack.c.h.b16 %v646
    %v2786 = vunpack.c.l.b16 %v647
    %v2787 = vunpack.c.h.b16 %v647
    %v2788 = vunpack.c.l.b16 %v648
    %v2789 = vunpack.c.h.b16 %v648
    %v2790 = vunpack.c.l.b16 %v649
    %v2791 = vunpack.c.h.b16 %v649
    %v2792 = vunpack.c.l.b16 %v650
    %v2793 = vunpack.c.h.b16 %v650
    %v2794 = vunpack.c.l.b16 %v651
    %v2795 = vunpack.c.h.b16 %v651
    %v2796 = vunpack.c.l.b16 %v652
    %v2797 = vunpack.c.h.b16 %v652
    %v2798 = vunpack.c.l.b16 %v653
    %v2799 = vunpack.c.h.b16 %v653
    %v2800 = vunpack.c.l.b16 %v654
    %v2801 = vunpack.c.h.b16 %v654
    %v2802 = vunpack.c.l.b16 %v655
    %v2803 = vunpack.c.h.b16 %v655
    %v2804 = vunpack.c.l.b16 %v656
    %v2805 = vunpack.c.h.b16 %v656
    %v2806 = vunpack.c.l.b16 %v657
    %v2807 = vunpack.c.h.b16 %v657
    %v2808 = vunpack.c.l.b16 %v658
    %v2809 = vunpack.c.h.b16 %v658
    %v2810 = vunpack.c.l.b16 %v659
    %v2811 = vunpack.c.h.b16 %v659
    %v2812 = vunpack.c.l.b16 %v660
    %v2813 = vunpack.c.h.b16 %v660
    %v2814 = vunpack.c.l.b16 %v661
    %v2815 = vunpack.c.h.b16 %v661
    %v2816 = vunpack.c.l.b16 %v662
    %v2817 = vunpack.c.h.b16 %v662
    %v2818 = vunpack.c.l.b16 %v663
    %v2819 = vunpack.c.h.b16 %v663
    %v2820 = vunpack.c.l.b16 %v664
    %v2821 = vunpack.c.h.b16 %v664
    %v2822 = vunpack.c.l.b16 %v665
    %v2823 = vunpack.c.h.b16 %v665
    %v2824 = vunpack.c.l.b16 %v666
    %v2825 = vunpack.c.h.b16 %v666
    %v2826 = vunpack.c.l.b16 %v667
    %v2827 = vunpack.c.h.b16 %v667
    %v2828 = vunpack.c.l.b16 %v668
    %v2829 = vunpack.c.h.b16 %v668
    %v2830 = vunpack.c.l.b16 %v669
    %v2831 = vunpack.c.h.b16 %v669
    %v2832 = vunpack.c.l.b16 %v670
    %v2833 = vunpack.c.h.b16 %v670
    %v2834 = vunpack.c.l.b16 %v671
    %v2835 = vunpack.c.h.b16 %v671
    %v2836 = vunpack.c.l.b16 %v672
    %v2837 = vunpack.c.h.b16 %v672
    %v2838 = vunpack.c.l.b16 %v673
    %v2839 = vunpack.c.h.b16 %v673
    %v2840 = vunpack.c.l.b16 %v674
    %v2841 = vunpack.c.h.b16 %v674
    %v2842 = vunpack.c.l.b16 %v675
    %v2843 = vunpack.c.h.b16 %v675
    %v2844 = vunpack.c.l.b16 %v676
    %v2845 = vunpack.c.h.b16 %v676
    %v2846 = vunpack.c.l.b16 %v677
    %v2847 = vunpack.c.h.b16 %v677
    %v2848 = vunpack.c.l.b16 %v678
    %v2849 = vunpack.c.h.b16 %v678
    %v2850 = vunpack.c.l.b16 %v679
    %v2851 = vunpack.c.h.b16 %v679
    %v2852 = vunpack.c.l.b16 %v680
    %v2853 = vunpack.c.h.b16 %v680
    %v2854 = vunpack.c.l.b16 %v681
    %v2855 = vunpack.c.h.b16 %v681
    %v2856 = vunpack.c.l.b16 %v682
    %v2857 = vunpack.c.h.b16 %v682
    %v2858 = vunpack.c.l.b16 %v683
    %v2859 = vunpack.c.h.b16 %v683
    %v2860 = vunpack.c.l.b16 %v684
    %v2861 = vunpack.c.h.b16 %v684
    %v2862 = vunpack.c.l.b16 %v685
    %v2863 = vunpack.c.h.b16 %v685
    %v2864 = vunpack.c.l.b16 %v686
    %v2865 = vunpack.c.h.b16 %v686
    %v2866 = vunpack.c.l.b16 %v687
    %v2867 = vunpack.c.h.b16 %v687
    %v2868 = vunpack.c.l.b16 %v688
    %v2869 = vunpack.c.h.b16 %v688
    %v2870 = vunpack.c.l.b16 %v689
    %v2871 = vunpack.c.h.b16 %v689
    %v2872 = vunpack.c.l.b16 %v690
    %v2873 = vunpack.c.h.b16 %v690
    %v2874 = vunpack.c.l.b16 %v691
    %v2875 = vunpack.c.h.b16 %v691
    %v2876 = vunpack.c.l.b16 %v692
    %v2877 = vunpack.c.h.b16 %v692
    %v2878 = vunpack.c.l.b16 %v693
    %v2879 = vunpack.c.h.b16 %v693
    %v2880 = vunpack.c.l.b16 %v694
    %v2881 = vunpack.c.h.b16 %v694
    %v2882 = vunpack.c.l.b16 %v695
    %v2883 = vunpack.c.h.b16 %v695
    %v2884 = vunpack.c.l.b16 %v696
    %v2885 = vunpack.c.h.b16 %v696
    %v2886 = vunpack.c.l.b16 %v697
    %v2887 = vunpack.c.h.b16 %v697
    %v2888 = vunpack.c.l.b16 %v698
    %v2889 = vunpack.c.h.b16 %v698
    %v2890 = vunpack.c.l.b16 %v699
    %v2891 = vunpack.c.h.b16 %v699
    %v2892 = vunpack.c.l.b16 %v700
    %v2893 = vunpack.c.h.b16 %v700
    %v2894 = vunpack.c.l.b16 %v701
    %v2895 = vunpack.c.h.b16 %v701
    %v2896 = vunpack.c.l.b16 %v702
    %v2897 = vunpack.c.h.b16 %v702
    %v2898 = vunpack.c.l.b16 %v703
    %v2899 = vunpack.c.h.b16 %v703
    %v2900 = vunpack.c.l.b16 %v704
    %v2901 = vunpack.c.h.b16 %v704
    %v2902 = vunpack.c.l.b16 %v705
    %v2903 = vunpack.c.h.b16 %v705
    %v2904 = vunpack.c.l.b16 %v706
    %v2905 = vunpack.c.h.b16 %v706
    %v2906 = vunpack.c.l.b16 %v707
    %v2907 = vunpack.c.h.b16 %v707
    %v2908 = vunpack.c.l.b16 %v708
    %v2909 = vunpack.c.h.b16 %v708
    %v2910 = vunpack.c.l.b16 %v709
    %v2911 = vunpack.c.h.b16 %v709
    %v2912 = vunpack.c.l.b16 %v710
    %v2913 = vunpack.c.h.b16 %v710
    %v2914 = vunpack.c.l.b16 %v711
    %v2915 = vunpack.c.h.b16 %v711
    %v2916 = vunpack.c.l.b16 %v712
    %v2917 = vunpack.c.h.b16 %v712
    %v2918 = vunpack.c.l.b16 %v713
    %v2919 = vunpack.c.h.b16 %v713
    %v2920 = vunpack.c.l.b16 %v714
    %v2921 = vunpack.c.h.b16 %v714
    %v2922 = vunpack.c.l.b16 %v715
    %v2923 = vunpack.c.h.b16 %v715
    %v2924 = vunpack.c.l.b16 %v716
    %v2925 = vunpack.c.h.b16 %v716
    %v2926 = vunpack.c.l.b16 %v717
    %v2927 = vunpack.c.h.b16 %v717
    %v2928 = vunpack.c.l.b16 %v718
    %v2929 = vunpack.c.h.b16 %v718
    %v2930 = vunpack.c.l.b16 %v719
    %v2931 = vunpack.c.h.b16 %v719
    %v2932 = vunpack.c.l.b16 %v720
    %v2933 = vunpack.c.h.b16 %v720
    %v2934 = vunpack.c.l.b16 %v721
    %v2935 = vunpack.c.h.b16 %v721
    %v2936 = vunpack.c.l.b16 %v722
    %v2937 = vunpack.c.h.b16 %v722
    %v2938 = vunpack.c.l.b16 %v723
    %v2939 = vunpack.c.h.b16 %v723
    %v2940 = vunpack.c.l.b16 %v724
    %v2941 = vunpack.c.h.b16 %v724
    %v2942 = vunpack.c.l.b16 %v725
    %v2943 = vunpack.c.h.b16 %v725
    %v2944 = vunpack.c.l.b16 %v726
    %v2945 = vunpack.c.h.b16 %v726
    %v2946 = vunpack.c.l.b16 %v727
    %v2947 = vunpack.c.h.b16 %v727
    %v2948 = vunpack.c.l.b16 %v728
    %v2949 = vunpack.c.h.b16 %v728
    %v2950 = vunpack.c.l.b16 %v729
    %v2951 = vunpack.c.h.b16 %v729
    %v2952 = vunpack.c.l.b16 %v730
    %v2953 = vunpack.c.h.b16 %v730
    %v2954 = vunpack.c.l.b16 %v731
    %v2955 = vunpack.c.h.b16 %v731
    %v2956 = vunpack.c.l.b16 %v732
    %v2957 = vunpack.c.h.b16 %v732
    %v2958 = vunpack.c.l.b16 %v733
    %v2959 = vunpack.c.h.b16 %v733
    %v2960 = vunpack.c.l.b16 %v734
    %v2961 = vunpack.c.h.b16 %v734
    %v2962 = vunpack.c.l.b16 %v735
    %v2963 = vunpack.c.h.b16 %v735
    %v2964 = vunpack.c.l.b16 %v736
    %v2965 = vunpack.c.h.b16 %v736
    %v2966 = vunpack.c.l.b16 %v737
    %v2967 = vunpack.c.h.b16 %v737
    %v2968 = vunpack.c.l.b16 %v738
    %v2969 = vunpack.c.h.b16 %v738
    %v2970 = vunpack.c.l.b16 %v739
    %v2971 = vunpack.c.h.b16 %v739
    %v2972 = vunpack.c.l.b16 %v740
    %v2973 = vunpack.c.h.b16 %v740
    %v2974 = vunpack.c.l.b16 %v741
    %v2975 = vunpack.c.h.b16 %v741
    %v2976 = vunpack.c.l.b16 %v742
    %v2977 = vunpack.c.h.b16 %v742
    %v2978 = vunpack.c.l.b16 %v743
    %v2979 = vunpack.c.h.b16 %v743
    %v2980 = vunpack.c.l.b16 %v744
    %v2981 = vunpack.c.h.b16 %v744
    %v2982 = vunpack.c.l.b16 %v745
    %v2983 = vunpack.c.h.b16 %v745
    %v2984 = vunpack.c.l.b16 %v746
    %v2985 = vunpack.c.h.b16 %v746
    %v2986 = vunpack.c.l.b16 %v747
    %v2987 = vunpack.c.h.b16 %v747
    %v2988 = vunpack.c.l.b16 %v748
    %v2989 = vunpack.c.h.b16 %v748
    %v2990 = vunpack.c.l.b16 %v749
    %v2991 = vunpack.c.h.b16 %v749
    %v2992 = vunpack.c.l.b16 %v750
    %v2993 = vunpack.c.h.b16 %v750
    %v2994 = vunpack.c.l.b16 %v751
    %v2995 = vunpack.c.h.b16 %v751
    %v2996 = vunpack.c.l.b16 %v752
    %v2997 = vunpack.c.h.b16 %v752
    %v2998 = vunpack.c.l.b16 %v753
    %v2999 = vunpack.c.h.b16 %v753
    %v3000 = vunpack.c.l.b16 %v754
    %v3001 = vunpack.c.h.b16 %v754
    %v3002 = vunpack.c.l.b16 %v755
    %v3003 = vunpack.c.h.b16 %v755
    %v3004 = vunpack.c.l.b16 %v756
    %v3005 = vunpack.c.h.b16 %v756
    %v3006 = vunpack.c.l.b16 %v757
    %v3007 = vunpack.c.h.b16 %v757
    %v3008 = vunpack.c.l.b16 %v758
    %v3009 = vunpack.c.h.b16 %v758
    %v3010 = vunpack.c.l.b16 %v759
    %v3011 = vunpack.c.h.b16 %v759
    %v3012 = vunpack.c.l.b16 %v760
    %v3013 = vunpack.c.h.b16 %v760
    %v3014 = vunpack.c.l.b16 %v761
    %v3015 = vunpack.c.h.b16 %v761
    %v3016 = vunpack.c.l.b16 %v762
    %v3017 = vunpack.c.h.b16 %v762
    %v3018 = vunpack.c.l.b16 %v763
    %v3019 = vunpack.c.h.b16 %v763
    %v3020 = vunpack.c.l.b16 %v764
    %v3021 = vunpack.c.h.b16 %v764
    %v3022 = vunpack.c.l.b16 %v765
    %v3023 = vunpack.c.h.b16 %v765
    %v3024 = vunpack.c.l.b16 %v766
    %v3025 = vunpack.c.h.b16 %v766
    %v3026 = vunpack.c.l.b16 %v767
    %v3027 = vunpack.c.h.b16 %v767
    %v3028 = vunpack.c.l.b16 %v768
    %v3029 = vunpack.c.h.b16 %v768
    %v3030 = vunpack.c.l.b16 %v769
    %v3031 = vunpack.c.h.b16 %v769
    %v3032 = vunpack.c.l.b16 %v770
    %v3033 = vunpack.c.h.b16 %v770
    %v3034 = vunpack.c.l.b16 %v771
    %v3035 = vunpack.c.h.b16 %v771
    %v3036 = vunpack.c.l.b16 %v772
    %v3037 = vunpack.c.h.b16 %v772
    %v3038 = vunpack.c.l.b16 %v773
    %v3039 = vunpack.c.h.b16 %v773
    %v3040 = vunpack.c.l.b16 %v774
    %v3041 = vunpack.c.h.b16 %v774
    %v3042 = vunpack.c.l.b16 %v775
    %v3043 = vunpack.c.h.b16 %v775
    %v3044 = vunpack.c.l.b16 %v776
    %v3045 = vunpack.c.h.b16 %v776
    %v3046 = vunpack.c.l.b16 %v777
    %v3047 = vunpack.c.h.b16 %v777
    %v3048 = vunpack.c.l.b16 %v778
    %v3049 = vunpack.c.h.b16 %v778
    %v3050 = vunpack.c.l.b16 %v779
    %v3051 = vunpack.c.h.b16 %v779
    %v3052 = vunpack.c.l.b16 %v780
    %v3053 = vunpack.c.h.b16 %v780
    %v3054 = vunpack.c.l.b16 %v781
    %v3055 = vunpack.c.h.b16 %v781
    %v3056 = vunpack.c.l.b16 %v782
    %v3057 = vunpack.c.h.b16 %v782
    %v3058 = vunpack.c.l.b16 %v783
    %v3059 = vunpack.c.h.b16 %v783
    %v3060 = vunpack.c.l.b16 %v784
    %v3061 = vunpack.c.h.b16 %v784
    %v3062 = vunpack.c.l.b16 %v785
    %v3063 = vunpack.c.h.b16 %v785
    %v3064 = vunpack.c.l.b16 %v786
    %v3065 = vunpack.c.h.b16 %v786
    %v3066 = vunpack.c.l.b16 %v787
    %v3067 = vunpack.c.h.b16 %v787
    %v3068 = vunpack.c.l.b16 %v788
    %v3069 = vunpack.c.h.b16 %v788
    %v3070 = vunpack.c.l.b16 %v789
    %v3071 = vunpack.c.h.b16 %v789
    %v3072 = vunpack.c.l.b16 %v790
    %v3073 = vunpack.c.h.b16 %v790
    %v3074 = vunpack.c.l.b16 %v791
    %v3075 = vunpack.c.h.b16 %v791
    %v3076 = vunpack.c.l.b16 %v792
    %v3077 = vunpack.c.h.b16 %v792
    %v3078 = vunpack.c.l.b16 %v793
    %v3079 = vunpack.c.h.b16 %v793
    %v3080 = vunpack.c.l.b16 %v794
    %v3081 = vunpack.c.h.b16 %v794
    %v3082 = vunpack.c.l.b16 %v795
    %v3083 = vunpack.c.h.b16 %v795
    %v3084 = vunpack.c.l.b16 %v796
    %v3085 = vunpack.c.h.b16 %v796
    %v3086 = vunpack.c.l.b16 %v797
    %v3087 = vunpack.c.h.b16 %v797
    %v3088 = vunpack.c.l.b16 %v798
    %v3089 = vunpack.c.h.b16 %v798
    %v3090 = vunpack.c.l.b16 %v799
    %v3091 = vunpack.c.h.b16 %v799
    %v3092 = vunpack.c.l.b16 %v800
    %v3093 = vunpack.c.h.b16 %v800
    %v3094 = vunpack.c.l.b16 %v801
    %v3095 = vunpack.c.h.b16 %v801
    %v3096 = vunpack.c.l.b16 %v802
    %v3097 = vunpack.c.h.b16 %v802
    %v3098 = vunpack.c.l.b16 %v803
    %v3099 = vunpack.c.h.b16 %v803
    %v3100 = vunpack.c.l.b16 %v804
    %v3101 = vunpack.c.h.b16 %v804
    %v3102 = vunpack.c.l.b16 %v805
    %v3103 = vunpack.c.h.b16 %v805
    %v3104 = vunpack.c.l.b16 %v806
    %v3105 = vunpack.c.h.b16 %v806
    %v3106 = vunpack.c.l.b16 %v807
    %v3107 = vunpack.c.h.b16 %v807
    %v3108 = vunpack.c.l.b16 %v808
    %v3109 = vunpack.c.h.b16 %v808
    %v3110 = vunpack.c.l.b16 %v809
    %v3111 = vunpack.c.h.b16 %v809
    %v3112 = vunpack.c.l.b16 %v810
    %v3113 = vunpack.c.h.b16 %v810
    %v3114 = vunpack.c.l.b16 %v811
    %v3115 = vunpack.c.h.b16 %v811
    %v3116 = vunpack.c.l.b16 %v812
    %v3117 = vunpack.c.h.b16 %v812
    %v3118 = vunpack.c.l.b16 %v813
    %v3119 = vunpack.c.h.b16 %v813
    %v3120 = vunpack.c.l.b16 %v814
    %v3121 = vunpack.c.h.b16 %v814
    %v3122 = vunpack.c.l.b16 %v815
    %v3123 = vunpack.c.h.b16 %v815
    %v3124 = vunpack.c.l.b16 %v816
    %v3125 = vunpack.c.h.b16 %v816
    %v3126 = vunpack.c.l.b16 %v817
    %v3127 = vunpack.c.h.b16 %v817
    %v3128 = vunpack.c.l.b16 %v818
    %v3129 = vunpack.c.h.b16 %v818
    %v3130 = vunpack.c.l.b16 %v819
    %v3131 = vunpack.c.h.b16 %v819
    %v3132 = vunpack.c.l.b16 %v820
    %v3133 = vunpack.c.h.b16 %v820
    %v3134 = vunpack.c.l.b16 %v821
    %v3135 = vunpack.c.h.b16 %v821
    %v3136 = vunpack.c.l.b16 %v822
    %v3137 = vunpack.c.h.b16 %v822
    %v3138 = vunpack.c.l.b16 %v823
    %v3139 = vunpack.c.h.b16 %v823
    %v3140 = vunpack.c.l.b16 %v824
    %v3141 = vunpack.c.h.b16 %v824
    %v3142 = vunpack.c.l.b16 %v825
    %v3143 = vunpack.c.h.b16 %v825
    %v3144 = vunpack.c.l.b16 %v826
    %v3145 = vunpack.c.h.b16 %v826
    %v3146 = vunpack.c.l.b16 %v827
    %v3147 = vunpack.c.h.b16 %v827
    %v3148 = vunpack.c.l.b16 %v828
    %v3149 = vunpack.c.h.b16 %v828
    %v3150 = vunpack.c.l.b16 %v829
    %v3151 = vunpack.c.h.b16 %v829
    %v3152 = vunpack.c.l.b16 %v830
    %v3153 = vunpack.c.h.b16 %v830
    %v3154 = vunpack.c.l.b16 %v831
    %v3155 = vunpack.c.h.b16 %v831
    %v3156 = vunpack.c.l.b16 %v832
    %v3157 = vunpack.c.h.b16 %v832
    %v3158 = vunpack.c.l.b16 %v833
    %v3159 = vunpack.c.h.b16 %v833
    %v3160 = vunpack.c.l.b16 %v834
    %v3161 = vunpack.c.h.b16 %v834
    %v3162 = vunpack.c.l.b16 %v835
    %v3163 = vunpack.c.h.b16 %v835
    %v3164 = vunpack.c.l.b16 %v836
    %v3165 = vunpack.c.h.b16 %v836
    %v3166 = vunpack.c.l.b16 %v837
    %v3167 = vunpack.c.h.b16 %v837
    %v3168 = vunpack.c.l.b16 %v838
    %v3169 = vunpack.c.h.b16 %v838
    %v3170 = vunpack.c.l.b16 %v839
    %v3171 = vunpack.c.h.b16 %v839
    %v3172 = vunpack.c.l.b16 %v840
    %v3173 = vunpack.c.h.b16 %v840
    %v3174 = vunpack.c.l.b16 %v841
    %v3175 = vunpack.c.h.b16 %v841
    %v3176 = vunpack.c.l.b16 %v842
    %v3177 = vunpack.c.h.b16 %v842
    %v3178 = vunpack.c.l.b16 %v843
    %v3179 = vunpack.c.h.b16 %v843
    %v3180 = vunpack.c.l.b16 %v844
    %v3181 = vunpack.c.h.b16 %v844
    %v3182 = vunpack.c.l.b16 %v845
    %v3183 = vunpack.c.h.b16 %v845
    %v3184 = vunpack.c.l.b16 %v846
    %v3185 = vunpack.c.h.b16 %v846
    %v3186 = vunpack.c.l.b16 %v847
    %v3187 = vunpack.c.h.b16 %v847
    %v3188 = vunpack.c.l.b16 %v848
    %v3189 = vunpack.c.h.b16 %v848
    %v3190 = vunpack.c.l.b16 %v849
    %v3191 = vunpack.c.h.b16 %v849
    %v3192 = vunpack.c.l.b16 %v850
    %v3193 = vunpack.c.h.b16 %v850
    %v3194 = vunpack.c.l.b16 %v851
    %v3195 = vunpack.c.h.b16 %v851
    %v3196 = vunpack.c.l.b16 %v852
    %v3197 = vunpack.c.h.b16 %v852
    %v3198 = vunpack.c.l.b16 %v853
    %v3199 = vunpack.c.h.b16 %v853
    %v3200 = vunpack.c.l.b16 %v854
    %v3201 = vunpack.c.h.b16 %v854
    %v3202 = vunpack.c.l.b16 %v855
    %v3203 = vunpack.c.h.b16 %v855
    %v3204 = vunpack.c.l.b16 %v856
    %v3205 = vunpack.c.h.b16 %v856
    %v3206 = vunpack.c.l.b16 %v857
    %v3207 = vunpack.c.h.b16 %v857
    %v3208 = vunpack.c.l.b16 %v858
    %v3209 = vunpack.c.h.b16 %v858
    %v3210 = vunpack.c.l.b16 %v859
    %v3211 = vunpack.c.h.b16 %v859
    %v3212 = vunpack.c.l.b16 %v860
    %v3213 = vunpack.c.h.b16 %v860
    %v3214 = vunpack.c.l.b16 %v861
    %v3215 = vunpack.c.h.b16 %v861
    %v3216 = vunpack.c.l.b16 %v862
    %v3217 = vunpack.c.h.b16 %v862
    %v3218 = vunpack.c.l.b16 %v863
    %v3219 = vunpack.c.h.b16 %v863
    %v3220 = vunpack.c.l.b16 %v864
    %v3221 = vunpack.c.h.b16 %v864
    %v3222 = vunpack.c.l.b16 %v865
    %v3223 = vunpack.c.h.b16 %v865
    %v3224 = vunpack.c.l.b16 %v866
    %v3225 = vunpack.c.h.b16 %v866
    %v3226 = vunpack.c.l.b16 %v867
    %v3227 = vunpack.c.h.b16 %v867
    %v3228 = vunpack.c.l.b16 %v868
    %v3229 = vunpack.c.h.b16 %v868
    %v3230 = vunpack.c.l.b16 %v869
    %v3231 = vunpack.c.h.b16 %v869
    %v3232 = vunpack.c.l.b16 %v870
    %v3233 = vunpack.c.h.b16 %v870
    %v3234 = vunpack.c.l.b16 %v871
    %v3235 = vunpack.c.h.b16 %v871
    %v3236 = vunpack.c.l.b16 %v872
    %v3237 = vunpack.c.h.b16 %v872
    %v3238 = vunpack.c.l.b16 %v873
    %v3239 = vunpack.c.h.b16 %v873
    %v3240 = vunpack.c.l.b16 %v874
    %v3241 = vunpack.c.h.b16 %v874
    %v3242 = vunpack.c.l.b16 %v875
    %v3243 = vunpack.c.h.b16 %v875
    %v3244 = vunpack.c.l.b16 %v876
    %v3245 = vunpack.c.h.b16 %v876
    %v3246 = vunpack.c.l.b16 %v877
    %v3247 = vunpack.c.h.b16 %v877
    %v3248 = vunpack.c.l.b16 %v878
    %v3249 = vunpack.c.h.b16 %v878
    %v3250 = vunpack.c.l.b16 %v879
    %v3251 = vunpack.c.h.b16 %v879
    %v3252 = vunpack.c.l.b16 %v880
    %v3253 = vunpack.c.h.b16 %v880
    %v3254 = vunpack.c.l.b16 %v881
    %v3255 = vunpack.c.h.b16 %v881
    %v3256 = vunpack.c.l.b16 %v882
    %v3257 = vunpack.c.h.b16 %v882
    %v3258 = vunpack.c.l.b16 %v883
    %v3259 = vunpack.c.h.b16 %v883
    %v3260 = vunpack.c.l.b16 %v884
    %v3261 = vunpack.c.h.b16 %v884
    %v3262 = vunpack.c.l.b16 %v885
    %v3263 = vunpack.c.h.b16 %v885
    %v3264 = vunpack.c.l.b16 %v886
    %v3265 = vunpack.c.h.b16 %v886
    %v3266 = vunpack.c.l.b16 %v887
    %v3267 = vunpack.c.h.b16 %v887
    %v3268 = vunpack.c.l.b16 %v888
    %v3269 = vunpack.c.h.b16 %v888
    %v3270 = vunpack.c.l.b16 %v889
    %v3271 = vunpack.c.h.b16 %v889
    %v3272 = vunpack.c.l.b16 %v890
    %v3273 = vunpack.c.h.b16 %v890
    %v3274 = vunpack.c.l.b16 %v891
    %v3275 = vunpack.c.h.b16 %v891
    %v3276 = vunpack.c.l.b16 %v892
    %v3277 = vunpack.c.h.b16 %v892
    %v3278 = vunpack.c.l.b16 %v893
    %v3279 = vunpack.c.h.b16 %v893
    %v3280 = vunpack.c.l.b16 %v894
    %v3281 = vunpack.c.h.b16 %v894
    %v3282 = vunpack.c.l.b16 %v895
    %v3283 = vunpack.c.h.b16 %v895
    %v3284 = vunpack.c.l.b16 %v896
    %v3285 = vunpack.c.h.b16 %v896
    %v3286 = vunpack.c.l.b16 %v897
    %v3287 = vunpack.c.h.b16 %v897
    %v3288 = vunpack.c.l.b16 %v898
    %v3289 = vunpack.c.h.b16 %v898
    %v3290 = vunpack.c.l.b16 %v899
    %v3291 = vunpack.c.h.b16 %v899
    %v3292 = vunpack.c.l.b16 %v900
    %v3293 = vunpack.c.h.b16 %v900
    %v3294 = vunpack.c.l.b16 %v901
    %v3295 = vunpack.c.h.b16 %v901
    %v3296 = vunpack.c.l.b16 %v902
    %v3297 = vunpack.c.h.b16 %v902
    %v3298 = vunpack.c.l.b16 %v903
    %v3299 = vunpack.c.h.b16 %v903
    %v3300 = vunpack.c.l.b16 %v904
    %v3301 = vunpack.c.h.b16 %v904
    %v3302 = vunpack.c.l.b16 %v905
    %v3303 = vunpack.c.h.b16 %v905
    %v3304 = vpack.c.b16 %v1772, %v1768
    %v3305 = vpack.c.b16 %v1773, %v1769
    %v3306 = vpack.c.b16 %v1774, %v1770
    %v3307 = vpack.c.b16 %v1775, %v1771
    %v3308 = vpack.c.b16 %v1780, %v1776
    %v3309 = vpack.c.b16 %v1781, %v1777
    %v3310 = vpack.c.b16 %v1782, %v1778
    %v3311 = vpack.c.b16 %v1783, %v1779
    %v3312 = vpack.c.b16 %v1788, %v1784
    %v3313 = vpack.c.b16 %v1789, %v1785
    %v3314 = vpack.c.b16 %v1790, %v1786
    %v3315 = vpack.c.b16 %v1791, %v1787
    %v3316 = vpack.c.b16 %v1796, %v1792
    %v3317 = vpack.c.b16 %v1797, %v1793
    %v3318 = vpack.c.b16 %v1798, %v1794
    %v3319 = vpack.c.b16 %v1799, %v1795
    %v3320 = vpack.c.b16 %v1804, %v1800
    %v3321 = vpack.c.b16 %v1805, %v1801
    %v3322 = vpack.c.b16 %v1806, %v1802
    %v3323 = vpack.c.b16 %v1807, %v1803
    %v3324 = vpack.c.b16 %v1812, %v1808
    %v3325 = vpack.c.b16 %v1813, %v1809
    %v3326 = vpack.c.b16 %v1814, %v1810
    %v3327 = vpack.c.b16 %v1815, %v1811
    %v3328 = vpack.c.b16 %v1820, %v1816
    %v3329 = vpack.c.b16 %v1821, %v1817
    %v3330 = vpack.c.b16 %v1822, %v1818
    %v3331 = vpack.c.b16 %v1823, %v1819
    %v3332 = vpack.c.b16 %v1828, %v1824
    %v3333 = vpack.c.b16 %v1829, %v1825
    %v3334 = vpack.c.b16 %v1830, %v1826
    %v3335 = vpack.c.b16 %v1831, %v1827
    %v3336 = vpack.c.b16 %v1836, %v1832
    %v3337 = vpack.c.b16 %v1837, %v1833
    %v3338 = vpack.c.b16 %v1838, %v1834
    %v3339 = vpack.c.b16 %v1839, %v1835
    %v3340 = vpack.c.b16 %v1844, %v1840
    %v3341 = vpack.c.b16 %v1845, %v1841
    %v3342 = vpack.c.b16 %v1846, %v1842
    %v3343 = vpack.c.b16 %v1847, %v1843
    %v3344 = vpack.c.b16 %v1852, %v1848
    %v3345 = vpack.c.b16 %v1853, %v1849
    %v3346 = vpack.c.b16 %v1854, %v1850
    %v3347 = vpack.c.b16 %v1855, %v1851
    %v3348 = vpack.c.b16 %v1860, %v1856
    %v3349 = vpack.c.b16 %v1861, %v1857
    %v3350 = vpack.c.b16 %v1862, %v1858
    %v3351 = vpack.c.b16 %v1863, %v1859
    %v3352 = vpack.c.b16 %v1868, %v1864
    %v3353 = vpack.c.b16 %v1869, %v1865
    %v3354 = vpack.c.b16 %v1870, %v1866
    %v3355 = vpack.c.b16 %v1871, %v1867
    %v3356 = vpack.c.b16 %v1876, %v1872
    %v3357 = vpack.c.b16 %v1877, %v1873
    %v3358 = vpack.c.b16 %v1878, %v1874
    %v3359 = vpack.c.b16 %v1879, %v1875
    %v3360 = vpack.c.b16 %v1884, %v1880
    %v3361 = vpack.c.b16 %v1885, %v1881
    %v3362 = vpack.c.b16 %v1886, %v1882
    %v3363 = vpack.c.b16 %v1887, %v1883
    %v3364 = vpack.c.b16 %v1892, %v1888
    %v3365 = vpack.c.b16 %v1893, %v1889
    %v3366 = vpack.c.b16 %v1894, %v1890
    %v3367 = vpack.c.b16 %v1895, %v1891
    %v3368 = vpack.c.b16 %v1900, %v1896
    %v3369 = vpack.c.b16 %v1901, %v1897
    %v3370 = vpack.c.b16 %v1902, %v1898
    %v3371 = vpack.c.b16 %v1903, %v1899
    %v3372 = vpack.c.b16 %v1908, %v1904
    %v3373 = vpack.c.b16 %v1909, %v1905
    %v3374 = vpack.c.b16 %v1910, %v1906
    %v3375 = vpack.c.b16 %v1911, %v1907
    %v3376 = vpack.c.b16 %v1916, %v1912
    %v3377 = vpack.c.b16 %v1917, %v1913
    %v3378 = vpack.c.b16 %v1918, %v1914
    %v3379 = vpack.c.b16 %v1919, %v1915
    %v3380 = vpack.c.b16 %v1924, %v1920
    %v3381 = vpack.c.b16 %v1925, %v1921
    %v3382 = vpack.c.b16 %v1926, %v1922
    %v3383 = vpack.c.b16 %v1927, %v1923
    %v3384 = vpack.c.b16 %v1932, %v1928
    %v3385 = vpack.c.b16 %v1933, %v1929
    %v3386 = vpack.c.b16 %v1934, %v1930
    %v3387 = vpack.c.b16 %v1935, %v1931
    %v3388 = vpack.c.b16 %v1940, %v1936
    %v3389 = vpack.c.b16 %v1941, %v1937
    %v3390 = vpack.c.b16 %v1942, %v1938
    %v3391 = vpack.c.b16 %v1943, %v1939
    %v3392 = vpack.c.b16 %v1948, %v1944
    %v3393 = vpack.c.b16 %v1949, %v1945
    %v3394 = vpack.c.b16 %v1950, %v1946
    %v3395 = vpack.c.b16 %v1951, %v1947
    %v3396 = vpack.c.b16 %v1956, %v1952
    %v3397 = vpack.c.b16 %v1957, %v1953
    %v3398 = vpack.c.b16 %v1958, %v1954
    %v3399 = vpack.c.b16 %v1959, %v1955
    %v3400 = vpack.c.b16 %v1964, %v1960
    %v3401 = vpack.c.b16 %v1965, %v1961
    %v3402 = vpack.c.b16 %v1966, %v1962
    %v3403 = vpack.c.b16 %v1967, %v1963
    %v3404 = vpack.c.b16 %v1972, %v1968
    %v3405 = vpack.c.b16 %v1973, %v1969
    %v3406 = vpack.c.b16 %v1974, %v1970
    %v3407 = vpack.c.b16 %v1975, %v1971
    %v3408 = vpack.c.b16 %v1980, %v1976
    %v3409 = vpack.c.b16 %v1981, %v1977
    %v3410 = vpack.c.b16 %v1982, %v1978
    %v3411 = vpack.c.b16 %v1983, %v1979
    %v3412 = vpack.c.b16 %v1988, %v1984
    %v3413 = vpack.c.b16 %v1989, %v1985
    %v3414 = vpack.c.b16 %v1990, %v1986
    %v3415 = vpack.c.b16 %v1991, %v1987
    %v3416 = vpack.c.b16 %v1996, %v1992
    %v3417 = vpack.c.b16 %v1997, %v1993
    %v3418 = vpack.c.b16 %v1998, %v1994
    %v3419 = vpack.c.b16 %v1999, %v1995
    %v3420 = vpack.c.b16 %v2004, %v2000
    %v3421 = vpack.c.b16 %v2005, %v2001
    %v3422 = vpack.c.b16 %v2006, %v2002
    %v3423 = vpack.c.b16 %v2007, %v2003
    %v3424 = vpack.c.b16 %v2012, %v2008
    %v3425 = vpack.c.b16 %v2013, %v2009
    %v3426 = vpack.c.b16 %v2014, %v2010
    %v3427 = vpack.c.b16 %v2015, %v2011
    %v3428 = vpack.c.b16 %v2020, %v2016
    %v3429 = vpack.c.b16 %v2021, %v2017
    %v3430 = vpack.c.b16 %v2022, %v2018
    %v3431 = vpack.c.b16 %v2023, %v2019
    %v3432 = vpack.c.b16 %v2028, %v2024
    %v3433 = vpack.c.b16 %v2029, %v2025
    %v3434 = vpack.c.b16 %v2030, %v2026
    %v3435 = vpack.c.b16 %v2031, %v2027
    %v3436 = vpack.c.b16 %v2036, %v2032
    %v3437 = vpack.c.b16 %v2037, %v2033
    %v3438 = vpack.c.b16 %v2038, %v2034
    %v3439 = vpack.c.b16 %v2039, %v2035
    %v3440 = vpack.c.b16 %v2044, %v2040
    %v3441 = vpack.c.b16 %v2045, %v2041
    %v3442 = vpack.c.b16 %v2046, %v2042
    %v3443 = vpack.c.b16 %v2047, %v2043
    %v3444 = vpack.c.b16 %v2052, %v2048
    %v3445 = vpack.c.b16 %v2053, %v2049
    %v3446 = vpack.c.b16 %v2054, %v2050
    %v3447 = vpack.c.b16 %v2055, %v2051
    %v3448 = vpack.c.b16 %v2060, %v2056
    %v3449 = vpack.c.b16 %v2061, %v2057
    %v3450 = vpack.c.b16 %v2062, %v2058
    %v3451 = vpack.c.b16 %v2063, %v2059
    %v3452 = vpack.c.b16 %v2068, %v2064
    %v3453 = vpack.c.b16 %v2069, %v2065
    %v3454 = vpack.c.b16 %v2070, %v2066
    %v3455 = vpack.c.b16 %v2071, %v2067
    %v3456 = vpack.c.b16 %v2076, %v2072
    %v3457 = vpack.c.b16 %v2077, %v2073
    %v3458 = vpack.c.b16 %v2078, %v2074
    %v3459 = vpack.c.b16 %v2079, %v2075
    %v3460 = vpack.c.b16 %v2084, %v2080
    %v3461 = vpack.c.b16 %v2085, %v2081
    %v3462 = vpack.c.b16 %v2086, %v2082
    %v3463 = vpack.c.b16 %v2087, %v2083
    %v3464 = vpack.c.b16 %v2092, %v2088
    %v3465 = vpack.c.b16 %v2093, %v2089
    %v3466 = vpack.c.b16 %v2094, %v2090
    %v3467 = vpack.c.b16 %v2095, %v2091
    %v3468 = vpack.c.b16 %v2100, %v2096
    %v3469 = vpack.c.b16 %v2101, %v2097
    %v3470 = vpack.c.b16 %v2102, %v2098
    %v3471 = vpack.c.b16 %v2103, %v2099
    %v3472 = vpack.c.b16 %v2108, %v2104
    %v3473 = vpack.c.b16 %v2109, %v2105
    %v3474 = vpack.c.b16 %v2110, %v2106
    %v3475 = vpack.c.b16 %v2111, %v2107
    %v3476 = vpack.c.b16 %v2116, %v2112
    %v3477 = vpack.c.b16 %v2117, %v2113
    %v3478 = vpack.c.b16 %v2118, %v2114
    %v3479 = vpack.c.b16 %v2119, %v2115
    %v3480 = vpack.c.b16 %v2124, %v2120
    %v3481 = vpack.c.b16 %v2125, %v2121
    %v3482 = vpack.c.b16 %v2126, %v2122
    %v3483 = vpack.c.b16 %v2127, %v2123
    %v3484 = vpack.c.b16 %v2132, %v2128
    %v3485 = vpack.c.b16 %v2133, %v2129
    %v3486 = vpack.c.b16 %v2134, %v2130
    %v3487 = vpack.c.b16 %v2135, %v2131
    %v3488 = vpack.c.b16 %v2140, %v2136
    %v3489 = vpack.c.b16 %v2141, %v2137
    %v3490 = vpack.c.b16 %v2142, %v2138
    %v3491 = vpack.c.b16 %v2143, %v2139
    %v3492 = vpack.c.b16 %v2148, %v2144
    %v3493 = vpack.c.b16 %v2149, %v2145
    %v3494 = vpack.c.b16 %v2150, %v2146
    %v3495 = vpack.c.b16 %v2151, %v2147
    %v3496 = vpack.c.b16 %v2156, %v2152
    %v3497 = vpack.c.b16 %v2157, %v2153
    %v3498 = vpack.c.b16 %v2158, %v2154
    %v3499 = vpack.c.b16 %v2159, %v2155
    %v3500 = vpack.c.b16 %v2164, %v2160
    %v3501 = vpack.c.b16 %v2165, %v2161
    %v3502 = vpack.c.b16 %v2166, %v2162
    %v3503 = vpack.c.b16 %v2167, %v2163
    %v3504 = vpack.c.b16 %v2172, %v2168
    %v3505 = vpack.c.b16 %v2173, %v2169
    %v3506 = vpack.c.b16 %v2174, %v2170
    %v3507 = vpack.c.b16 %v2175, %v2171
    %v3508 = vpack.c.b16 %v2180, %v2176
    %v3509 = vpack.c.b16 %v2181, %v2177
    %v3510 = vpack.c.b16 %v2182, %v2178
    %v3511 = vpack.c.b16 %v2183, %v2179
    %v3512 = vpack.c.b16 %v2188, %v2184
    %v3513 = vpack.c.b16 %v2189, %v2185
    %v3514 = vpack.c.b16 %v2190, %v2186
    %v3515 = vpack.c.b16 %v2191, %v2187
    %v3516 = vpack.c.b16 %v2196, %v2192
    %v3517 = vpack.c.b16 %v2197, %v2193
    %v3518 = vpack.c.b16 %v2198, %v2194
    %v3519 = vpack.c.b16 %v2199, %v2195
    %v3520 = vpack.c.b16 %v2204, %v2200
    %v3521 = vpack.c.b16 %v2205, %v2201
    %v3522 = vpack.c.b16 %v2206, %v2202
    %v3523 = vpack.c.b16 %v2207, %v2203
    %v3524 = vpack.c.b16 %v2212, %v2208
    %v3525 = vpack.c.b16 %v2213, %v2209
    %v3526 = vpack.c.b16 %v2214, %v2210
    %v3527 = vpack.c.b16 %v2215, %v2211
    %v3528 = vpack.c.b16 %v2220, %v2216
    %v3529 = vpack.c.b16 %v2221, %v2217
    %v3530 = vpack.c.b16 %v2222, %v2218
    %v3531 = vpack.c.b16 %v2223, %v2219
    %v3532 = vpack.c.b16 %v2228, %v2224
    %v3533 = vpack.c.b16 %v2229, %v2225
    %v3534 = vpack.c.b16 %v2230, %v2226
    %v3535 = vpack.c.b16 %v2231, %v2227
    %v3536 = vpack.c.b16 %v2236, %v2232
    %v3537 = vpack.c.b16 %v2237, %v2233
    %v3538 = vpack.c.b16 %v2238, %v2234
    %v3539 = vpack.c.b16 %v2239, %v2235
    %v3540 = vpack.c.b16 %v2244, %v2240
    %v3541 = vpack.c.b16 %v2245, %v2241
    %v3542 = vpack.c.b16 %v2246, %v2242
    %v3543 = vpack.c.b16 %v2247, %v2243
    %v3544 = vpack.c.b16 %v2252, %v2248
    %v3545 = vpack.c.b16 %v2253, %v2249
    %v3546 = vpack.c.b16 %v2254, %v2250
    %v3547 = vpack.c.b16 %v2255, %v2251
    %v3548 = vpack.c.b16 %v2260, %v2256
    %v3549 = vpack.c.b16 %v2261, %v2257
    %v3550 = vpack.c.b16 %v2262, %v2258
    %v3551 = vpack.c.b16 %v2263, %v2259
    %v3552 = vpack.c.b16 %v2268, %v2264
    %v3553 = vpack.c.b16 %v2269, %v2265
    %v3554 = vpack.c.b16 %v2270, %v2266
    %v3555 = vpack.c.b16 %v2271, %v2267
    %v3556 = vpack.c.b16 %v2276, %v2272
    %v3557 = vpack.c.b16 %v2277, %v2273
    %v3558 = vpack.c.b16 %v2278, %v2274
    %v3559 = vpack.c.b16 %v2279, %v2275
    %v3560 = vpack.c.b16 %v2284, %v2280
    %v3561 = vpack.c.b16 %v2285, %v2281
    %v3562 = vpack.c.b16 %v2286, %v2282
    %v3563 = vpack.c.b16 %v2287, %v2283
    %v3564 = vpack.c.b16 %v2292, %v2288
    %v3565 = vpack.c.b16 %v2293, %v2289
    %v3566 = vpack.c.b16 %v2294, %v2290
    %v3567 = vpack.c.b16 %v2295, %v2291
    %v3568 = vpack.c.b16 %v2300, %v2296
    %v3569 = vpack.c.b16 %v2301, %v2297
    %v3570 = vpack.c.b16 %v2302, %v2298
    %v3571 = vpack.c.b16 %v2303, %v2299
    %v3572 = vpack.c.b16 %v2308, %v2304
    %v3573 = vpack.c.b16 %v2309, %v2305
    %v3574 = vpack.c.b16 %v2310, %v2306
    %v3575 = vpack.c.b16 %v2311, %v2307
    %v3576 = vpack.c.b16 %v2316, %v2312
    %v3577 = vpack.c.b16 %v2317, %v2313
    %v3578 = vpack.c.b16 %v2318, %v2314
    %v3579 = vpack.c.b16 %v2319, %v2315
    %v3580 = vpack.c.b16 %v2324, %v2320
    %v3581 = vpack.c.b16 %v2325, %v2321
    %v3582 = vpack.c.b16 %v2326, %v2322
    %v3583 = vpack.c.b16 %v2327, %v2323
    %v3584 = vpack.c.b16 %v2332, %v2328
    %v3585 = vpack.c.b16 %v2333, %v2329
    %v3586 = vpack.c.b16 %v2334, %v2330
    %v3587 = vpack.c.b16 %v2335, %v2331
    %v3588 = vpack.c.b16 %v2340, %v2336
    %v3589 = vpack.c.b16 %v2341, %v2337
    %v3590 = vpack.c.b16 %v2342, %v2338
    %v3591 = vpack.c.b16 %v2343, %v2339
    %v3592 = vpack.c.b16 %v2348, %v2344
    %v3593 = vpack.c.b16 %v2349, %v2345
    %v3594 = vpack.c.b16 %v2350, %v2346
    %v3595 = vpack.c.b16 %v2351, %v2347
    %v3596 = vpack.c.b16 %v2356, %v2352
    %v3597 = vpack.c.b16 %v2357, %v2353
    %v3598 = vpack.c.b16 %v2358, %v2354
    %v3599 = vpack.c.b16 %v2359, %v2355
    %v3600 = vpack.c.b16 %v2364, %v2360
    %v3601 = vpack.c.b16 %v2365, %v2361
    %v3602 = vpack.c.b16 %v2366, %v2362
    %v3603 = vpack.c.b16 %v2367, %v2363
    %v3604 = vpack.c.b16 %v2372, %v2368
    %v3605 = vpack.c.b16 %v2373, %v2369
    %v3606 = vpack.c.b16 %v2374, %v2370
    %v3607 = vpack.c.b16 %v2375, %v2371
    %v3608 = vpack.c.b16 %v2380, %v2376
    %v3609 = vpack.c.b16 %v2381, %v2377
    %v3610 = vpack.c.b16 %v2382, %v2378
    %v3611 = vpack.c.b16 %v2383, %v2379
    %v3612 = vpack.c.b16 %v2388, %v2384
    %v3613 = vpack.c.b16 %v2389, %v2385
    %v3614 = vpack.c.b16 %v2390, %v2386
    %v3615 = vpack.c.b16 %v2391, %v2387
    %v3616 = vpack.c.b16 %v2396, %v2392
    %v3617 = vpack.c.b16 %v2397, %v2393
    %v3618 = vpack.c.b16 %v2398, %v2394
    %v3619 = vpack.c.b16 %v2399, %v2395
    %v3620 = vpack.c.b16 %v2404, %v2400
    %v3621 = vpack.c.b16 %v2405, %v2401
    %v3622 = vpack.c.b16 %v2406, %v2402
    %v3623 = vpack.c.b16 %v2407, %v2403
    %v3624 = vpack.c.b16 %v2412, %v2408
    %v3625 = vpack.c.b16 %v2413, %v2409
    %v3626 = vpack.c.b16 %v2414, %v2410
    %v3627 = vpack.c.b16 %v2415, %v2411
    %v3628 = vpack.c.b16 %v2420, %v2416
    %v3629 = vpack.c.b16 %v2421, %v2417
    %v3630 = vpack.c.b16 %v2422, %v2418
    %v3631 = vpack.c.b16 %v2423, %v2419
    %v3632 = vpack.c.b16 %v2428, %v2424
    %v3633 = vpack.c.b16 %v2429, %v2425
    %v3634 = vpack.c.b16 %v2430, %v2426
    %v3635 = vpack.c.b16 %v2431, %v2427
    %v3636 = vpack.c.b16 %v2436, %v2432
    %v3637 = vpack.c.b16 %v2437, %v2433
    %v3638 = vpack.c.b16 %v2438, %v2434
    %v3639 = vpack.c.b16 %v2439, %v2435
    %v3640 = vpack.c.b16 %v2444, %v2440
    %v3641 = vpack.c.b16 %v2445, %v2441
    %v3642 = vpack.c.b16 %v2446, %v2442
    %v3643 = vpack.c.b16 %v2447, %v2443
    %v3644 = vpack.c.b16 %v2452, %v2448
    %v3645 = vpack.c.b16 %v2453, %v2449
    %v3646 = vpack.c.b16 %v2454, %v2450
    %v3647 = vpack.c.b16 %v2455, %v2451
    %v3648 = vpack.c.b16 %v2460, %v2456
    %v3649 = vpack.c.b16 %v2461, %v2457
    %v3650 = vpack.c.b16 %v2462, %v2458
    %v3651 = vpack.c.b16 %v2463, %v2459
    %v3652 = vpack.c.b16 %v2468, %v2464
    %v3653 = vpack.c.b16 %v2469, %v2465
    %v3654 = vpack.c.b16 %v2470, %v2466
    %v3655 = vpack.c.b16 %v2471, %v2467
    %v3656 = vpack.c.b16 %v2476, %v2472
    %v3657 = vpack.c.b16 %v2477, %v2473
    %v3658 = vpack.c.b16 %v2478, %v2474
    %v3659 = vpack.c.b16 %v2479, %v2475
    %v3660 = vpack.c.b16 %v2484, %v2480
    %v3661 = vpack.c.b16 %v2485, %v2481
    %v3662 = vpack.c.b16 %v2486, %v2482
    %v3663 = vpack.c.b16 %v2487, %v2483
    %v3664 = vpack.c.b16 %v2492, %v2488
    %v3665 = vpack.c.b16 %v2493, %v2489
    %v3666 = vpack.c.b16 %v2494, %v2490
    %v3667 = vpack.c.b16 %v2495, %v2491
    %v3668 = vpack.c.b16 %v2500, %v2496
    %v3669 = vpack.c.b16 %v2501, %v2497
    %v3670 = vpack.c.b16 %v2502, %v2498
    %v3671 = vpack.c.b16 %v2503, %v2499
    %v3672 = vpack.c.b16 %v2508, %v2504
    %v3673 = vpack.c.b16 %v2509, %v2505
    %v3674 = vpack.c.b16 %v2510, %v2506
    %v3675 = vpack.c.b16 %v2511, %v2507
    %v3676 = vpack.c.b16 %v2516, %v2512
    %v3677 = vpack.c.b16 %v2517, %v2513
    %v3678 = vpack.c.b16 %v2518, %v2514
    %v3679 = vpack.c.b16 %v2519, %v2515
    %v3680 = vpack.c.b16 %v2524, %v2520
    %v3681 = vpack.c.b16 %v2525, %v2521
    %v3682 = vpack.c.b16 %v2526, %v2522
    %v3683 = vpack.c.b16 %v2527, %v2523
    %v3684 = vpack.c.b16 %v2532, %v2528
    %v3685 = vpack.c.b16 %v2533, %v2529
    %v3686 = vpack.c.b16 %v2534, %v2530
    %v3687 = vpack.c.b16 %v2535, %v2531
    %v3688 = vpack.c.b16 %v2540, %v2536
    %v3689 = vpack.c.b16 %v2541, %v2537
    %v3690 = vpack.c.b16 %v2542, %v2538
    %v3691 = vpack.c.b16 %v2543, %v2539
    %v3692 = vpack.c.b16 %v2548, %v2544
    %v3693 = vpack.c.b16 %v2549, %v2545
    %v3694 = vpack.c.b16 %v2550, %v2546
    %v3695 = vpack.c.b16 %v2551, %v2547
    %v3696 = vpack.c.b16 %v2556, %v2552
    %v3697 = vpack.c.b16 %v2557, %v2553
    %v3698 = vpack.c.b16 %v2558, %v2554
    %v3699 = vpack.c.b16 %v2559, %v2555
    %v3700 = vpack.c.b16 %v2564, %v2560
    %v3701 = vpack.c.b16 %v2565, %v2561
    %v3702 = vpack.c.b16 %v2566, %v2562
    %v3703 = vpack.c.b16 %v2567, %v2563
    %v3704 = vpack.c.b16 %v2572, %v2568
    %v3705 = vpack.c.b16 %v2573, %v2569
    %v3706 = vpack.c.b16 %v2574, %v2570
    %v3707 = vpack.c.b16 %v2575, %v2571
    %v3708 = vpack.c.b16 %v2580, %v2576
    %v3709 = vpack.c.b16 %v2581, %v2577
    %v3710 = vpack.c.b16 %v2582, %v2578
    %v3711 = vpack.c.b16 %v2583, %v2579
    %v3712 = vpack.c.b16 %v2588, %v2584
    %v3713 = vpack.c.b16 %v2589, %v2585
    %v3714 = vpack.c.b16 %v2590, %v2586
    %v3715 = vpack.c.b16 %v2591, %v2587
    %v3716 = vpack.c.b16 %v2596, %v2592
    %v3717 = vpack.c.b16 %v2597, %v2593
    %v3718 = vpack.c.b16 %v2598, %v2594
    %v3719 = vpack.c.b16 %v2599, %v2595
    %v3720 = vpack.c.b16 %v2604, %v2600
    %v3721 = vpack.c.b16 %v2605, %v2601
    %v3722 = vpack.c.b16 %v2606, %v2602
    %v3723 = vpack.c.b16 %v2607, %v2603
    %v3724 = vpack.c.b16 %v2612, %v2608
    %v3725 = vpack.c.b16 %v2613, %v2609
    %v3726 = vpack.c.b16 %v2614, %v2610
    %v3727 = vpack.c.b16 %v2615, %v2611
    %v3728 = vpack.c.b16 %v2620, %v2616
    %v3729 = vpack.c.b16 %v2621, %v2617
    %v3730 = vpack.c.b16 %v2622, %v2618
    %v3731 = vpack.c.b16 %v2623, %v2619
    %v3732 = vpack.c.b16 %v2628, %v2624
    %v3733 = vpack.c.b16 %v2629, %v2625
    %v3734 = vpack.c.b16 %v2630, %v2626
    %v3735 = vpack.c.b16 %v2631, %v2627
    %v3736 = vpack.c.b16 %v2636, %v2632
    %v3737 = vpack.c.b16 %v2637, %v2633
    %v3738 = vpack.c.b16 %v2638, %v2634
    %v3739 = vpack.c.b16 %v2639, %v2635
    %v3740 = vpack.c.b16 %v2644, %v2640
    %v3741 = vpack.c.b16 %v2645, %v2641
    %v3742 = vpack.c.b16 %v2646, %v2642
    %v3743 = vpack.c.b16 %v2647, %v2643
    %v3744 = vpack.c.b16 %v2652, %v2648
    %v3745 = vpack.c.b16 %v2653, %v2649
    %v3746 = vpack.c.b16 %v2654, %v2650
    %v3747 = vpack.c.b16 %v2655, %v2651
    %v3748 = vpack.c.b16 %v2660, %v2656
    %v3749 = vpack.c.b16 %v2661, %v2657
    %v3750 = vpack.c.b16 %v2662, %v2658
    %v3751 = vpack.c.b16 %v2663, %v2659
    %v3752 = vpack.c.b16 %v2668, %v2664
    %v3753 = vpack.c.b16 %v2669, %v2665
    %v3754 = vpack.c.b16 %v2670, %v2666
    %v3755 = vpack.c.b16 %v2671, %v2667
    %v3756 = vpack.c.b16 %v2676, %v2672
    %v3757 = vpack.c.b16 %v2677, %v2673
    %v3758 = vpack.c.b16 %v2678, %v2674
    %v3759 = vpack.c.b16 %v2679, %v2675
    %v3760 = vpack.c.b16 %v2684, %v2680
    %v3761 = vpack.c.b16 %v2685, %v2681
    %v3762 = vpack.c.b16 %v2686, %v2682
    %v3763 = vpack.c.b16 %v2687, %v2683
    %v3764 = vpack.c.b16 %v2692, %v2688
    %v3765 = vpack.c.b16 %v2693, %v2689
    %v3766 = vpack.c.b16 %v2694, %v2690
    %v3767 = vpack.c.b16 %v2695, %v2691
    %v3768 = vpack.c.b16 %v2700, %v2696
    %v3769 = vpack.c.b16 %v2701, %v2697
    %v3770 = vpack.c.b16 %v2702, %v2698
    %v3771 = vpack.c.b16 %v2703, %v2699
    %v3772 = vpack.c.b16 %v2708, %v2704
    %v3773 = vpack.c.b16 %v2709, %v2705
    %v3774 = vpack.c.b16 %v2710, %v2706
    %v3775 = vpack.c.b16 %v2711, %v2707
    %v3776 = vpack.c.b16 %v2716, %v2712
    %v3777 = vpack.c.b16 %v2717, %v2713
    %v3778 = vpack.c.b16 %v2718, %v2714
    %v3779 = vpack.c.b16 %v2719, %v2715
    %v3780 = vpack.c.b16 %v2724, %v2720
    %v3781 = vpack.c.b16 %v2725, %v2721
    %v3782 = vpack.c.b16 %v2726, %v2722
    %v3783 = vpack.c.b16 %v2727, %v2723
    %v3784 = vpack.c.b16 %v2732, %v2728
    %v3785 = vpack.c.b16 %v2733, %v2729
    %v3786 = vpack.c.b16 %v2734, %v2730
    %v3787 = vpack.c.b16 %v2735, %v2731
    %v3788 = vpack.c.b16 %v2740, %v2736
    %v3789 = vpack.c.b16 %v2741, %v2737
    %v3790 = vpack.c.b16 %v2742, %v2738
    %v3791 = vpack.c.b16 %v2743, %v2739
    %v3792 = vpack.c.b16 %v2748, %v2744
    %v3793 = vpack.c.b16 %v2749, %v2745
    %v3794 = vpack.c.b16 %v2750, %v2746
    %v3795 = vpack.c.b16 %v2751, %v2747
    %v3796 = vpack.c.b16 %v2756, %v2752
    %v3797 = vpack.c.b16 %v2757, %v2753
    %v3798 = vpack.c.b16 %v2758, %v2754
    %v3799 = vpack.c.b16 %v2759, %v2755
    %v3800 = vpack.c.b16 %v2764, %v2760
    %v3801 = vpack.c.b16 %v2765, %v2761
    %v3802 = vpack.c.b16 %v2766, %v2762
    %v3803 = vpack.c.b16 %v2767, %v2763
    %v3804 = vpack.c.b16 %v2772, %v2768
    %v3805 = vpack.c.b16 %v2773, %v2769
    %v3806 = vpack.c.b16 %v2774, %v2770
    %v3807 = vpack.c.b16 %v2775, %v2771
    %v3808 = vpack.c.b16 %v2780, %v2776
    %v3809 = vpack.c.b16 %v2781, %v2777
    %v3810 = vpack.c.b16 %v2782, %v2778
    %v3811 = vpack.c.b16 %v2783, %v2779
    %v3812 = vpack.c.b16 %v2788, %v2784
    %v3813 = vpack.c.b16 %v2789, %v2785
    %v3814 = vpack.c.b16 %v2790, %v2786
    %v3815 = vpack.c.b16 %v2791, %v2787
    %v3816 = vpack.c.b16 %v2796, %v2792
    %v3817 = vpack.c.b16 %v2797, %v2793
    %v3818 = vpack.c.b16 %v2798, %v2794
    %v3819 = vpack.c.b16 %v2799, %v2795
    %v3820 = vpack.c.b16 %v2804, %v2800
    %v3821 = vpack.c.b16 %v2805, %v2801
    %v3822 = vpack.c.b16 %v2806, %v2802
    %v3823 = vpack.c.b16 %v2807, %v2803
    %v3824 = vpack.c.b16 %v2812, %v2808
    %v3825 = vpack.c.b16 %v2813, %v2809
    %v3826 = vpack.c.b16 %v2814, %v2810
    %v3827 = vpack.c.b16 %v2815, %v2811
    %v3828 = vpack.c.b16 %v2820, %v2816
    %v3829 = vpack.c.b16 %v2821, %v2817
    %v3830 = vpack.c.b16 %v2822, %v2818
    %v3831 = vpack.c.b16 %v2823, %v2819
    %v3832 = vpack.c.b16 %v2828, %v2824
    %v3833 = vpack.c.b16 %v2829, %v2825
    %v3834 = vpack.c.b16 %v2830, %v2826
    %v3835 = vpack.c.b16 %v2831, %v2827
    %v3836 = vpack.c.b16 %v2836, %v2832
    %v3837 = vpack.c.b16 %v2837, %v2833
    %v3838 = vpack.c.b16 %v2838, %v2834
    %v3839 = vpack.c.b16 %v2839, %v2835
    %v3840 = vpack.c.b16 %v2844, %v2840
    %v3841 = vpack.c.b16 %v2845, %v2841
    %v3842 = vpack.c.b16 %v2846, %v2842
    %v3843 = vpack.c.b16 %v2847, %v2843
    %v3844 = vpack.c.b16 %v2852, %v2848
    %v3845 = vpack.c.b16 %v2853, %v2849
    %v3846 = vpack.c.b16 %v2854, %v2850
    %v3847 = vpack.c.b16 %v2855, %v2851
    %v3848 = vpack.c.b16 %v2860, %v2856
    %v3849 = vpack.c.b16 %v2861, %v2857
    %v3850 = vpack.c.b16 %v2862, %v2858
    %v3851 = vpack.c.b16 %v2863, %v2859
    %v3852 = vpack.c.b16 %v2868, %v2864
    %v3853 = vpack.c.b16 %v2869, %v2865
    %v3854 = vpack.c.b16 %v2870, %v2866
    %v3855 = vpack.c.b16 %v2871, %v2867
    %v3856 = vpack.c.b16 %v2876, %v2872
    %v3857 = vpack.c.b16 %v2877, %v2873
    %v3858 = vpack.c.b16 %v2878, %v2874
    %v3859 = vpack.c.b16 %v2879, %v2875
    %v3860 = vpack.c.b16 %v2884, %v2880
    %v3861 = vpack.c.b16 %v2885, %v2881
    %v3862 = vpack.c.b16 %v2886, %v2882
    %v3863 = vpack.c.b16 %v2887, %v2883
    %v3864 = vpack.c.b16 %v2892, %v2888
    %v3865 = vpack.c.b16 %v2893, %v2889
    %v3866 = vpack.c.b16 %v2894, %v2890
    %v3867 = vpack.c.b16 %v2895, %v2891
    %v3868 = vpack.c.b16 %v2900, %v2896
    %v3869 = vpack.c.b16 %v2901, %v2897
    %v3870 = vpack.c.b16 %v2902, %v2898
    %v3871 = vpack.c.b16 %v2903, %v2899
    %v3872 = vpack.c.b16 %v2908, %v2904
    %v3873 = vpack.c.b16 %v2909, %v2905
    %v3874 = vpack.c.b16 %v2910, %v2906
    %v3875 = vpack.c.b16 %v2911, %v2907
    %v3876 = vpack.c.b16 %v2916, %v2912
    %v3877 = vpack.c.b16 %v2917, %v2913
    %v3878 = vpack.c.b16 %v2918, %v2914
    %v3879 = vpack.c.b16 %v2919, %v2915
    %v3880 = vpack.c.b16 %v2924, %v2920
    %v3881 = vpack.c.b16 %v2925, %v2921
    %v3882 = vpack.c.b16 %v2926, %v2922
    %v3883 = vpack.c.b16 %v2927, %v2923
    %v3884 = vpack.c.b16 %v2932, %v2928
    %v3885 = vpack.c.b16 %v2933, %v2929
    %v3886 = vpack.c.b16 %v2934, %v2930
    %v3887 = vpack.c.b16 %v2935, %v2931
    %v3888 = vpack.c.b16 %v2940, %v2936
    %v3889 = vpack.c.b16 %v2941, %v2937
    %v3890 = vpack.c.b16 %v2942, %v2938
    %v3891 = vpack.c.b16 %v2943, %v2939
    %v3892 = vpack.c.b16 %v2948, %v2944
    %v3893 = vpack.c.b16 %v2949, %v2945
    %v3894 = vpack.c.b16 %v2950, %v2946
    %v3895 = vpack.c.b16 %v2951, %v2947
    %v3896 = vpack.c.b16 %v2956, %v2952
    %v3897 = vpack.c.b16 %v2957, %v2953
    %v3898 = vpack.c.b16 %v2958, %v2954
    %v3899 = vpack.c.b16 %v2959, %v2955
    %v3900 = vpack.c.b16 %v2964, %v2960
    %v3901 = vpack.c.b16 %v2965, %v2961
    %v3902 = vpack.c.b16 %v2966, %v2962
    %v3903 = vpack.c.b16 %v2967, %v2963
    %v3904 = vpack.c.b16 %v2972, %v2968
    %v3905 = vpack.c.b16 %v2973, %v2969
    %v3906 = vpack.c.b16 %v2974, %v2970
    %v3907 = vpack.c.b16 %v2975, %v2971
    %v3908 = vpack.c.b16 %v2980, %v2976
    %v3909 = vpack.c.b16 %v2981, %v2977
    %v3910 = vpack.c.b16 %v2982, %v2978
    %v3911 = vpack.c.b16 %v2983, %v2979
    %v3912 = vpack.c.b16 %v2988, %v2984
    %v3913 = vpack.c.b16 %v2989, %v2985
    %v3914 = vpack.c.b16 %v2990, %v2986
    %v3915 = vpack.c.b16 %v2991, %v2987
    %v3916 = vpack.c.b16 %v2996, %v2992
    %v3917 = vpack.c.b16 %v2997, %v2993
    %v3918 = vpack.c.b16 %v2998, %v2994
    %v3919 = vpack.c.b16 %v2999, %v2995
    %v3920 = vpack.c.b16 %v3004, %v3000
    %v3921 = vpack.c.b16 %v3005, %v3001
    %v3922 = vpack.c.b16 %v3006, %v3002
    %v3923 = vpack.c.b16 %v3007, %v3003
    %v3924 = vpack.c.b16 %v3012, %v3008
    %v3925 = vpack.c.b16 %v3013, %v3009
    %v3926 = vpack.c.b16 %v3014, %v3010
    %v3927 = vpack.c.b16 %v3015, %v3011
    %v3928 = vpack.c.b16 %v3020, %v3016
    %v3929 = vpack.c.b16 %v3021, %v3017
    %v3930 = vpack.c.b16 %v3022, %v3018
    %v3931 = vpack.c.b16 %v3023, %v3019
    %v3932 = vpack.c.b16 %v3028, %v3024
    %v3933 = vpack.c.b16 %v3029, %v3025
    %v3934 = vpack.c.b16 %v3030, %v3026
    %v3935 = vpack.c.b16 %v3031, %v3027
    %v3936 = vpack.c.b16 %v3036, %v3032
    %v3937 = vpack.c.b16 %v3037, %v3033
    %v3938 = vpack.c.b16 %v3038, %v3034
    %v3939 = vpack.c.b16 %v3039, %v3035
    %v3940 = vpack.c.b16 %v3044, %v3040
    %v3941 = vpack.c.b16 %v3045, %v3041
    %v3942 = vpack.c.b16 %v3046, %v3042
    %v3943 = vpack.c.b16 %v3047, %v3043
    %v3944 = vpack.c.b16 %v3052, %v3048
    %v3945 = vpack.c.b16 %v3053, %v3049
    %v3946 = vpack.c.b16 %v3054, %v3050
    %v3947 = vpack.c.b16 %v3055, %v3051
    %v3948 = vpack.c.b16 %v3060, %v3056
    %v3949 = vpack.c.b16 %v3061, %v3057
    %v3950 = vpack.c.b16 %v3062, %v3058
    %v3951 = vpack.c.b16 %v3063, %v3059
    %v3952 = vpack.c.b16 %v3068, %v3064
    %v3953 = vpack.c.b16 %v3069, %v3065
    %v3954 = vpack.c.b16 %v3070, %v3066
    %v3955 = vpack.c.b16 %v3071, %v3067
    %v3956 = vpack.c.b16 %v3076, %v3072
    %v3957 = vpack.c.b16 %v3077, %v3073
    %v3958 = vpack.c.b16 %v3078, %v3074
    %v3959 = vpack.c.b16 %v3079, %v3075
    %v3960 = vpack.c.b16 %v3084, %v3080
    %v3961 = vpack.c.b16 %v3085, %v3081
    %v3962 = vpack.c.b16 %v3086, %v3082
    %v3963 = vpack.c.b16 %v3087, %v3083
    %v3964 = vpack.c.b16 %v3092, %v3088
    %v3965 = vpack.c.b16 %v3093, %v3089
    %v3966 = vpack.c.b16 %v3094, %v3090
    %v3967 = vpack.c.b16 %v3095, %v3091
    %v3968 = vpack.c.b16 %v3100, %v3096
    %v3969 = vpack.c.b16 %v3101, %v3097
    %v3970 = vpack.c.b16 %v3102, %v3098
    %v3971 = vpack.c.b16 %v3103, %v3099
    %v3972 = vpack.c.b16 %v3108, %v3104
    %v3973 = vpack.c.b16 %v3109, %v3105
    %v3974 = vpack.c.b16 %v3110, %v3106
    %v3975 = vpack.c.b16 %v3111, %v3107
    %v3976 = vpack.c.b16 %v3116, %v3112
    %v3977 = vpack.c.b16 %v3117, %v3113
    %v3978 = vpack.c.b16 %v3118, %v3114
    %v3979 = vpack.c.b16 %v3119, %v3115
    %v3980 = vpack.c.b16 %v3124, %v3120
    %v3981 = vpack.c.b16 %v3125, %v3121
    %v3982 = vpack.c.b16 %v3126, %v3122
    %v3983 = vpack.c.b16 %v3127, %v3123
    %v3984 = vpack.c.b16 %v3132, %v3128
    %v3985 = vpack.c.b16 %v3133, %v3129
    %v3986 = vpack.c.b16 %v3134, %v3130
    %v3987 = vpack.c.b16 %v3135, %v3131
    %v3988 = vpack.c.b16 %v3140, %v3136
    %v3989 = vpack.c.b16 %v3141, %v3137
    %v3990 = vpack.c.b16 %v3142, %v3138
    %v3991 = vpack.c.b16 %v3143, %v3139
    %v3992 = vpack.c.b16 %v3148, %v3144
    %v3993 = vpack.c.b16 %v3149, %v3145
    %v3994 = vpack.c.b16 %v3150, %v3146
    %v3995 = vpack.c.b16 %v3151, %v3147
    %v3996 = vpack.c.b16 %v3156, %v3152
    %v3997 = vpack.c.b16 %v3157, %v3153
    %v3998 = vpack.c.b16 %v3158, %v3154
    %v3999 = vpack.c.b16 %v3159, %v3155
    %v4000 = vpack.c.b16 %v3164, %v3160
    %v4001 = vpack.c.b16 %v3165, %v3161
    %v4002 = vpack.c.b16 %v3166, %v3162
    %v4003 = vpack.c.b16 %v3167, %v3163
    %v4004 = vpack.c.b16 %v3172, %v3168
    %v4005 = vpack.c.b16 %v3173, %v3169
    %v4006 = vpack.c.b16 %v3174, %v3170
    %v4007 = vpack.c.b16 %v3175, %v3171
    %v4008 = vpack.c.b16 %v3180, %v3176
    %v4009 = vpack.c.b16 %v3181, %v3177
    %v4010 = vpack.c.b16 %v3182, %v3178
    %v4011 = vpack.c.b16 %v3183, %v3179
    %v4012 = vpack.c.b16 %v3188, %v3184
    %v4013 = vpack.c.b16 %v3189, %v3185
    %v4014 = vpack.c.b16 %v3190, %v3186
    %v4015 = vpack.c.b16 %v3191, %v3187
    %v4016 = vpack.c.b16 %v3196, %v3192
    %v4017 = vpack.c.b16 %v3197, %v3193
    %v4018 = vpack.c.b16 %v3198, %v3194
    %v4019 = vpack.c.b16 %v3199, %v3195
    %v4020 = vpack.c.b16 %v3204, %v3200
    %v4021 = vpack.c.b16 %v3205, %v3201
    %v4022 = vpack.c.b16 %v3206, %v3202
    %v4023 = vpack.c.b16 %v3207, %v3203
    %v4024 = vpack.c.b16 %v3212, %v3208
    %v4025 = vpack.c.b16 %v3213, %v3209
    %v4026 = vpack.c.b16 %v3214, %v3210
    %v4027 = vpack.c.b16 %v3215, %v3211
    %v4028 = vpack.c.b16 %v3220, %v3216
    %v4029 = vpack.c.b16 %v3221, %v3217
    %v4030 = vpack.c.b16 %v3222, %v3218
    %v4031 = vpack.c.b16 %v3223, %v3219
    %v4032 = vpack.c.b16 %v3228, %v3224
    %v4033 = vpack.c.b16 %v3229, %v3225
    %v4034 = vpack.c.b16 %v3230, %v3226
    %v4035 = vpack.c.b16 %v3231, %v3227
    %v4036 = vpack.c.b16 %v3236, %v3232
    %v4037 = vpack.c.b16 %v3237, %v3233
    %v4038 = vpack.c.b16 %v3238, %v3234
    %v4039 = vpack.c.b16 %v3239, %v3235
    %v4040 = vpack.c.b16 %v3244, %v3240
    %v4041 = vpack.c.b16 %v3245, %v3241
    %v4042 = vpack.c.b16 %v3246, %v3242
    %v4043 = vpack.c.b16 %v3247, %v3243
    %v4044 = vpack.c.b16 %v3252, %v3248
    %v4045 = vpack.c.b16 %v3253, %v3249
    %v4046 = vpack.c.b16 %v3254, %v3250
    %v4047 = vpack.c.b16 %v3255, %v3251
    %v4048 = vpack.c.b16 %v3260, %v3256
    %v4049 = vpack.c.b16 %v3261, %v3257
    %v4050 = vpack.c.b16 %v3262, %v3258
    %v4051 = vpack.c.b16 %v3263, %v3259
    %v4052 = vpack.c.b16 %v3268, %v3264
    %v4053 = vpack.c.b16 %v3269, %v3265
    %v4054 = vpack.c.b16 %v3270, %v3266
    %v4055 = vpack.c.b16 %v3271, %v3267
    %v4056 = vpack.c.b16 %v3276, %v3272
    %v4057 = vpack.c.b16 %v3277, %v3273
    %v4058 = vpack.c.b16 %v3278, %v3274
    %v4059 = vpack.c.b16 %v3279, %v3275
    %v4060 = vpack.c.b16 %v3284, %v3280
    %v4061 = vpack.c.b16 %v3285, %v3281
    %v4062 = vpack.c.b16 %v3286, %v3282
    %v4063 = vpack.c.b16 %v3287, %v3283
    %v4064 = vpack.c.b16 %v3292, %v3288
    %v4065 = vpack.c.b16 %v3293, %v3289
    %v4066 = vpack.c.b16 %v3294, %v3290
    %v4067 = vpack.c.b16 %v3295, %v3291
    %v4068 = vpack.c.b16 %v3300, %v3296
    %v4069 = vpack.c.b16 %v3301, %v3297
    %v4070 = vpack.c.b16 %v3302, %v3298
    %v4071 = vpack.c.b16 %v3303, %v3299
    %4840 = vmatpush.bf16.msra.mxu0 %v3332
    %4841 = vmatpush.bf16.msra.mxu0 %v3328
    %4842 = vmatpush.bf16.msra.mxu0 %v3324
    %4843 = vmatpush.bf16.msra.mxu0 %v3320
    %4844 = vmatpush.bf16.msra.mxu0 %v3316
    %4845 = vmatpush.bf16.msra.mxu0 %v3312
    %4846 = vmatpush.bf16.msra.mxu0 %v3308
    %4847 = vmatpush.bf16.msra.mxu0 %v3304
    %4848 = vmatmul.bf16.gmra.mxu0 %v952
    %v4849 = vpop.f32.mrf.mxu0
    %v4850 = vadd.f32 %v908, %v4849
    %v4851 = vpop.f32.mrf.mxu0
    %4852 = vdwg.mxu0
    %4853 = vmatpush.bf16.msra.mxu0 %v3364
    %4854 = vmatpush.bf16.msra.mxu0 %v3360
    %4855 = vmatpush.bf16.msra.mxu0 %v3356
    %4856 = vmatpush.bf16.msra.mxu0 %v3352
    %4857 = vmatpush.bf16.msra.mxu0 %v3348
    %4858 = vmatpush.bf16.msra.mxu0 %v3344
    %4859 = vmatpush.bf16.msra.mxu0 %v3340
    %4860 = vmatpush.bf16.msra.mxu0 %v3336
    %4861 = vmatmul.bf16.gmra.mxu0 %v953
    %v4862 = vpop.f32.mrf.mxu0
    %v4863 = vadd.f32 %v4850, %v4862
    %v4864 = vpop.f32.mrf.mxu0
    %4865 = vdwg.mxu0
    %4866 = vmatpush.bf16.msra.mxu0 %v3396
    %4867 = vmatpush.bf16.msra.mxu0 %v3392
    %4868 = vmatpush.bf16.msra.mxu0 %v3388
    %4869 = vmatpush.bf16.msra.mxu0 %v3384
    %4870 = vmatpush.bf16.msra.mxu0 %v3380
    %4871 = vmatpush.bf16.msra.mxu0 %v3376
    %4872 = vmatpush.bf16.msra.mxu0 %v3372
    %4873 = vmatpush.bf16.msra.mxu0 %v3368
    %4874 = vmatmul.bf16.gmra.mxu0 %v954
    %v4875 = vpop.f32.mrf.mxu0
    %v4876 = vadd.f32 %v4863, %v4875
    %v4877 = vpop.f32.mrf.mxu0
    %4878 = vdwg.mxu0
    %4879 = vmatpush.bf16.msra.mxu0 %v3428
    %4880 = vmatpush.bf16.msra.mxu0 %v3424
    %4881 = vmatpush.bf16.msra.mxu0 %v3420
    %4882 = vmatpush.bf16.msra.mxu0 %v3416
    %4883 = vmatpush.bf16.msra.mxu0 %v3412
    %4884 = vmatpush.bf16.msra.mxu0 %v3408
    %4885 = vmatpush.bf16.msra.mxu0 %v3404
    %4886 = vmatpush.bf16.msra.mxu0 %v3400
    %4887 = vmatmul.bf16.gmra.mxu0 %v955
    %v4888 = vpop.f32.mrf.mxu0
    %v4889 = vadd.f32 %v4876, %v4888
    %v4890 = vpop.f32.mrf.mxu0
    %4891 = vdwg.mxu0
    %4892 = vmatpush.bf16.msra.mxu0 %v3460
    %4893 = vmatpush.bf16.msra.mxu0 %v3456
    %4894 = vmatpush.bf16.msra.mxu0 %v3452
    %4895 = vmatpush.bf16.msra.mxu0 %v3448
    %4896 = vmatpush.bf16.msra.mxu0 %v3444
    %4897 = vmatpush.bf16.msra.mxu0 %v3440
    %4898 = vmatpush.bf16.msra.mxu0 %v3436
    %4899 = vmatpush.bf16.msra.mxu0 %v3432
    %4900 = vmatmul.bf16.gmra.mxu0 %v956
    %v4901 = vpop.f32.mrf.mxu0
    %v4902 = vadd.f32 %v4889, %v4901
    %v4903 = vpop.f32.mrf.mxu0
    %4904 = vdwg.mxu0
    %4905 = vmatpush.bf16.msra.mxu0 %v3492
    %4906 = vmatpush.bf16.msra.mxu0 %v3488
    %4907 = vmatpush.bf16.msra.mxu0 %v3484
    %4908 = vmatpush.bf16.msra.mxu0 %v3480
    %4909 = vmatpush.bf16.msra.mxu0 %v3476
    %4910 = vmatpush.bf16.msra.mxu0 %v3472
    %4911 = vmatpush.bf16.msra.mxu0 %v3468
    %4912 = vmatpush.bf16.msra.mxu0 %v3464
    %4913 = vmatmul.bf16.gmra.mxu0 %v957
    %v4914 = vpop.f32.mrf.mxu0
    %v4915 = vadd.f32 %v4902, %v4914
    %v4916 = vpop.f32.mrf.mxu0
    %4917 = vdwg.mxu0
    %4918 = vmatpush.bf16.msra.mxu0 %v3524
    %4919 = vmatpush.bf16.msra.mxu0 %v3520
    %4920 = vmatpush.bf16.msra.mxu0 %v3516
    %4921 = vmatpush.bf16.msra.mxu0 %v3512
    %4922 = vmatpush.bf16.msra.mxu0 %v3508
    %4923 = vmatpush.bf16.msra.mxu0 %v3504
    %4924 = vmatpush.bf16.msra.mxu0 %v3500
    %4925 = vmatpush.bf16.msra.mxu0 %v3496
    %4926 = vmatmul.bf16.gmra.mxu0 %v958
    %v4927 = vpop.f32.mrf.mxu0
    %v4928 = vadd.f32 %v4915, %v4927
    %v4929 = vpop.f32.mrf.mxu0
    %4930 = vdwg.mxu0
    %4931 = vmatpush.bf16.msra.mxu0 %v3556
    %4932 = vmatpush.bf16.msra.mxu0 %v3552
    %4933 = vmatpush.bf16.msra.mxu0 %v3548
    %4934 = vmatpush.bf16.msra.mxu0 %v3544
    %4935 = vmatpush.bf16.msra.mxu0 %v3540
    %4936 = vmatpush.bf16.msra.mxu0 %v3536
    %4937 = vmatpush.bf16.msra.mxu0 %v3532
    %4938 = vmatpush.bf16.msra.mxu0 %v3528
    %4939 = vmatmul.bf16.gmra.mxu0 %v959
    %v4940 = vpop.f32.mrf.mxu0
    %v4941 = vadd.f32 %v4928, %v4940
    %v4942 = vpop.f32.mrf.mxu0
    %4943 = vdwg.mxu0
    %4944 = vmatpush.bf16.msra.mxu0 %v3588
    %4945 = vmatpush.bf16.msra.mxu0 %v3584
    %4946 = vmatpush.bf16.msra.mxu0 %v3580
    %4947 = vmatpush.bf16.msra.mxu0 %v3576
    %4948 = vmatpush.bf16.msra.mxu0 %v3572
    %4949 = vmatpush.bf16.msra.mxu0 %v3568
    %4950 = vmatpush.bf16.msra.mxu0 %v3564
    %4951 = vmatpush.bf16.msra.mxu0 %v3560
    %4952 = vmatmul.bf16.gmra.mxu0 %v960
    %v4953 = vpop.f32.mrf.mxu0
    %v4954 = vadd.f32 %v4941, %v4953
    %v4955 = vpop.f32.mrf.mxu0
    %4956 = vdwg.mxu0
    %4957 = vmatpush.bf16.msra.mxu0 %v3620
    %4958 = vmatpush.bf16.msra.mxu0 %v3616
    %4959 = vmatpush.bf16.msra.mxu0 %v3612
    %4960 = vmatpush.bf16.msra.mxu0 %v3608
    %4961 = vmatpush.bf16.msra.mxu0 %v3604
    %4962 = vmatpush.bf16.msra.mxu0 %v3600
    %4963 = vmatpush.bf16.msra.mxu0 %v3596
    %4964 = vmatpush.bf16.msra.mxu0 %v3592
    %4965 = vmatmul.bf16.gmra.mxu0 %v961
    %v4966 = vpop.f32.mrf.mxu0
    %v4967 = vadd.f32 %v4954, %v4966
    %v4968 = vpop.f32.mrf.mxu0
    %4969 = vdwg.mxu0
    %4970 = vmatpush.bf16.msra.mxu0 %v3652
    %4971 = vmatpush.bf16.msra.mxu0 %v3648
    %4972 = vmatpush.bf16.msra.mxu0 %v3644
    %4973 = vmatpush.bf16.msra.mxu0 %v3640
    %4974 = vmatpush.bf16.msra.mxu0 %v3636
    %4975 = vmatpush.bf16.msra.mxu0 %v3632
    %4976 = vmatpush.bf16.msra.mxu0 %v3628
    %4977 = vmatpush.bf16.msra.mxu0 %v3624
    %4978 = vmatmul.bf16.gmra.mxu0 %v962
    %v4979 = vpop.f32.mrf.mxu0
    %v4980 = vadd.f32 %v4967, %v4979
    %v4981 = vpop.f32.mrf.mxu0
    %4982 = vdwg.mxu0
    %4983 = vmatpush.bf16.msra.mxu0 %v3684
    %4984 = vmatpush.bf16.msra.mxu0 %v3680
    %4985 = vmatpush.bf16.msra.mxu0 %v3676
    %4986 = vmatpush.bf16.msra.mxu0 %v3672
    %4987 = vmatpush.bf16.msra.mxu0 %v3668
    %4988 = vmatpush.bf16.msra.mxu0 %v3664
    %4989 = vmatpush.bf16.msra.mxu0 %v3660
    %4990 = vmatpush.bf16.msra.mxu0 %v3656
    %4991 = vmatmul.bf16.gmra.mxu0 %v963
    %v4992 = vpop.f32.mrf.mxu0
    %v4993 = vadd.f32 %v4980, %v4992
    %v4994 = vpop.f32.mrf.mxu0
    %4995 = vdwg.mxu0
    %4996 = vmatpush.bf16.msra.mxu0 %v3716
    %4997 = vmatpush.bf16.msra.mxu0 %v3712
    %4998 = vmatpush.bf16.msra.mxu0 %v3708
    %4999 = vmatpush.bf16.msra.mxu0 %v3704
    %5000 = vmatpush.bf16.msra.mxu0 %v3700
    %5001 = vmatpush.bf16.msra.mxu0 %v3696
    %5002 = vmatpush.bf16.msra.mxu0 %v3692
    %5003 = vmatpush.bf16.msra.mxu0 %v3688
    %5004 = vmatmul.bf16.gmra.mxu0 %v964
    %v5005 = vpop.f32.mrf.mxu0
    %v5006 = vadd.f32 %v4993, %v5005
    %v5007 = vpop.f32.mrf.mxu0
    %5008 = vdwg.mxu0
    %5009 = vmatpush.bf16.msra.mxu0 %v3748
    %5010 = vmatpush.bf16.msra.mxu0 %v3744
    %5011 = vmatpush.bf16.msra.mxu0 %v3740
    %5012 = vmatpush.bf16.msra.mxu0 %v3736
    %5013 = vmatpush.bf16.msra.mxu0 %v3732
    %5014 = vmatpush.bf16.msra.mxu0 %v3728
    %5015 = vmatpush.bf16.msra.mxu0 %v3724
    %5016 = vmatpush.bf16.msra.mxu0 %v3720
    %5017 = vmatmul.bf16.gmra.mxu0 %v965
    %v5018 = vpop.f32.mrf.mxu0
    %v5019 = vadd.f32 %v5006, %v5018
    %v5020 = vpop.f32.mrf.mxu0
    %5021 = vdwg.mxu0
    %5022 = vmatpush.bf16.msra.mxu0 %v3780
    %5023 = vmatpush.bf16.msra.mxu0 %v3776
    %5024 = vmatpush.bf16.msra.mxu0 %v3772
    %5025 = vmatpush.bf16.msra.mxu0 %v3768
    %5026 = vmatpush.bf16.msra.mxu0 %v3764
    %5027 = vmatpush.bf16.msra.mxu0 %v3760
    %5028 = vmatpush.bf16.msra.mxu0 %v3756
    %5029 = vmatpush.bf16.msra.mxu0 %v3752
    %5030 = vmatmul.bf16.gmra.mxu0 %v966
    %v5031 = vpop.f32.mrf.mxu0
    %v5032 = vadd.f32 %v5019, %v5031
    %v5033 = vpop.f32.mrf.mxu0
    %5034 = vdwg.mxu0
    %5035 = vmatpush.bf16.msra.mxu0 %v3812
    %5036 = vmatpush.bf16.msra.mxu0 %v3808
    %5037 = vmatpush.bf16.msra.mxu0 %v3804
    %5038 = vmatpush.bf16.msra.mxu0 %v3800
    %5039 = vmatpush.bf16.msra.mxu0 %v3796
    %5040 = vmatpush.bf16.msra.mxu0 %v3792
    %5041 = vmatpush.bf16.msra.mxu0 %v3788
    %5042 = vmatpush.bf16.msra.mxu0 %v3784
    %5043 = vmatmul.bf16.gmra.mxu0 %v967
    %v5044 = vpop.f32.mrf.mxu0
    %v5045 = vadd.f32 %v5032, %v5044
    %v5046 = vpop.f32.mrf.mxu0
    %5047 = vdwg.mxu0
    %5048 = vmatpush.bf16.msra.mxu0 %v3844
    %5049 = vmatpush.bf16.msra.mxu0 %v3840
    %5050 = vmatpush.bf16.msra.mxu0 %v3836
    %5051 = vmatpush.bf16.msra.mxu0 %v3832
    %5052 = vmatpush.bf16.msra.mxu0 %v3828
    %5053 = vmatpush.bf16.msra.mxu0 %v3824
    %5054 = vmatpush.bf16.msra.mxu0 %v3820
    %5055 = vmatpush.bf16.msra.mxu0 %v3816
    %5056 = vmatmul.bf16.gmra.mxu0 %v968
    %v5057 = vpop.f32.mrf.mxu0
    %v5058 = vadd.f32 %v5045, %v5057
    %v5059 = vpop.f32.mrf.mxu0
    %5060 = vdwg.mxu0
    %5061 = vmatpush.bf16.msra.mxu0 %v3876
    %5062 = vmatpush.bf16.msra.mxu0 %v3872
    %5063 = vmatpush.bf16.msra.mxu0 %v3868
    %5064 = vmatpush.bf16.msra.mxu0 %v3864
    %5065 = vmatpush.bf16.msra.mxu0 %v3860
    %5066 = vmatpush.bf16.msra.mxu0 %v3856
    %5067 = vmatpush.bf16.msra.mxu0 %v3852
    %5068 = vmatpush.bf16.msra.mxu0 %v3848
    %5069 = vmatmul.bf16.gmra.mxu0 %v969
    %v5070 = vpop.f32.mrf.mxu0
    %v5071 = vadd.f32 %v5058, %v5070
    %v5072 = vpop.f32.mrf.mxu0
    %5073 = vdwg.mxu0
    %5074 = vmatpush.bf16.msra.mxu0 %v3908
    %5075 = vmatpush.bf16.msra.mxu0 %v3904
    %5076 = vmatpush.bf16.msra.mxu0 %v3900
    %5077 = vmatpush.bf16.msra.mxu0 %v3896
    %5078 = vmatpush.bf16.msra.mxu0 %v3892
    %5079 = vmatpush.bf16.msra.mxu0 %v3888
    %5080 = vmatpush.bf16.msra.mxu0 %v3884
    %5081 = vmatpush.bf16.msra.mxu0 %v3880
    %5082 = vmatmul.bf16.gmra.mxu0 %v970
    %v5083 = vpop.f32.mrf.mxu0
    %v5084 = vadd.f32 %v5071, %v5083
    %v5085 = vpop.f32.mrf.mxu0
    %5086 = vdwg.mxu0
    %5087 = vmatpush.bf16.msra.mxu0 %v3940
    %5088 = vmatpush.bf16.msra.mxu0 %v3936
    %5089 = vmatpush.bf16.msra.mxu0 %v3932
    %5090 = vmatpush.bf16.msra.mxu0 %v3928
    %5091 = vmatpush.bf16.msra.mxu0 %v3924
    %5092 = vmatpush.bf16.msra.mxu0 %v3920
    %5093 = vmatpush.bf16.msra.mxu0 %v3916
    %5094 = vmatpush.bf16.msra.mxu0 %v3912
    %5095 = vmatmul.bf16.gmra.mxu0 %v971
    %v5096 = vpop.f32.mrf.mxu0
    %v5097 = vadd.f32 %v5084, %v5096
    %v5098 = vpop.f32.mrf.mxu0
    %5099 = vdwg.mxu0
    %5100 = vmatpush.bf16.msra.mxu0 %v3972
    %5101 = vmatpush.bf16.msra.mxu0 %v3968
    %5102 = vmatpush.bf16.msra.mxu0 %v3964
    %5103 = vmatpush.bf16.msra.mxu0 %v3960
    %5104 = vmatpush.bf16.msra.mxu0 %v3956
    %5105 = vmatpush.bf16.msra.mxu0 %v3952
    %5106 = vmatpush.bf16.msra.mxu0 %v3948
    %5107 = vmatpush.bf16.msra.mxu0 %v3944
    %5108 = vmatmul.bf16.gmra.mxu0 %v972
    %v5109 = vpop.f32.mrf.mxu0
    %v5110 = vadd.f32 %v5097, %v5109
    %v5111 = vpop.f32.mrf.mxu0
    %5112 = vdwg.mxu0
    %5113 = vmatpush.bf16.msra.mxu0 %v4004
    %5114 = vmatpush.bf16.msra.mxu0 %v4000
    %5115 = vmatpush.bf16.msra.mxu0 %v3996
    %5116 = vmatpush.bf16.msra.mxu0 %v3992
    %5117 = vmatpush.bf16.msra.mxu0 %v3988
    %5118 = vmatpush.bf16.msra.mxu0 %v3984
    %5119 = vmatpush.bf16.msra.mxu0 %v3980
    %5120 = vmatpush.bf16.msra.mxu0 %v3976
    %5121 = vmatmul.bf16.gmra.mxu0 %v973
    %v5122 = vpop.f32.mrf.mxu0
    %v5123 = vadd.f32 %v5110, %v5122
    %v5124 = vpop.f32.mrf.mxu0
    %5125 = vdwg.mxu0
    %5126 = vmatpush.bf16.msra.mxu0 %v4036
    %5127 = vmatpush.bf16.msra.mxu0 %v4032
    %5128 = vmatpush.bf16.msra.mxu0 %v4028
    %5129 = vmatpush.bf16.msra.mxu0 %v4024
    %5130 = vmatpush.bf16.msra.mxu0 %v4020
    %5131 = vmatpush.bf16.msra.mxu0 %v4016
    %5132 = vmatpush.bf16.msra.mxu0 %v4012
    %5133 = vmatpush.bf16.msra.mxu0 %v4008
    %5134 = vmatmul.bf16.gmra.mxu0 %v974
    %v5135 = vpop.f32.mrf.mxu0
    %v5136 = vadd.f32 %v5123, %v5135
    %v5137 = vpop.f32.mrf.mxu0
    %5138 = vdwg.mxu0
    %5139 = vmatpush.bf16.msra.mxu0 %v4068
    %5140 = vmatpush.bf16.msra.mxu0 %v4064
    %5141 = vmatpush.bf16.msra.mxu0 %v4060
    %5142 = vmatpush.bf16.msra.mxu0 %v4056
    %5143 = vmatpush.bf16.msra.mxu0 %v4052
    %5144 = vmatpush.bf16.msra.mxu0 %v4048
    %5145 = vmatpush.bf16.msra.mxu0 %v4044
    %5146 = vmatpush.bf16.msra.mxu0 %v4040
    %5147 = vmatmul.bf16.gmra.mxu0 %v975
    %v5148 = vpop.f32.mrf.mxu0
    %v5149 = vadd.f32 %v5136, %v5148
    %v5150 = vpop.f32.mrf.mxu0
    %5151 = vdwg.mxu0
    %5152 = vmatpush.bf16.msra.mxu0 %v3333
    %5153 = vmatpush.bf16.msra.mxu0 %v3329
    %5154 = vmatpush.bf16.msra.mxu0 %v3325
    %5155 = vmatpush.bf16.msra.mxu0 %v3321
    %5156 = vmatpush.bf16.msra.mxu0 %v3317
    %5157 = vmatpush.bf16.msra.mxu0 %v3313
    %5158 = vmatpush.bf16.msra.mxu0 %v3309
    %5159 = vmatpush.bf16.msra.mxu0 %v3305
    %5160 = vmatmul.bf16.gmra.mxu0 %v952
    %v5161 = vpop.f32.mrf.mxu0
    %v5162 = vadd.f32 %v909, %v5161
    %v5163 = vpop.f32.mrf.mxu0
    %5164 = vdwg.mxu0
    %5165 = vmatpush.bf16.msra.mxu0 %v3365
    %5166 = vmatpush.bf16.msra.mxu0 %v3361
    %5167 = vmatpush.bf16.msra.mxu0 %v3357
    %5168 = vmatpush.bf16.msra.mxu0 %v3353
    %5169 = vmatpush.bf16.msra.mxu0 %v3349
    %5170 = vmatpush.bf16.msra.mxu0 %v3345
    %5171 = vmatpush.bf16.msra.mxu0 %v3341
    %5172 = vmatpush.bf16.msra.mxu0 %v3337
    %5173 = vmatmul.bf16.gmra.mxu0 %v953
    %v5174 = vpop.f32.mrf.mxu0
    %v5175 = vadd.f32 %v5162, %v5174
    %v5176 = vpop.f32.mrf.mxu0
    %5177 = vdwg.mxu0
    %5178 = vmatpush.bf16.msra.mxu0 %v3397
    %5179 = vmatpush.bf16.msra.mxu0 %v3393
    %5180 = vmatpush.bf16.msra.mxu0 %v3389
    %5181 = vmatpush.bf16.msra.mxu0 %v3385
    %5182 = vmatpush.bf16.msra.mxu0 %v3381
    %5183 = vmatpush.bf16.msra.mxu0 %v3377
    %5184 = vmatpush.bf16.msra.mxu0 %v3373
    %5185 = vmatpush.bf16.msra.mxu0 %v3369
    %5186 = vmatmul.bf16.gmra.mxu0 %v954
    %v5187 = vpop.f32.mrf.mxu0
    %v5188 = vadd.f32 %v5175, %v5187
    %v5189 = vpop.f32.mrf.mxu0
    %5190 = vdwg.mxu0
    %5191 = vmatpush.bf16.msra.mxu0 %v3429
    %5192 = vmatpush.bf16.msra.mxu0 %v3425
    %5193 = vmatpush.bf16.msra.mxu0 %v3421
    %5194 = vmatpush.bf16.msra.mxu0 %v3417
    %5195 = vmatpush.bf16.msra.mxu0 %v3413
    %5196 = vmatpush.bf16.msra.mxu0 %v3409
    %5197 = vmatpush.bf16.msra.mxu0 %v3405
    %5198 = vmatpush.bf16.msra.mxu0 %v3401
    %5199 = vmatmul.bf16.gmra.mxu0 %v955
    %v5200 = vpop.f32.mrf.mxu0
    %v5201 = vadd.f32 %v5188, %v5200
    %v5202 = vpop.f32.mrf.mxu0
    %5203 = vdwg.mxu0
    %5204 = vmatpush.bf16.msra.mxu0 %v3461
    %5205 = vmatpush.bf16.msra.mxu0 %v3457
    %5206 = vmatpush.bf16.msra.mxu0 %v3453
    %5207 = vmatpush.bf16.msra.mxu0 %v3449
    %5208 = vmatpush.bf16.msra.mxu0 %v3445
    %5209 = vmatpush.bf16.msra.mxu0 %v3441
    %5210 = vmatpush.bf16.msra.mxu0 %v3437
    %5211 = vmatpush.bf16.msra.mxu0 %v3433
    %5212 = vmatmul.bf16.gmra.mxu0 %v956
    %v5213 = vpop.f32.mrf.mxu0
    %v5214 = vadd.f32 %v5201, %v5213
    %v5215 = vpop.f32.mrf.mxu0
    %5216 = vdwg.mxu0
    %5217 = vmatpush.bf16.msra.mxu0 %v3493
    %5218 = vmatpush.bf16.msra.mxu0 %v3489
    %5219 = vmatpush.bf16.msra.mxu0 %v3485
    %5220 = vmatpush.bf16.msra.mxu0 %v3481
    %5221 = vmatpush.bf16.msra.mxu0 %v3477
    %5222 = vmatpush.bf16.msra.mxu0 %v3473
    %5223 = vmatpush.bf16.msra.mxu0 %v3469
    %5224 = vmatpush.bf16.msra.mxu0 %v3465
    %5225 = vmatmul.bf16.gmra.mxu0 %v957
    %v5226 = vpop.f32.mrf.mxu0
    %v5227 = vadd.f32 %v5214, %v5226
    %v5228 = vpop.f32.mrf.mxu0
    %5229 = vdwg.mxu0
    %5230 = vmatpush.bf16.msra.mxu0 %v3525
    %5231 = vmatpush.bf16.msra.mxu0 %v3521
    %5232 = vmatpush.bf16.msra.mxu0 %v3517
    %5233 = vmatpush.bf16.msra.mxu0 %v3513
    %5234 = vmatpush.bf16.msra.mxu0 %v3509
    %5235 = vmatpush.bf16.msra.mxu0 %v3505
    %5236 = vmatpush.bf16.msra.mxu0 %v3501
    %5237 = vmatpush.bf16.msra.mxu0 %v3497
    %5238 = vmatmul.bf16.gmra.mxu0 %v958
    %v5239 = vpop.f32.mrf.mxu0
    %v5240 = vadd.f32 %v5227, %v5239
    %v5241 = vpop.f32.mrf.mxu0
    %5242 = vdwg.mxu0
    %5243 = vmatpush.bf16.msra.mxu0 %v3557
    %5244 = vmatpush.bf16.msra.mxu0 %v3553
    %5245 = vmatpush.bf16.msra.mxu0 %v3549
    %5246 = vmatpush.bf16.msra.mxu0 %v3545
    %5247 = vmatpush.bf16.msra.mxu0 %v3541
    %5248 = vmatpush.bf16.msra.mxu0 %v3537
    %5249 = vmatpush.bf16.msra.mxu0 %v3533
    %5250 = vmatpush.bf16.msra.mxu0 %v3529
    %5251 = vmatmul.bf16.gmra.mxu0 %v959
    %v5252 = vpop.f32.mrf.mxu0
    %v5253 = vadd.f32 %v5240, %v5252
    %v5254 = vpop.f32.mrf.mxu0
    %5255 = vdwg.mxu0
    %5256 = vmatpush.bf16.msra.mxu0 %v3589
    %5257 = vmatpush.bf16.msra.mxu0 %v3585
    %5258 = vmatpush.bf16.msra.mxu0 %v3581
    %5259 = vmatpush.bf16.msra.mxu0 %v3577
    %5260 = vmatpush.bf16.msra.mxu0 %v3573
    %5261 = vmatpush.bf16.msra.mxu0 %v3569
    %5262 = vmatpush.bf16.msra.mxu0 %v3565
    %5263 = vmatpush.bf16.msra.mxu0 %v3561
    %5264 = vmatmul.bf16.gmra.mxu0 %v960
    %v5265 = vpop.f32.mrf.mxu0
    %v5266 = vadd.f32 %v5253, %v5265
    %v5267 = vpop.f32.mrf.mxu0
    %5268 = vdwg.mxu0
    %5269 = vmatpush.bf16.msra.mxu0 %v3621
    %5270 = vmatpush.bf16.msra.mxu0 %v3617
    %5271 = vmatpush.bf16.msra.mxu0 %v3613
    %5272 = vmatpush.bf16.msra.mxu0 %v3609
    %5273 = vmatpush.bf16.msra.mxu0 %v3605
    %5274 = vmatpush.bf16.msra.mxu0 %v3601
    %5275 = vmatpush.bf16.msra.mxu0 %v3597
    %5276 = vmatpush.bf16.msra.mxu0 %v3593
    %5277 = vmatmul.bf16.gmra.mxu0 %v961
    %v5278 = vpop.f32.mrf.mxu0
    %v5279 = vadd.f32 %v5266, %v5278
    %v5280 = vpop.f32.mrf.mxu0
    %5281 = vdwg.mxu0
    %5282 = vmatpush.bf16.msra.mxu0 %v3653
    %5283 = vmatpush.bf16.msra.mxu0 %v3649
    %5284 = vmatpush.bf16.msra.mxu0 %v3645
    %5285 = vmatpush.bf16.msra.mxu0 %v3641
    %5286 = vmatpush.bf16.msra.mxu0 %v3637
    %5287 = vmatpush.bf16.msra.mxu0 %v3633
    %5288 = vmatpush.bf16.msra.mxu0 %v3629
    %5289 = vmatpush.bf16.msra.mxu0 %v3625
    %5290 = vmatmul.bf16.gmra.mxu0 %v962
    %v5291 = vpop.f32.mrf.mxu0
    %v5292 = vadd.f32 %v5279, %v5291
    %v5293 = vpop.f32.mrf.mxu0
    %5294 = vdwg.mxu0
    %5295 = vmatpush.bf16.msra.mxu0 %v3685
    %5296 = vmatpush.bf16.msra.mxu0 %v3681
    %5297 = vmatpush.bf16.msra.mxu0 %v3677
    %5298 = vmatpush.bf16.msra.mxu0 %v3673
    %5299 = vmatpush.bf16.msra.mxu0 %v3669
    %5300 = vmatpush.bf16.msra.mxu0 %v3665
    %5301 = vmatpush.bf16.msra.mxu0 %v3661
    %5302 = vmatpush.bf16.msra.mxu0 %v3657
    %5303 = vmatmul.bf16.gmra.mxu0 %v963
    %v5304 = vpop.f32.mrf.mxu0
    %v5305 = vadd.f32 %v5292, %v5304
    %v5306 = vpop.f32.mrf.mxu0
    %5307 = vdwg.mxu0
    %5308 = vmatpush.bf16.msra.mxu0 %v3717
    %5309 = vmatpush.bf16.msra.mxu0 %v3713
    %5310 = vmatpush.bf16.msra.mxu0 %v3709
    %5311 = vmatpush.bf16.msra.mxu0 %v3705
    %5312 = vmatpush.bf16.msra.mxu0 %v3701
    %5313 = vmatpush.bf16.msra.mxu0 %v3697
    %5314 = vmatpush.bf16.msra.mxu0 %v3693
    %5315 = vmatpush.bf16.msra.mxu0 %v3689
    %5316 = vmatmul.bf16.gmra.mxu0 %v964
    %v5317 = vpop.f32.mrf.mxu0
    %v5318 = vadd.f32 %v5305, %v5317
    %v5319 = vpop.f32.mrf.mxu0
    %5320 = vdwg.mxu0
    %5321 = vmatpush.bf16.msra.mxu0 %v3749
    %5322 = vmatpush.bf16.msra.mxu0 %v3745
    %5323 = vmatpush.bf16.msra.mxu0 %v3741
    %5324 = vmatpush.bf16.msra.mxu0 %v3737
    %5325 = vmatpush.bf16.msra.mxu0 %v3733
    %5326 = vmatpush.bf16.msra.mxu0 %v3729
    %5327 = vmatpush.bf16.msra.mxu0 %v3725
    %5328 = vmatpush.bf16.msra.mxu0 %v3721
    %5329 = vmatmul.bf16.gmra.mxu0 %v965
    %v5330 = vpop.f32.mrf.mxu0
    %v5331 = vadd.f32 %v5318, %v5330
    %v5332 = vpop.f32.mrf.mxu0
    %5333 = vdwg.mxu0
    %5334 = vmatpush.bf16.msra.mxu0 %v3781
    %5335 = vmatpush.bf16.msra.mxu0 %v3777
    %5336 = vmatpush.bf16.msra.mxu0 %v3773
    %5337 = vmatpush.bf16.msra.mxu0 %v3769
    %5338 = vmatpush.bf16.msra.mxu0 %v3765
    %5339 = vmatpush.bf16.msra.mxu0 %v3761
    %5340 = vmatpush.bf16.msra.mxu0 %v3757
    %5341 = vmatpush.bf16.msra.mxu0 %v3753
    %5342 = vmatmul.bf16.gmra.mxu0 %v966
    %v5343 = vpop.f32.mrf.mxu0
    %v5344 = vadd.f32 %v5331, %v5343
    %v5345 = vpop.f32.mrf.mxu0
    %5346 = vdwg.mxu0
    %5347 = vmatpush.bf16.msra.mxu0 %v3813
    %5348 = vmatpush.bf16.msra.mxu0 %v3809
    %5349 = vmatpush.bf16.msra.mxu0 %v3805
    %5350 = vmatpush.bf16.msra.mxu0 %v3801
    %5351 = vmatpush.bf16.msra.mxu0 %v3797
    %5352 = vmatpush.bf16.msra.mxu0 %v3793
    %5353 = vmatpush.bf16.msra.mxu0 %v3789
    %5354 = vmatpush.bf16.msra.mxu0 %v3785
    %5355 = vmatmul.bf16.gmra.mxu0 %v967
    %v5356 = vpop.f32.mrf.mxu0
    %v5357 = vadd.f32 %v5344, %v5356
    %v5358 = vpop.f32.mrf.mxu0
    %5359 = vdwg.mxu0
    %5360 = vmatpush.bf16.msra.mxu0 %v3845
    %5361 = vmatpush.bf16.msra.mxu0 %v3841
    %5362 = vmatpush.bf16.msra.mxu0 %v3837
    %5363 = vmatpush.bf16.msra.mxu0 %v3833
    %5364 = vmatpush.bf16.msra.mxu0 %v3829
    %5365 = vmatpush.bf16.msra.mxu0 %v3825
    %5366 = vmatpush.bf16.msra.mxu0 %v3821
    %5367 = vmatpush.bf16.msra.mxu0 %v3817
    %5368 = vmatmul.bf16.gmra.mxu0 %v968
    %v5369 = vpop.f32.mrf.mxu0
    %v5370 = vadd.f32 %v5357, %v5369
    %v5371 = vpop.f32.mrf.mxu0
    %5372 = vdwg.mxu0
    %5373 = vmatpush.bf16.msra.mxu0 %v3877
    %5374 = vmatpush.bf16.msra.mxu0 %v3873
    %5375 = vmatpush.bf16.msra.mxu0 %v3869
    %5376 = vmatpush.bf16.msra.mxu0 %v3865
    %5377 = vmatpush.bf16.msra.mxu0 %v3861
    %5378 = vmatpush.bf16.msra.mxu0 %v3857
    %5379 = vmatpush.bf16.msra.mxu0 %v3853
    %5380 = vmatpush.bf16.msra.mxu0 %v3849
    %5381 = vmatmul.bf16.gmra.mxu0 %v969
    %v5382 = vpop.f32.mrf.mxu0
    %v5383 = vadd.f32 %v5370, %v5382
    %v5384 = vpop.f32.mrf.mxu0
    %5385 = vdwg.mxu0
    %5386 = vmatpush.bf16.msra.mxu0 %v3909
    %5387 = vmatpush.bf16.msra.mxu0 %v3905
    %5388 = vmatpush.bf16.msra.mxu0 %v3901
    %5389 = vmatpush.bf16.msra.mxu0 %v3897
    %5390 = vmatpush.bf16.msra.mxu0 %v3893
    %5391 = vmatpush.bf16.msra.mxu0 %v3889
    %5392 = vmatpush.bf16.msra.mxu0 %v3885
    %5393 = vmatpush.bf16.msra.mxu0 %v3881
    %5394 = vmatmul.bf16.gmra.mxu0 %v970
    %v5395 = vpop.f32.mrf.mxu0
    %v5396 = vadd.f32 %v5383, %v5395
    %v5397 = vpop.f32.mrf.mxu0
    %5398 = vdwg.mxu0
    %5399 = vmatpush.bf16.msra.mxu0 %v3941
    %5400 = vmatpush.bf16.msra.mxu0 %v3937
    %5401 = vmatpush.bf16.msra.mxu0 %v3933
    %5402 = vmatpush.bf16.msra.mxu0 %v3929
    %5403 = vmatpush.bf16.msra.mxu0 %v3925
    %5404 = vmatpush.bf16.msra.mxu0 %v3921
    %5405 = vmatpush.bf16.msra.mxu0 %v3917
    %5406 = vmatpush.bf16.msra.mxu0 %v3913
    %5407 = vmatmul.bf16.gmra.mxu0 %v971
    %v5408 = vpop.f32.mrf.mxu0
    %v5409 = vadd.f32 %v5396, %v5408
    %v5410 = vpop.f32.mrf.mxu0
    %5411 = vdwg.mxu0
    %5412 = vmatpush.bf16.msra.mxu0 %v3973
    %5413 = vmatpush.bf16.msra.mxu0 %v3969
    %5414 = vmatpush.bf16.msra.mxu0 %v3965
    %5415 = vmatpush.bf16.msra.mxu0 %v3961
    %5416 = vmatpush.bf16.msra.mxu0 %v3957
    %5417 = vmatpush.bf16.msra.mxu0 %v3953
    %5418 = vmatpush.bf16.msra.mxu0 %v3949
    %5419 = vmatpush.bf16.msra.mxu0 %v3945
    %5420 = vmatmul.bf16.gmra.mxu0 %v972
    %v5421 = vpop.f32.mrf.mxu0
    %v5422 = vadd.f32 %v5409, %v5421
    %v5423 = vpop.f32.mrf.mxu0
    %5424 = vdwg.mxu0
    %5425 = vmatpush.bf16.msra.mxu0 %v4005
    %5426 = vmatpush.bf16.msra.mxu0 %v4001
    %5427 = vmatpush.bf16.msra.mxu0 %v3997
    %5428 = vmatpush.bf16.msra.mxu0 %v3993
    %5429 = vmatpush.bf16.msra.mxu0 %v3989
    %5430 = vmatpush.bf16.msra.mxu0 %v3985
    %5431 = vmatpush.bf16.msra.mxu0 %v3981
    %5432 = vmatpush.bf16.msra.mxu0 %v3977
    %5433 = vmatmul.bf16.gmra.mxu0 %v973
    %v5434 = vpop.f32.mrf.mxu0
    %v5435 = vadd.f32 %v5422, %v5434
    %v5436 = vpop.f32.mrf.mxu0
    %5437 = vdwg.mxu0
    %5438 = vmatpush.bf16.msra.mxu0 %v4037
    %5439 = vmatpush.bf16.msra.mxu0 %v4033
    %5440 = vmatpush.bf16.msra.mxu0 %v4029
    %5441 = vmatpush.bf16.msra.mxu0 %v4025
    %5442 = vmatpush.bf16.msra.mxu0 %v4021
    %5443 = vmatpush.bf16.msra.mxu0 %v4017
    %5444 = vmatpush.bf16.msra.mxu0 %v4013
    %5445 = vmatpush.bf16.msra.mxu0 %v4009
    %5446 = vmatmul.bf16.gmra.mxu0 %v974
    %v5447 = vpop.f32.mrf.mxu0
    %v5448 = vadd.f32 %v5435, %v5447
    %v5449 = vpop.f32.mrf.mxu0
    %5450 = vdwg.mxu0
    %5451 = vmatpush.bf16.msra.mxu0 %v4069
    %5452 = vmatpush.bf16.msra.mxu0 %v4065
    %5453 = vmatpush.bf16.msra.mxu0 %v4061
    %5454 = vmatpush.bf16.msra.mxu0 %v4057
    %5455 = vmatpush.bf16.msra.mxu0 %v4053
    %5456 = vmatpush.bf16.msra.mxu0 %v4049
    %5457 = vmatpush.bf16.msra.mxu0 %v4045
    %5458 = vmatpush.bf16.msra.mxu0 %v4041
    %5459 = vmatmul.bf16.gmra.mxu0 %v975
    %v5460 = vpop.f32.mrf.mxu0
    %v5461 = vadd.f32 %v5448, %v5460
    %v5462 = vpop.f32.mrf.mxu0
    %5463 = vdwg.mxu0
    %5464 = vmatpush.bf16.msra.mxu0 %v3334
    %5465 = vmatpush.bf16.msra.mxu0 %v3330
    %5466 = vmatpush.bf16.msra.mxu0 %v3326
    %5467 = vmatpush.bf16.msra.mxu0 %v3322
    %5468 = vmatpush.bf16.msra.mxu0 %v3318
    %5469 = vmatpush.bf16.msra.mxu0 %v3314
    %5470 = vmatpush.bf16.msra.mxu0 %v3310
    %5471 = vmatpush.bf16.msra.mxu0 %v3306
    %5472 = vmatmul.bf16.gmra.mxu0 %v952
    %v5473 = vpop.f32.mrf.mxu0
    %v5474 = vadd.f32 %v910, %v5473
    %v5475 = vpop.f32.mrf.mxu0
    %5476 = vdwg.mxu0
    %5477 = vmatpush.bf16.msra.mxu0 %v3366
    %5478 = vmatpush.bf16.msra.mxu0 %v3362
    %5479 = vmatpush.bf16.msra.mxu0 %v3358
    %5480 = vmatpush.bf16.msra.mxu0 %v3354
    %5481 = vmatpush.bf16.msra.mxu0 %v3350
    %5482 = vmatpush.bf16.msra.mxu0 %v3346
    %5483 = vmatpush.bf16.msra.mxu0 %v3342
    %5484 = vmatpush.bf16.msra.mxu0 %v3338
    %5485 = vmatmul.bf16.gmra.mxu0 %v953
    %v5486 = vpop.f32.mrf.mxu0
    %v5487 = vadd.f32 %v5474, %v5486
    %v5488 = vpop.f32.mrf.mxu0
    %5489 = vdwg.mxu0
    %5490 = vmatpush.bf16.msra.mxu0 %v3398
    %5491 = vmatpush.bf16.msra.mxu0 %v3394
    %5492 = vmatpush.bf16.msra.mxu0 %v3390
    %5493 = vmatpush.bf16.msra.mxu0 %v3386
    %5494 = vmatpush.bf16.msra.mxu0 %v3382
    %5495 = vmatpush.bf16.msra.mxu0 %v3378
    %5496 = vmatpush.bf16.msra.mxu0 %v3374
    %5497 = vmatpush.bf16.msra.mxu0 %v3370
    %5498 = vmatmul.bf16.gmra.mxu0 %v954
    %v5499 = vpop.f32.mrf.mxu0
    %v5500 = vadd.f32 %v5487, %v5499
    %v5501 = vpop.f32.mrf.mxu0
    %5502 = vdwg.mxu0
    %5503 = vmatpush.bf16.msra.mxu0 %v3430
    %5504 = vmatpush.bf16.msra.mxu0 %v3426
    %5505 = vmatpush.bf16.msra.mxu0 %v3422
    %5506 = vmatpush.bf16.msra.mxu0 %v3418
    %5507 = vmatpush.bf16.msra.mxu0 %v3414
    %5508 = vmatpush.bf16.msra.mxu0 %v3410
    %5509 = vmatpush.bf16.msra.mxu0 %v3406
    %5510 = vmatpush.bf16.msra.mxu0 %v3402
    %5511 = vmatmul.bf16.gmra.mxu0 %v955
    %v5512 = vpop.f32.mrf.mxu0
    %v5513 = vadd.f32 %v5500, %v5512
    %v5514 = vpop.f32.mrf.mxu0
    %5515 = vdwg.mxu0
    %5516 = vmatpush.bf16.msra.mxu0 %v3462
    %5517 = vmatpush.bf16.msra.mxu0 %v3458
    %5518 = vmatpush.bf16.msra.mxu0 %v3454
    %5519 = vmatpush.bf16.msra.mxu0 %v3450
    %5520 = vmatpush.bf16.msra.mxu0 %v3446
    %5521 = vmatpush.bf16.msra.mxu0 %v3442
    %5522 = vmatpush.bf16.msra.mxu0 %v3438
    %5523 = vmatpush.bf16.msra.mxu0 %v3434
    %5524 = vmatmul.bf16.gmra.mxu0 %v956
    %v5525 = vpop.f32.mrf.mxu0
    %v5526 = vadd.f32 %v5513, %v5525
    %v5527 = vpop.f32.mrf.mxu0
    %5528 = vdwg.mxu0
    %5529 = vmatpush.bf16.msra.mxu0 %v3494
    %5530 = vmatpush.bf16.msra.mxu0 %v3490
    %5531 = vmatpush.bf16.msra.mxu0 %v3486
    %5532 = vmatpush.bf16.msra.mxu0 %v3482
    %5533 = vmatpush.bf16.msra.mxu0 %v3478
    %5534 = vmatpush.bf16.msra.mxu0 %v3474
    %5535 = vmatpush.bf16.msra.mxu0 %v3470
    %5536 = vmatpush.bf16.msra.mxu0 %v3466
    %5537 = vmatmul.bf16.gmra.mxu0 %v957
    %v5538 = vpop.f32.mrf.mxu0
    %v5539 = vadd.f32 %v5526, %v5538
    %v5540 = vpop.f32.mrf.mxu0
    %5541 = vdwg.mxu0
    %5542 = vmatpush.bf16.msra.mxu0 %v3526
    %5543 = vmatpush.bf16.msra.mxu0 %v3522
    %5544 = vmatpush.bf16.msra.mxu0 %v3518
    %5545 = vmatpush.bf16.msra.mxu0 %v3514
    %5546 = vmatpush.bf16.msra.mxu0 %v3510
    %5547 = vmatpush.bf16.msra.mxu0 %v3506
    %5548 = vmatpush.bf16.msra.mxu0 %v3502
    %5549 = vmatpush.bf16.msra.mxu0 %v3498
    %5550 = vmatmul.bf16.gmra.mxu0 %v958
    %v5551 = vpop.f32.mrf.mxu0
    %v5552 = vadd.f32 %v5539, %v5551
    %v5553 = vpop.f32.mrf.mxu0
    %5554 = vdwg.mxu0
    %5555 = vmatpush.bf16.msra.mxu0 %v3558
    %5556 = vmatpush.bf16.msra.mxu0 %v3554
    %5557 = vmatpush.bf16.msra.mxu0 %v3550
    %5558 = vmatpush.bf16.msra.mxu0 %v3546
    %5559 = vmatpush.bf16.msra.mxu0 %v3542
    %5560 = vmatpush.bf16.msra.mxu0 %v3538
    %5561 = vmatpush.bf16.msra.mxu0 %v3534
    %5562 = vmatpush.bf16.msra.mxu0 %v3530
    %5563 = vmatmul.bf16.gmra.mxu0 %v959
    %v5564 = vpop.f32.mrf.mxu0
    %v5565 = vadd.f32 %v5552, %v5564
    %v5566 = vpop.f32.mrf.mxu0
    %5567 = vdwg.mxu0
    %5568 = vmatpush.bf16.msra.mxu0 %v3590
    %5569 = vmatpush.bf16.msra.mxu0 %v3586
    %5570 = vmatpush.bf16.msra.mxu0 %v3582
    %5571 = vmatpush.bf16.msra.mxu0 %v3578
    %5572 = vmatpush.bf16.msra.mxu0 %v3574
    %5573 = vmatpush.bf16.msra.mxu0 %v3570
    %5574 = vmatpush.bf16.msra.mxu0 %v3566
    %5575 = vmatpush.bf16.msra.mxu0 %v3562
    %5576 = vmatmul.bf16.gmra.mxu0 %v960
    %v5577 = vpop.f32.mrf.mxu0
    %v5578 = vadd.f32 %v5565, %v5577
    %v5579 = vpop.f32.mrf.mxu0
    %5580 = vdwg.mxu0
    %5581 = vmatpush.bf16.msra.mxu0 %v3622
    %5582 = vmatpush.bf16.msra.mxu0 %v3618
    %5583 = vmatpush.bf16.msra.mxu0 %v3614
    %5584 = vmatpush.bf16.msra.mxu0 %v3610
    %5585 = vmatpush.bf16.msra.mxu0 %v3606
    %5586 = vmatpush.bf16.msra.mxu0 %v3602
    %5587 = vmatpush.bf16.msra.mxu0 %v3598
    %5588 = vmatpush.bf16.msra.mxu0 %v3594
    %5589 = vmatmul.bf16.gmra.mxu0 %v961
    %v5590 = vpop.f32.mrf.mxu0
    %v5591 = vadd.f32 %v5578, %v5590
    %v5592 = vpop.f32.mrf.mxu0
    %5593 = vdwg.mxu0
    %5594 = vmatpush.bf16.msra.mxu0 %v3654
    %5595 = vmatpush.bf16.msra.mxu0 %v3650
    %5596 = vmatpush.bf16.msra.mxu0 %v3646
    %5597 = vmatpush.bf16.msra.mxu0 %v3642
    %5598 = vmatpush.bf16.msra.mxu0 %v3638
    %5599 = vmatpush.bf16.msra.mxu0 %v3634
    %5600 = vmatpush.bf16.msra.mxu0 %v3630
    %5601 = vmatpush.bf16.msra.mxu0 %v3626
    %5602 = vmatmul.bf16.gmra.mxu0 %v962
    %v5603 = vpop.f32.mrf.mxu0
    %v5604 = vadd.f32 %v5591, %v5603
    %v5605 = vpop.f32.mrf.mxu0
    %5606 = vdwg.mxu0
    %5607 = vmatpush.bf16.msra.mxu0 %v3686
    %5608 = vmatpush.bf16.msra.mxu0 %v3682
    %5609 = vmatpush.bf16.msra.mxu0 %v3678
    %5610 = vmatpush.bf16.msra.mxu0 %v3674
    %5611 = vmatpush.bf16.msra.mxu0 %v3670
    %5612 = vmatpush.bf16.msra.mxu0 %v3666
    %5613 = vmatpush.bf16.msra.mxu0 %v3662
    %5614 = vmatpush.bf16.msra.mxu0 %v3658
    %5615 = vmatmul.bf16.gmra.mxu0 %v963
    %v5616 = vpop.f32.mrf.mxu0
    %v5617 = vadd.f32 %v5604, %v5616
    %v5618 = vpop.f32.mrf.mxu0
    %5619 = vdwg.mxu0
    %5620 = vmatpush.bf16.msra.mxu0 %v3718
    %5621 = vmatpush.bf16.msra.mxu0 %v3714
    %5622 = vmatpush.bf16.msra.mxu0 %v3710
    %5623 = vmatpush.bf16.msra.mxu0 %v3706
    %5624 = vmatpush.bf16.msra.mxu0 %v3702
    %5625 = vmatpush.bf16.msra.mxu0 %v3698
    %5626 = vmatpush.bf16.msra.mxu0 %v3694
    %5627 = vmatpush.bf16.msra.mxu0 %v3690
    %5628 = vmatmul.bf16.gmra.mxu0 %v964
    %v5629 = vpop.f32.mrf.mxu0
    %v5630 = vadd.f32 %v5617, %v5629
    %v5631 = vpop.f32.mrf.mxu0
    %5632 = vdwg.mxu0
    %5633 = vmatpush.bf16.msra.mxu0 %v3750
    %5634 = vmatpush.bf16.msra.mxu0 %v3746
    %5635 = vmatpush.bf16.msra.mxu0 %v3742
    %5636 = vmatpush.bf16.msra.mxu0 %v3738
    %5637 = vmatpush.bf16.msra.mxu0 %v3734
    %5638 = vmatpush.bf16.msra.mxu0 %v3730
    %5639 = vmatpush.bf16.msra.mxu0 %v3726
    %5640 = vmatpush.bf16.msra.mxu0 %v3722
    %5641 = vmatmul.bf16.gmra.mxu0 %v965
    %v5642 = vpop.f32.mrf.mxu0
    %v5643 = vadd.f32 %v5630, %v5642
    %v5644 = vpop.f32.mrf.mxu0
    %5645 = vdwg.mxu0
    %5646 = vmatpush.bf16.msra.mxu0 %v3782
    %5647 = vmatpush.bf16.msra.mxu0 %v3778
    %5648 = vmatpush.bf16.msra.mxu0 %v3774
    %5649 = vmatpush.bf16.msra.mxu0 %v3770
    %5650 = vmatpush.bf16.msra.mxu0 %v3766
    %5651 = vmatpush.bf16.msra.mxu0 %v3762
    %5652 = vmatpush.bf16.msra.mxu0 %v3758
    %5653 = vmatpush.bf16.msra.mxu0 %v3754
    %5654 = vmatmul.bf16.gmra.mxu0 %v966
    %v5655 = vpop.f32.mrf.mxu0
    %v5656 = vadd.f32 %v5643, %v5655
    %v5657 = vpop.f32.mrf.mxu0
    %5658 = vdwg.mxu0
    %5659 = vmatpush.bf16.msra.mxu0 %v3814
    %5660 = vmatpush.bf16.msra.mxu0 %v3810
    %5661 = vmatpush.bf16.msra.mxu0 %v3806
    %5662 = vmatpush.bf16.msra.mxu0 %v3802
    %5663 = vmatpush.bf16.msra.mxu0 %v3798
    %5664 = vmatpush.bf16.msra.mxu0 %v3794
    %5665 = vmatpush.bf16.msra.mxu0 %v3790
    %5666 = vmatpush.bf16.msra.mxu0 %v3786
    %5667 = vmatmul.bf16.gmra.mxu0 %v967
    %v5668 = vpop.f32.mrf.mxu0
    %v5669 = vadd.f32 %v5656, %v5668
    %v5670 = vpop.f32.mrf.mxu0
    %5671 = vdwg.mxu0
    %5672 = vmatpush.bf16.msra.mxu0 %v3846
    %5673 = vmatpush.bf16.msra.mxu0 %v3842
    %5674 = vmatpush.bf16.msra.mxu0 %v3838
    %5675 = vmatpush.bf16.msra.mxu0 %v3834
    %5676 = vmatpush.bf16.msra.mxu0 %v3830
    %5677 = vmatpush.bf16.msra.mxu0 %v3826
    %5678 = vmatpush.bf16.msra.mxu0 %v3822
    %5679 = vmatpush.bf16.msra.mxu0 %v3818
    %5680 = vmatmul.bf16.gmra.mxu0 %v968
    %v5681 = vpop.f32.mrf.mxu0
    %v5682 = vadd.f32 %v5669, %v5681
    %v5683 = vpop.f32.mrf.mxu0
    %5684 = vdwg.mxu0
    %5685 = vmatpush.bf16.msra.mxu0 %v3878
    %5686 = vmatpush.bf16.msra.mxu0 %v3874
    %5687 = vmatpush.bf16.msra.mxu0 %v3870
    %5688 = vmatpush.bf16.msra.mxu0 %v3866
    %5689 = vmatpush.bf16.msra.mxu0 %v3862
    %5690 = vmatpush.bf16.msra.mxu0 %v3858
    %5691 = vmatpush.bf16.msra.mxu0 %v3854
    %5692 = vmatpush.bf16.msra.mxu0 %v3850
    %5693 = vmatmul.bf16.gmra.mxu0 %v969
    %v5694 = vpop.f32.mrf.mxu0
    %v5695 = vadd.f32 %v5682, %v5694
    %v5696 = vpop.f32.mrf.mxu0
    %5697 = vdwg.mxu0
    %5698 = vmatpush.bf16.msra.mxu0 %v3910
    %5699 = vmatpush.bf16.msra.mxu0 %v3906
    %5700 = vmatpush.bf16.msra.mxu0 %v3902
    %5701 = vmatpush.bf16.msra.mxu0 %v3898
    %5702 = vmatpush.bf16.msra.mxu0 %v3894
    %5703 = vmatpush.bf16.msra.mxu0 %v3890
    %5704 = vmatpush.bf16.msra.mxu0 %v3886
    %5705 = vmatpush.bf16.msra.mxu0 %v3882
    %5706 = vmatmul.bf16.gmra.mxu0 %v970
    %v5707 = vpop.f32.mrf.mxu0
    %v5708 = vadd.f32 %v5695, %v5707
    %v5709 = vpop.f32.mrf.mxu0
    %5710 = vdwg.mxu0
    %5711 = vmatpush.bf16.msra.mxu0 %v3942
    %5712 = vmatpush.bf16.msra.mxu0 %v3938
    %5713 = vmatpush.bf16.msra.mxu0 %v3934
    %5714 = vmatpush.bf16.msra.mxu0 %v3930
    %5715 = vmatpush.bf16.msra.mxu0 %v3926
    %5716 = vmatpush.bf16.msra.mxu0 %v3922
    %5717 = vmatpush.bf16.msra.mxu0 %v3918
    %5718 = vmatpush.bf16.msra.mxu0 %v3914
    %5719 = vmatmul.bf16.gmra.mxu0 %v971
    %v5720 = vpop.f32.mrf.mxu0
    %v5721 = vadd.f32 %v5708, %v5720
    %v5722 = vpop.f32.mrf.mxu0
    %5723 = vdwg.mxu0
    %5724 = vmatpush.bf16.msra.mxu0 %v3974
    %5725 = vmatpush.bf16.msra.mxu0 %v3970
    %5726 = vmatpush.bf16.msra.mxu0 %v3966
    %5727 = vmatpush.bf16.msra.mxu0 %v3962
    %5728 = vmatpush.bf16.msra.mxu0 %v3958
    %5729 = vmatpush.bf16.msra.mxu0 %v3954
    %5730 = vmatpush.bf16.msra.mxu0 %v3950
    %5731 = vmatpush.bf16.msra.mxu0 %v3946
    %5732 = vmatmul.bf16.gmra.mxu0 %v972
    %v5733 = vpop.f32.mrf.mxu0
    %v5734 = vadd.f32 %v5721, %v5733
    %v5735 = vpop.f32.mrf.mxu0
    %5736 = vdwg.mxu0
    %5737 = vmatpush.bf16.msra.mxu0 %v4006
    %5738 = vmatpush.bf16.msra.mxu0 %v4002
    %5739 = vmatpush.bf16.msra.mxu0 %v3998
    %5740 = vmatpush.bf16.msra.mxu0 %v3994
    %5741 = vmatpush.bf16.msra.mxu0 %v3990
    %5742 = vmatpush.bf16.msra.mxu0 %v3986
    %5743 = vmatpush.bf16.msra.mxu0 %v3982
    %5744 = vmatpush.bf16.msra.mxu0 %v3978
    %5745 = vmatmul.bf16.gmra.mxu0 %v973
    %v5746 = vpop.f32.mrf.mxu0
    %v5747 = vadd.f32 %v5734, %v5746
    %v5748 = vpop.f32.mrf.mxu0
    %5749 = vdwg.mxu0
    %5750 = vmatpush.bf16.msra.mxu0 %v4038
    %5751 = vmatpush.bf16.msra.mxu0 %v4034
    %5752 = vmatpush.bf16.msra.mxu0 %v4030
    %5753 = vmatpush.bf16.msra.mxu0 %v4026
    %5754 = vmatpush.bf16.msra.mxu0 %v4022
    %5755 = vmatpush.bf16.msra.mxu0 %v4018
    %5756 = vmatpush.bf16.msra.mxu0 %v4014
    %5757 = vmatpush.bf16.msra.mxu0 %v4010
    %5758 = vmatmul.bf16.gmra.mxu0 %v974
    %v5759 = vpop.f32.mrf.mxu0
    %v5760 = vadd.f32 %v5747, %v5759
    %v5761 = vpop.f32.mrf.mxu0
    %5762 = vdwg.mxu0
    %5763 = vmatpush.bf16.msra.mxu0 %v4070
    %5764 = vmatpush.bf16.msra.mxu0 %v4066
    %5765 = vmatpush.bf16.msra.mxu0 %v4062
    %5766 = vmatpush.bf16.msra.mxu0 %v4058
    %5767 = vmatpush.bf16.msra.mxu0 %v4054
    %5768 = vmatpush.bf16.msra.mxu0 %v4050
    %5769 = vmatpush.bf16.msra.mxu0 %v4046
    %5770 = vmatpush.bf16.msra.mxu0 %v4042
    %5771 = vmatmul.bf16.gmra.mxu0 %v975
    %v5772 = vpop.f32.mrf.mxu0
    %v5773 = vadd.f32 %v5760, %v5772
    %v5774 = vpop.f32.mrf.mxu0
    %5775 = vdwg.mxu0
    %5776 = vmatpush.bf16.msra.mxu0 %v3335
    %5777 = vmatpush.bf16.msra.mxu0 %v3331
    %5778 = vmatpush.bf16.msra.mxu0 %v3327
    %5779 = vmatpush.bf16.msra.mxu0 %v3323
    %5780 = vmatpush.bf16.msra.mxu0 %v3319
    %5781 = vmatpush.bf16.msra.mxu0 %v3315
    %5782 = vmatpush.bf16.msra.mxu0 %v3311
    %5783 = vmatpush.bf16.msra.mxu0 %v3307
    %5784 = vmatmul.bf16.gmra.mxu0 %v952
    %v5785 = vpop.f32.mrf.mxu0
    %v5786 = vadd.f32 %v911, %v5785
    %v5787 = vpop.f32.mrf.mxu0
    %5788 = vdwg.mxu0
    %5789 = vmatpush.bf16.msra.mxu0 %v3367
    %5790 = vmatpush.bf16.msra.mxu0 %v3363
    %5791 = vmatpush.bf16.msra.mxu0 %v3359
    %5792 = vmatpush.bf16.msra.mxu0 %v3355
    %5793 = vmatpush.bf16.msra.mxu0 %v3351
    %5794 = vmatpush.bf16.msra.mxu0 %v3347
    %5795 = vmatpush.bf16.msra.mxu0 %v3343
    %5796 = vmatpush.bf16.msra.mxu0 %v3339
    %5797 = vmatmul.bf16.gmra.mxu0 %v953
    %v5798 = vpop.f32.mrf.mxu0
    %v5799 = vadd.f32 %v5786, %v5798
    %v5800 = vpop.f32.mrf.mxu0
    %5801 = vdwg.mxu0
    %5802 = vmatpush.bf16.msra.mxu0 %v3399
    %5803 = vmatpush.bf16.msra.mxu0 %v3395
    %5804 = vmatpush.bf16.msra.mxu0 %v3391
    %5805 = vmatpush.bf16.msra.mxu0 %v3387
    %5806 = vmatpush.bf16.msra.mxu0 %v3383
    %5807 = vmatpush.bf16.msra.mxu0 %v3379
    %5808 = vmatpush.bf16.msra.mxu0 %v3375
    %5809 = vmatpush.bf16.msra.mxu0 %v3371
    %5810 = vmatmul.bf16.gmra.mxu0 %v954
    %v5811 = vpop.f32.mrf.mxu0
    %v5812 = vadd.f32 %v5799, %v5811
    %v5813 = vpop.f32.mrf.mxu0
    %5814 = vdwg.mxu0
    %5815 = vmatpush.bf16.msra.mxu0 %v3431
    %5816 = vmatpush.bf16.msra.mxu0 %v3427
    %5817 = vmatpush.bf16.msra.mxu0 %v3423
    %5818 = vmatpush.bf16.msra.mxu0 %v3419
    %5819 = vmatpush.bf16.msra.mxu0 %v3415
    %5820 = vmatpush.bf16.msra.mxu0 %v3411
    %5821 = vmatpush.bf16.msra.mxu0 %v3407
    %5822 = vmatpush.bf16.msra.mxu0 %v3403
    %5823 = vmatmul.bf16.gmra.mxu0 %v955
    %v5824 = vpop.f32.mrf.mxu0
    %v5825 = vadd.f32 %v5812, %v5824
    %v5826 = vpop.f32.mrf.mxu0
    %5827 = vdwg.mxu0
    %5828 = vmatpush.bf16.msra.mxu0 %v3463
    %5829 = vmatpush.bf16.msra.mxu0 %v3459
    %5830 = vmatpush.bf16.msra.mxu0 %v3455
    %5831 = vmatpush.bf16.msra.mxu0 %v3451
    %5832 = vmatpush.bf16.msra.mxu0 %v3447
    %5833 = vmatpush.bf16.msra.mxu0 %v3443
    %5834 = vmatpush.bf16.msra.mxu0 %v3439
    %5835 = vmatpush.bf16.msra.mxu0 %v3435
    %5836 = vmatmul.bf16.gmra.mxu0 %v956
    %v5837 = vpop.f32.mrf.mxu0
    %v5838 = vadd.f32 %v5825, %v5837
    %v5839 = vpop.f32.mrf.mxu0
    %5840 = vdwg.mxu0
    %5841 = vmatpush.bf16.msra.mxu0 %v3495
    %5842 = vmatpush.bf16.msra.mxu0 %v3491
    %5843 = vmatpush.bf16.msra.mxu0 %v3487
    %5844 = vmatpush.bf16.msra.mxu0 %v3483
    %5845 = vmatpush.bf16.msra.mxu0 %v3479
    %5846 = vmatpush.bf16.msra.mxu0 %v3475
    %5847 = vmatpush.bf16.msra.mxu0 %v3471
    %5848 = vmatpush.bf16.msra.mxu0 %v3467
    %5849 = vmatmul.bf16.gmra.mxu0 %v957
    %v5850 = vpop.f32.mrf.mxu0
    %v5851 = vadd.f32 %v5838, %v5850
    %v5852 = vpop.f32.mrf.mxu0
    %5853 = vdwg.mxu0
    %5854 = vmatpush.bf16.msra.mxu0 %v3527
    %5855 = vmatpush.bf16.msra.mxu0 %v3523
    %5856 = vmatpush.bf16.msra.mxu0 %v3519
    %5857 = vmatpush.bf16.msra.mxu0 %v3515
    %5858 = vmatpush.bf16.msra.mxu0 %v3511
    %5859 = vmatpush.bf16.msra.mxu0 %v3507
    %5860 = vmatpush.bf16.msra.mxu0 %v3503
    %5861 = vmatpush.bf16.msra.mxu0 %v3499
    %5862 = vmatmul.bf16.gmra.mxu0 %v958
    %v5863 = vpop.f32.mrf.mxu0
    %v5864 = vadd.f32 %v5851, %v5863
    %v5865 = vpop.f32.mrf.mxu0
    %5866 = vdwg.mxu0
    %5867 = vmatpush.bf16.msra.mxu0 %v3559
    %5868 = vmatpush.bf16.msra.mxu0 %v3555
    %5869 = vmatpush.bf16.msra.mxu0 %v3551
    %5870 = vmatpush.bf16.msra.mxu0 %v3547
    %5871 = vmatpush.bf16.msra.mxu0 %v3543
    %5872 = vmatpush.bf16.msra.mxu0 %v3539
    %5873 = vmatpush.bf16.msra.mxu0 %v3535
    %5874 = vmatpush.bf16.msra.mxu0 %v3531
    %5875 = vmatmul.bf16.gmra.mxu0 %v959
    %v5876 = vpop.f32.mrf.mxu0
    %v5877 = vadd.f32 %v5864, %v5876
    %v5878 = vpop.f32.mrf.mxu0
    %5879 = vdwg.mxu0
    %5880 = vmatpush.bf16.msra.mxu0 %v3591
    %5881 = vmatpush.bf16.msra.mxu0 %v3587
    %5882 = vmatpush.bf16.msra.mxu0 %v3583
    %5883 = vmatpush.bf16.msra.mxu0 %v3579
    %5884 = vmatpush.bf16.msra.mxu0 %v3575
    %5885 = vmatpush.bf16.msra.mxu0 %v3571
    %5886 = vmatpush.bf16.msra.mxu0 %v3567
    %5887 = vmatpush.bf16.msra.mxu0 %v3563
    %5888 = vmatmul.bf16.gmra.mxu0 %v960
    %v5889 = vpop.f32.mrf.mxu0
    %v5890 = vadd.f32 %v5877, %v5889
    %v5891 = vpop.f32.mrf.mxu0
    %5892 = vdwg.mxu0
    %5893 = vmatpush.bf16.msra.mxu0 %v3623
    %5894 = vmatpush.bf16.msra.mxu0 %v3619
    %5895 = vmatpush.bf16.msra.mxu0 %v3615
    %5896 = vmatpush.bf16.msra.mxu0 %v3611
    %5897 = vmatpush.bf16.msra.mxu0 %v3607
    %5898 = vmatpush.bf16.msra.mxu0 %v3603
    %5899 = vmatpush.bf16.msra.mxu0 %v3599
    %5900 = vmatpush.bf16.msra.mxu0 %v3595
    %5901 = vmatmul.bf16.gmra.mxu0 %v961
    %v5902 = vpop.f32.mrf.mxu0
    %v5903 = vadd.f32 %v5890, %v5902
    %v5904 = vpop.f32.mrf.mxu0
    %5905 = vdwg.mxu0
    %5906 = vmatpush.bf16.msra.mxu0 %v3655
    %5907 = vmatpush.bf16.msra.mxu0 %v3651
    %5908 = vmatpush.bf16.msra.mxu0 %v3647
    %5909 = vmatpush.bf16.msra.mxu0 %v3643
    %5910 = vmatpush.bf16.msra.mxu0 %v3639
    %5911 = vmatpush.bf16.msra.mxu0 %v3635
    %5912 = vmatpush.bf16.msra.mxu0 %v3631
    %5913 = vmatpush.bf16.msra.mxu0 %v3627
    %5914 = vmatmul.bf16.gmra.mxu0 %v962
    %v5915 = vpop.f32.mrf.mxu0
    %v5916 = vadd.f32 %v5903, %v5915
    %v5917 = vpop.f32.mrf.mxu0
    %5918 = vdwg.mxu0
    %5919 = vmatpush.bf16.msra.mxu0 %v3687
    %5920 = vmatpush.bf16.msra.mxu0 %v3683
    %5921 = vmatpush.bf16.msra.mxu0 %v3679
    %5922 = vmatpush.bf16.msra.mxu0 %v3675
    %5923 = vmatpush.bf16.msra.mxu0 %v3671
    %5924 = vmatpush.bf16.msra.mxu0 %v3667
    %5925 = vmatpush.bf16.msra.mxu0 %v3663
    %5926 = vmatpush.bf16.msra.mxu0 %v3659
    %5927 = vmatmul.bf16.gmra.mxu0 %v963
    %v5928 = vpop.f32.mrf.mxu0
    %v5929 = vadd.f32 %v5916, %v5928
    %v5930 = vpop.f32.mrf.mxu0
    %5931 = vdwg.mxu0
    %5932 = vmatpush.bf16.msra.mxu0 %v3719
    %5933 = vmatpush.bf16.msra.mxu0 %v3715
    %5934 = vmatpush.bf16.msra.mxu0 %v3711
    %5935 = vmatpush.bf16.msra.mxu0 %v3707
    %5936 = vmatpush.bf16.msra.mxu0 %v3703
    %5937 = vmatpush.bf16.msra.mxu0 %v3699
    %5938 = vmatpush.bf16.msra.mxu0 %v3695
    %5939 = vmatpush.bf16.msra.mxu0 %v3691
    %5940 = vmatmul.bf16.gmra.mxu0 %v964
    %v5941 = vpop.f32.mrf.mxu0
    %v5942 = vadd.f32 %v5929, %v5941
    %v5943 = vpop.f32.mrf.mxu0
    %5944 = vdwg.mxu0
    %5945 = vmatpush.bf16.msra.mxu0 %v3751
    %5946 = vmatpush.bf16.msra.mxu0 %v3747
    %5947 = vmatpush.bf16.msra.mxu0 %v3743
    %5948 = vmatpush.bf16.msra.mxu0 %v3739
    %5949 = vmatpush.bf16.msra.mxu0 %v3735
    %5950 = vmatpush.bf16.msra.mxu0 %v3731
    %5951 = vmatpush.bf16.msra.mxu0 %v3727
    %5952 = vmatpush.bf16.msra.mxu0 %v3723
    %5953 = vmatmul.bf16.gmra.mxu0 %v965
    %v5954 = vpop.f32.mrf.mxu0
    %v5955 = vadd.f32 %v5942, %v5954
    %v5956 = vpop.f32.mrf.mxu0
    %5957 = vdwg.mxu0
    %5958 = vmatpush.bf16.msra.mxu0 %v3783
    %5959 = vmatpush.bf16.msra.mxu0 %v3779
    %5960 = vmatpush.bf16.msra.mxu0 %v3775
    %5961 = vmatpush.bf16.msra.mxu0 %v3771
    %5962 = vmatpush.bf16.msra.mxu0 %v3767
    %5963 = vmatpush.bf16.msra.mxu0 %v3763
    %5964 = vmatpush.bf16.msra.mxu0 %v3759
    %5965 = vmatpush.bf16.msra.mxu0 %v3755
    %5966 = vmatmul.bf16.gmra.mxu0 %v966
    %v5967 = vpop.f32.mrf.mxu0
    %v5968 = vadd.f32 %v5955, %v5967
    %v5969 = vpop.f32.mrf.mxu0
    %5970 = vdwg.mxu0
    %5971 = vmatpush.bf16.msra.mxu0 %v3815
    %5972 = vmatpush.bf16.msra.mxu0 %v3811
    %5973 = vmatpush.bf16.msra.mxu0 %v3807
    %5974 = vmatpush.bf16.msra.mxu0 %v3803
    %5975 = vmatpush.bf16.msra.mxu0 %v3799
    %5976 = vmatpush.bf16.msra.mxu0 %v3795
    %5977 = vmatpush.bf16.msra.mxu0 %v3791
    %5978 = vmatpush.bf16.msra.mxu0 %v3787
    %5979 = vmatmul.bf16.gmra.mxu0 %v967
    %v5980 = vpop.f32.mrf.mxu0
    %v5981 = vadd.f32 %v5968, %v5980
    %v5982 = vpop.f32.mrf.mxu0
    %5983 = vdwg.mxu0
    %5984 = vmatpush.bf16.msra.mxu0 %v3847
    %5985 = vmatpush.bf16.msra.mxu0 %v3843
    %5986 = vmatpush.bf16.msra.mxu0 %v3839
    %5987 = vmatpush.bf16.msra.mxu0 %v3835
    %5988 = vmatpush.bf16.msra.mxu0 %v3831
    %5989 = vmatpush.bf16.msra.mxu0 %v3827
    %5990 = vmatpush.bf16.msra.mxu0 %v3823
    %5991 = vmatpush.bf16.msra.mxu0 %v3819
    %5992 = vmatmul.bf16.gmra.mxu0 %v968
    %v5993 = vpop.f32.mrf.mxu0
    %v5994 = vadd.f32 %v5981, %v5993
    %v5995 = vpop.f32.mrf.mxu0
    %5996 = vdwg.mxu0
    %5997 = vmatpush.bf16.msra.mxu0 %v3879
    %5998 = vmatpush.bf16.msra.mxu0 %v3875
    %5999 = vmatpush.bf16.msra.mxu0 %v3871
    %6000 = vmatpush.bf16.msra.mxu0 %v3867
    %6001 = vmatpush.bf16.msra.mxu0 %v3863
    %6002 = vmatpush.bf16.msra.mxu0 %v3859
    %6003 = vmatpush.bf16.msra.mxu0 %v3855
    %6004 = vmatpush.bf16.msra.mxu0 %v3851
    %6005 = vmatmul.bf16.gmra.mxu0 %v969
    %v6006 = vpop.f32.mrf.mxu0
    %v6007 = vadd.f32 %v5994, %v6006
    %v6008 = vpop.f32.mrf.mxu0
    %6009 = vdwg.mxu0
    %6010 = vmatpush.bf16.msra.mxu0 %v3911
    %6011 = vmatpush.bf16.msra.mxu0 %v3907
    %6012 = vmatpush.bf16.msra.mxu0 %v3903
    %6013 = vmatpush.bf16.msra.mxu0 %v3899
    %6014 = vmatpush.bf16.msra.mxu0 %v3895
    %6015 = vmatpush.bf16.msra.mxu0 %v3891
    %6016 = vmatpush.bf16.msra.mxu0 %v3887
    %6017 = vmatpush.bf16.msra.mxu0 %v3883
    %6018 = vmatmul.bf16.gmra.mxu0 %v970
    %v6019 = vpop.f32.mrf.mxu0
    %v6020 = vadd.f32 %v6007, %v6019
    %v6021 = vpop.f32.mrf.mxu0
    %6022 = vdwg.mxu0
    %6023 = vmatpush.bf16.msra.mxu0 %v3943
    %6024 = vmatpush.bf16.msra.mxu0 %v3939
    %6025 = vmatpush.bf16.msra.mxu0 %v3935
    %6026 = vmatpush.bf16.msra.mxu0 %v3931
    %6027 = vmatpush.bf16.msra.mxu0 %v3927
    %6028 = vmatpush.bf16.msra.mxu0 %v3923
    %6029 = vmatpush.bf16.msra.mxu0 %v3919
    %6030 = vmatpush.bf16.msra.mxu0 %v3915
    %6031 = vmatmul.bf16.gmra.mxu0 %v971
    %v6032 = vpop.f32.mrf.mxu0
    %v6033 = vadd.f32 %v6020, %v6032
    %v6034 = vpop.f32.mrf.mxu0
    %6035 = vdwg.mxu0
    %6036 = vmatpush.bf16.msra.mxu0 %v3975
    %6037 = vmatpush.bf16.msra.mxu0 %v3971
    %6038 = vmatpush.bf16.msra.mxu0 %v3967
    %6039 = vmatpush.bf16.msra.mxu0 %v3963
    %6040 = vmatpush.bf16.msra.mxu0 %v3959
    %6041 = vmatpush.bf16.msra.mxu0 %v3955
    %6042 = vmatpush.bf16.msra.mxu0 %v3951
    %6043 = vmatpush.bf16.msra.mxu0 %v3947
    %6044 = vmatmul.bf16.gmra.mxu0 %v972
    %v6045 = vpop.f32.mrf.mxu0
    %v6046 = vadd.f32 %v6033, %v6045
    %v6047 = vpop.f32.mrf.mxu0
    %6048 = vdwg.mxu0
    %6049 = vmatpush.bf16.msra.mxu0 %v4007
    %6050 = vmatpush.bf16.msra.mxu0 %v4003
    %6051 = vmatpush.bf16.msra.mxu0 %v3999
    %6052 = vmatpush.bf16.msra.mxu0 %v3995
    %6053 = vmatpush.bf16.msra.mxu0 %v3991
    %6054 = vmatpush.bf16.msra.mxu0 %v3987
    %6055 = vmatpush.bf16.msra.mxu0 %v3983
    %6056 = vmatpush.bf16.msra.mxu0 %v3979
    %6057 = vmatmul.bf16.gmra.mxu0 %v973
    %v6058 = vpop.f32.mrf.mxu0
    %v6059 = vadd.f32 %v6046, %v6058
    %v6060 = vpop.f32.mrf.mxu0
    %6061 = vdwg.mxu0
    %6062 = vmatpush.bf16.msra.mxu0 %v4039
    %6063 = vmatpush.bf16.msra.mxu0 %v4035
    %6064 = vmatpush.bf16.msra.mxu0 %v4031
    %6065 = vmatpush.bf16.msra.mxu0 %v4027
    %6066 = vmatpush.bf16.msra.mxu0 %v4023
    %6067 = vmatpush.bf16.msra.mxu0 %v4019
    %6068 = vmatpush.bf16.msra.mxu0 %v4015
    %6069 = vmatpush.bf16.msra.mxu0 %v4011
    %6070 = vmatmul.bf16.gmra.mxu0 %v974
    %v6071 = vpop.f32.mrf.mxu0
    %v6072 = vadd.f32 %v6059, %v6071
    %v6073 = vpop.f32.mrf.mxu0
    %6074 = vdwg.mxu0
    %6075 = vmatpush.bf16.msra.mxu0 %v4071
    %6076 = vmatpush.bf16.msra.mxu0 %v4067
    %6077 = vmatpush.bf16.msra.mxu0 %v4063
    %6078 = vmatpush.bf16.msra.mxu0 %v4059
    %6079 = vmatpush.bf16.msra.mxu0 %v4055
    %6080 = vmatpush.bf16.msra.mxu0 %v4051
    %6081 = vmatpush.bf16.msra.mxu0 %v4047
    %6082 = vmatpush.bf16.msra.mxu0 %v4043
    %6083 = vmatmul.bf16.gmra.mxu0 %v975
    %v6084 = vpop.f32.mrf.mxu0
    %v6085 = vadd.f32 %v6072, %v6084
    %v6086 = vpop.f32.mrf.mxu0
    %6087 = vdwg.mxu0
    %vm6088 = vcmp.ge.f32.partialorder %v5149, 0.0
    %vm6089 = vcmp.ge.f32.partialorder %v5461, 0.0
    %vm6090 = vcmp.ge.f32.partialorder %v5773, 0.0
    %vm6091 = vcmp.ge.f32.partialorder %v6085, 0.0
    %v6092 = vmul.f32 %v5149, 0.01
    %v6093 = vmul.f32 %v5461, 0.01
    %v6094 = vmul.f32 %v5773, 0.01
    %v6095 = vmul.f32 %v6085, 0.01
    %v6096 = vsel %vm6088, %v5149, %v6092
    %v6097 = vsel %vm6089, %v5461, %v6093
    %v6098 = vsel %vm6090, %v5773, %v6094
    %v6099 = vsel %vm6091, %v6085, %v6095
    %v6100 = vld [vmem:[#allocation8] sm:$0xff]
    %v6101 = vld [vmem:[#allocation8 + $0x8] sm:$0xff]
    %v6102 = vld [vmem:[#allocation10] sm:$0xff]
    %v6103 = vld [vmem:[#allocation10 + $0x8] sm:$0xff]
    %v6106 = vperm.slane %v6100, 0
    %v6107 = vperm.slane %v6100, 4
    %v6108 = vperm.slane %v6101, 0
    %v6109 = vperm.slane %v6101, 4
    %v6114 = vperm.slane %v6106, 0
    %v6115 = vperm.slane %v6107, 0
    %v6116 = vperm.slane %v6108, 0
    %v6117 = vperm.slane %v6109, 0
    %v6118 = vmul.f32 %v6096, %v6114
    %v6119 = vmul.f32 %v6097, %v6115
    %v6120 = vmul.f32 %v6098, %v6116
    %v6121 = vmul.f32 %v6099, %v6117
    %v6124 = vperm.slane %v6102, 0
    %v6125 = vperm.slane %v6102, 4
    %v6126 = vperm.slane %v6103, 0
    %v6127 = vperm.slane %v6103, 4
    %v6132 = vperm.slane %v6124, 0
    %v6133 = vperm.slane %v6125, 0
    %v6134 = vperm.slane %v6126, 0
    %v6135 = vperm.slane %v6127, 0
    %v6136 = vadd.f32 %v6118, %v6132
    %v6137 = vadd.f32 %v6119, %v6133
    %v6138 = vadd.f32 %v6120, %v6134
    %v6139 = vadd.f32 %v6121, %v6135
    %vm6140 = vcmp.ge.f32.partialorder %v6136, 0.0
    %vm6141 = vcmp.ge.f32.partialorder %v6137, 0.0
    %vm6142 = vcmp.ge.f32.partialorder %v6138, 0.0
    %vm6143 = vcmp.ge.f32.partialorder %v6139, 0.0
    %v6144 = vmul.f32 %v6136, 0.01
    %v6145 = vmul.f32 %v6137, 0.01
    %v6146 = vmul.f32 %v6138, 0.01
    %v6147 = vmul.f32 %v6139, 0.01
    %v6148 = vsel %vm6140, %v6136, %v6144
    %v6149 = vsel %vm6141, %v6137, %v6145
    %v6150 = vsel %vm6142, %v6138, %v6146
    %v6151 = vsel %vm6143, %v6139, %v6147
    %v6152 = vpack.c.bf16 %v6148, %v6148
    %v6153 = vpack.c.bf16 %v6149, %v6149
    %v6154 = vpack.c.bf16 %v6150, %v6150
    %v6155 = vpack.c.bf16 %v6151, %v6151
    %v6156 = vld [vmem:[#allocation11] sm:$0xf]
    %v6157 = vld [vmem:[#allocation11 + $0x4] sm:$0xf]
    %v6158 = vld [vmem:[#allocation11 + $0x8] sm:$0xf]
    %v6159 = vld [vmem:[#allocation11 + $0xc] sm:$0xf]
    %v6160 = vld [vmem:[#allocation11 + $0x10] sm:$0xf]
    %v6161 = vld [vmem:[#allocation11 + $0x14] sm:$0xf]
    %v6162 = vld [vmem:[#allocation11 + $0x18] sm:$0xf]
    %v6163 = vld [vmem:[#allocation11 + $0x1c] sm:$0xf]
    %v6164 = vld [vmem:[#allocation11 + $0x20] sm:$0xf]
    %v6165 = vld [vmem:[#allocation11 + $0x24] sm:$0xf]
    %v6166 = vld [vmem:[#allocation11 + $0x28] sm:$0xf]
    %v6167 = vld [vmem:[#allocation11 + $0x2c] sm:$0xf]
    %v6168 = vld [vmem:[#allocation11 + $0x30] sm:$0xf]
    %v6169 = vld [vmem:[#allocation11 + $0x34] sm:$0xf]
    %v6170 = vld [vmem:[#allocation11 + $0x38] sm:$0xf]
    %v6171 = vld [vmem:[#allocation11 + $0x3c] sm:$0xf]
    %v6172 = vld [vmem:[#allocation11 + $0x40] sm:$0xf]
    %v6173 = vld [vmem:[#allocation11 + $0x44] sm:$0xf]
    %v6174 = vld [vmem:[#allocation11 + $0x48] sm:$0xf]
    %v6175 = vld [vmem:[#allocation11 + $0x4c] sm:$0xf]
    %v6176 = vld [vmem:[#allocation11 + $0x50] sm:$0xf]
    %v6177 = vld [vmem:[#allocation11 + $0x54] sm:$0xf]
    %v6178 = vld [vmem:[#allocation11 + $0x58] sm:$0xf]
    %v6179 = vld [vmem:[#allocation11 + $0x5c] sm:$0xf]
    %v6180 = vld [vmem:[#allocation11 + $0x60] sm:$0xf]
    %v6181 = vld [vmem:[#allocation11 + $0x64] sm:$0xf]
    %v6182 = vld [vmem:[#allocation11 + $0x68] sm:$0xf]
    %v6183 = vld [vmem:[#allocation11 + $0x6c] sm:$0xf]
    %v6184 = vld [vmem:[#allocation11 + $0x70] sm:$0xf]
    %v6185 = vld [vmem:[#allocation11 + $0x74] sm:$0xf]
    %v6186 = vld [vmem:[#allocation11 + $0x78] sm:$0xf]
    %v6187 = vld [vmem:[#allocation11 + $0x7c] sm:$0xf]
    %v6188 = vld [vmem:[#allocation11 + $0x80] sm:$0xf]
    %v6189 = vld [vmem:[#allocation11 + $0x84] sm:$0xf]
    %v6190 = vld [vmem:[#allocation11 + $0x88] sm:$0xf]
    %v6191 = vld [vmem:[#allocation11 + $0x8c] sm:$0xf]
    %v6192 = vld [vmem:[#allocation11 + $0x90] sm:$0xf]
    %v6193 = vld [vmem:[#allocation11 + $0x94] sm:$0xf]
    %v6194 = vld [vmem:[#allocation11 + $0x98] sm:$0xf]
    %v6195 = vld [vmem:[#allocation11 + $0x9c] sm:$0xf]
    %v6196 = vld [vmem:[#allocation11 + $0xa0] sm:$0xf]
    %v6197 = vld [vmem:[#allocation11 + $0xa4] sm:$0xf]
    %v6198 = vld [vmem:[#allocation11 + $0xa8] sm:$0xf]
    %v6199 = vld [vmem:[#allocation11 + $0xac] sm:$0xf]
    %v6200 = vld [vmem:[#allocation11 + $0xb0] sm:$0xf]
    %v6201 = vld [vmem:[#allocation11 + $0xb4] sm:$0xf]
    %v6202 = vld [vmem:[#allocation11 + $0xb8] sm:$0xf]
    %v6203 = vld [vmem:[#allocation11 + $0xbc] sm:$0xf]
    %v6204 = vld [vmem:[#allocation11 + $0xc0] sm:$0xf]
    %v6205 = vld [vmem:[#allocation11 + $0xc4] sm:$0xf]
    %v6206 = vld [vmem:[#allocation11 + $0xc8] sm:$0xf]
    %v6207 = vld [vmem:[#allocation11 + $0xcc] sm:$0xf]
    %v6208 = vld [vmem:[#allocation11 + $0xd0] sm:$0xf]
    %v6209 = vld [vmem:[#allocation11 + $0xd4] sm:$0xf]
    %v6210 = vld [vmem:[#allocation11 + $0xd8] sm:$0xf]
    %v6211 = vld [vmem:[#allocation11 + $0xdc] sm:$0xf]
    %v6212 = vld [vmem:[#allocation11 + $0xe0] sm:$0xf]
    %v6213 = vld [vmem:[#allocation11 + $0xe4] sm:$0xf]
    %v6214 = vld [vmem:[#allocation11 + $0xe8] sm:$0xf]
    %v6215 = vld [vmem:[#allocation11 + $0xec] sm:$0xf]
    %v6216 = vld [vmem:[#allocation11 + $0xf0] sm:$0xf]
    %v6217 = vld [vmem:[#allocation11 + $0xf4] sm:$0xf]
    %v6218 = vld [vmem:[#allocation11 + $0xf8] sm:$0xf]
    %v6219 = vld [vmem:[#allocation11 + $0xfc] sm:$0xf]
    %v6220 = vperm.slane %v6100, 1
    %v6221 = vperm.slane %v6100, 5
    %v6222 = vperm.slane %v6101, 1
    %v6223 = vperm.slane %v6101, 5
    %v6228 = vperm.slane %v6220, 1
    %v6229 = vperm.slane %v6221, 1
    %v6230 = vperm.slane %v6222, 1
    %v6231 = vperm.slane %v6223, 1
    %v6232 = vmul.f32 %v6096, %v6228
    %v6233 = vmul.f32 %v6097, %v6229
    %v6234 = vmul.f32 %v6098, %v6230
    %v6235 = vmul.f32 %v6099, %v6231
    %v6236 = vperm.slane %v6102, 1
    %v6237 = vperm.slane %v6102, 5
    %v6238 = vperm.slane %v6103, 1
    %v6239 = vperm.slane %v6103, 5
    %v6244 = vperm.slane %v6236, 1
    %v6245 = vperm.slane %v6237, 1
    %v6246 = vperm.slane %v6238, 1
    %v6247 = vperm.slane %v6239, 1
    %v6248 = vadd.f32 %v6232, %v6244
    %v6249 = vadd.f32 %v6233, %v6245
    %v6250 = vadd.f32 %v6234, %v6246
    %v6251 = vadd.f32 %v6235, %v6247
    %vm6252 = vcmp.ge.f32.partialorder %v6248, 0.0
    %vm6253 = vcmp.ge.f32.partialorder %v6249, 0.0
    %vm6254 = vcmp.ge.f32.partialorder %v6250, 0.0
    %vm6255 = vcmp.ge.f32.partialorder %v6251, 0.0
    %v6256 = vmul.f32 %v6248, 0.01
    %v6257 = vmul.f32 %v6249, 0.01
    %v6258 = vmul.f32 %v6250, 0.01
    %v6259 = vmul.f32 %v6251, 0.01
    %v6260 = vsel %vm6252, %v6248, %v6256
    %v6261 = vsel %vm6253, %v6249, %v6257
    %v6262 = vsel %vm6254, %v6250, %v6258
    %v6263 = vsel %vm6255, %v6251, %v6259
    %v6264 = vpack.c.bf16 %v6260, %v6260
    %v6265 = vpack.c.bf16 %v6261, %v6261
    %v6266 = vpack.c.bf16 %v6262, %v6262
    %v6267 = vpack.c.bf16 %v6263, %v6263
    %s6268 = scalar_lea.vmem [#allocation11], 256
    %v6269 = vld [vmem:[%s6268] sm:$0xf]
    %v6270 = vld [vmem:[%s6268 + $0x4] sm:$0xf]
    %v6271 = vld [vmem:[%s6268 + $0x8] sm:$0xf]
    %v6272 = vld [vmem:[%s6268 + $0xc] sm:$0xf]
    %v6273 = vld [vmem:[%s6268 + $0x10] sm:$0xf]
    %v6274 = vld [vmem:[%s6268 + $0x14] sm:$0xf]
    %v6275 = vld [vmem:[%s6268 + $0x18] sm:$0xf]
    %v6276 = vld [vmem:[%s6268 + $0x1c] sm:$0xf]
    %v6277 = vld [vmem:[%s6268 + $0x20] sm:$0xf]
    %v6278 = vld [vmem:[%s6268 + $0x24] sm:$0xf]
    %v6279 = vld [vmem:[%s6268 + $0x28] sm:$0xf]
    %v6280 = vld [vmem:[%s6268 + $0x2c] sm:$0xf]
    %v6281 = vld [vmem:[%s6268 + $0x30] sm:$0xf]
    %v6282 = vld [vmem:[%s6268 + $0x34] sm:$0xf]
    %v6283 = vld [vmem:[%s6268 + $0x38] sm:$0xf]
    %v6284 = vld [vmem:[%s6268 + $0x3c] sm:$0xf]
    %v6285 = vld [vmem:[%s6268 + $0x40] sm:$0xf]
    %v6286 = vld [vmem:[%s6268 + $0x44] sm:$0xf]
    %v6287 = vld [vmem:[%s6268 + $0x48] sm:$0xf]
    %v6288 = vld [vmem:[%s6268 + $0x4c] sm:$0xf]
    %v6289 = vld [vmem:[%s6268 + $0x50] sm:$0xf]
    %v6290 = vld [vmem:[%s6268 + $0x54] sm:$0xf]
    %v6291 = vld [vmem:[%s6268 + $0x58] sm:$0xf]
    %v6292 = vld [vmem:[%s6268 + $0x5c] sm:$0xf]
    %v6293 = vld [vmem:[%s6268 + $0x60] sm:$0xf]
    %v6294 = vld [vmem:[%s6268 + $0x64] sm:$0xf]
    %v6295 = vld [vmem:[%s6268 + $0x68] sm:$0xf]
    %v6296 = vld [vmem:[%s6268 + $0x6c] sm:$0xf]
    %v6297 = vld [vmem:[%s6268 + $0x70] sm:$0xf]
    %v6298 = vld [vmem:[%s6268 + $0x74] sm:$0xf]
    %v6299 = vld [vmem:[%s6268 + $0x78] sm:$0xf]
    %v6300 = vld [vmem:[%s6268 + $0x7c] sm:$0xf]
    %v6301 = vld [vmem:[%s6268 + $0x80] sm:$0xf]
    %v6302 = vld [vmem:[%s6268 + $0x84] sm:$0xf]
    %v6303 = vld [vmem:[%s6268 + $0x88] sm:$0xf]
    %v6304 = vld [vmem:[%s6268 + $0x8c] sm:$0xf]
    %v6305 = vld [vmem:[%s6268 + $0x90] sm:$0xf]
    %v6306 = vld [vmem:[%s6268 + $0x94] sm:$0xf]
    %v6307 = vld [vmem:[%s6268 + $0x98] sm:$0xf]
    %v6308 = vld [vmem:[%s6268 + $0x9c] sm:$0xf]
    %v6309 = vld [vmem:[%s6268 + $0xa0] sm:$0xf]
    %v6310 = vld [vmem:[%s6268 + $0xa4] sm:$0xf]
    %v6311 = vld [vmem:[%s6268 + $0xa8] sm:$0xf]
    %v6312 = vld [vmem:[%s6268 + $0xac] sm:$0xf]
    %v6313 = vld [vmem:[%s6268 + $0xb0] sm:$0xf]
    %v6314 = vld [vmem:[%s6268 + $0xb4] sm:$0xf]
    %v6315 = vld [vmem:[%s6268 + $0xb8] sm:$0xf]
    %v6316 = vld [vmem:[%s6268 + $0xbc] sm:$0xf]
    %v6317 = vld [vmem:[%s6268 + $0xc0] sm:$0xf]
    %v6318 = vld [vmem:[%s6268 + $0xc4] sm:$0xf]
    %v6319 = vld [vmem:[%s6268 + $0xc8] sm:$0xf]
    %v6320 = vld [vmem:[%s6268 + $0xcc] sm:$0xf]
    %v6321 = vld [vmem:[%s6268 + $0xd0] sm:$0xf]
    %v6322 = vld [vmem:[%s6268 + $0xd4] sm:$0xf]
    %v6323 = vld [vmem:[%s6268 + $0xd8] sm:$0xf]
    %v6324 = vld [vmem:[%s6268 + $0xdc] sm:$0xf]
    %v6325 = vld [vmem:[%s6268 + $0xe0] sm:$0xf]
    %v6326 = vld [vmem:[%s6268 + $0xe4] sm:$0xf]
    %v6327 = vld [vmem:[%s6268 + $0xe8] sm:$0xf]
    %v6328 = vld [vmem:[%s6268 + $0xec] sm:$0xf]
    %v6329 = vld [vmem:[%s6268 + $0xf0] sm:$0xf]
    %v6330 = vld [vmem:[%s6268 + $0xf4] sm:$0xf]
    %v6331 = vld [vmem:[%s6268 + $0xf8] sm:$0xf]
    %v6332 = vld [vmem:[%s6268 + $0xfc] sm:$0xf]
    %v6397 = vunpack.c.l.b16 %v6269
    %v6398 = vunpack.c.l.b16 %v6270
    %v6399 = vunpack.c.l.b16 %v6271
    %v6400 = vunpack.c.l.b16 %v6272
    %v6401 = vunpack.c.l.b16 %v6273
    %v6402 = vunpack.c.l.b16 %v6274
    %v6403 = vunpack.c.l.b16 %v6275
    %v6404 = vunpack.c.l.b16 %v6276
    %v6405 = vunpack.c.l.b16 %v6277
    %v6406 = vunpack.c.l.b16 %v6278
    %v6407 = vunpack.c.l.b16 %v6279
    %v6408 = vunpack.c.l.b16 %v6280
    %v6409 = vunpack.c.l.b16 %v6281
    %v6410 = vunpack.c.l.b16 %v6282
    %v6411 = vunpack.c.l.b16 %v6283
    %v6412 = vunpack.c.l.b16 %v6284
    %v6413 = vunpack.c.l.b16 %v6285
    %v6414 = vunpack.c.l.b16 %v6286
    %v6415 = vunpack.c.l.b16 %v6287
    %v6416 = vunpack.c.l.b16 %v6288
    %v6417 = vunpack.c.l.b16 %v6289
    %v6418 = vunpack.c.l.b16 %v6290
    %v6419 = vunpack.c.l.b16 %v6291
    %v6420 = vunpack.c.l.b16 %v6292
    %v6421 = vunpack.c.l.b16 %v6293
    %v6422 = vunpack.c.l.b16 %v6294
    %v6423 = vunpack.c.l.b16 %v6295
    %v6424 = vunpack.c.l.b16 %v6296
    %v6425 = vunpack.c.l.b16 %v6297
    %v6426 = vunpack.c.l.b16 %v6298
    %v6427 = vunpack.c.l.b16 %v6299
    %v6428 = vunpack.c.l.b16 %v6300
    %v6429 = vunpack.c.l.b16 %v6301
    %v6430 = vunpack.c.l.b16 %v6302
    %v6431 = vunpack.c.l.b16 %v6303
    %v6432 = vunpack.c.l.b16 %v6304
    %v6433 = vunpack.c.l.b16 %v6305
    %v6434 = vunpack.c.l.b16 %v6306
    %v6435 = vunpack.c.l.b16 %v6307
    %v6436 = vunpack.c.l.b16 %v6308
    %v6437 = vunpack.c.l.b16 %v6309
    %v6438 = vunpack.c.l.b16 %v6310
    %v6439 = vunpack.c.l.b16 %v6311
    %v6440 = vunpack.c.l.b16 %v6312
    %v6441 = vunpack.c.l.b16 %v6313
    %v6442 = vunpack.c.l.b16 %v6314
    %v6443 = vunpack.c.l.b16 %v6315
    %v6444 = vunpack.c.l.b16 %v6316
    %v6445 = vunpack.c.l.b16 %v6317
    %v6446 = vunpack.c.l.b16 %v6318
    %v6447 = vunpack.c.l.b16 %v6319
    %v6448 = vunpack.c.l.b16 %v6320
    %v6449 = vunpack.c.l.b16 %v6321
    %v6450 = vunpack.c.l.b16 %v6322
    %v6451 = vunpack.c.l.b16 %v6323
    %v6452 = vunpack.c.l.b16 %v6324
    %v6453 = vunpack.c.l.b16 %v6325
    %v6454 = vunpack.c.l.b16 %v6326
    %v6455 = vunpack.c.l.b16 %v6327
    %v6456 = vunpack.c.l.b16 %v6328
    %v6457 = vunpack.c.l.b16 %v6329
    %v6458 = vunpack.c.l.b16 %v6330
    %v6459 = vunpack.c.l.b16 %v6331
    %v6460 = vunpack.c.l.b16 %v6332
    %v6461 = vpack.c.b16 %v6398, %v6397
    %v6462 = vpack.c.b16 %v6400, %v6399
    %v6463 = vpack.c.b16 %v6402, %v6401
    %v6464 = vpack.c.b16 %v6404, %v6403
    %v6465 = vpack.c.b16 %v6406, %v6405
    %v6466 = vpack.c.b16 %v6408, %v6407
    %v6467 = vpack.c.b16 %v6410, %v6409
    %v6468 = vpack.c.b16 %v6412, %v6411
    %v6469 = vpack.c.b16 %v6414, %v6413
    %v6470 = vpack.c.b16 %v6416, %v6415
    %v6471 = vpack.c.b16 %v6418, %v6417
    %v6472 = vpack.c.b16 %v6420, %v6419
    %v6473 = vpack.c.b16 %v6422, %v6421
    %v6474 = vpack.c.b16 %v6424, %v6423
    %v6475 = vpack.c.b16 %v6426, %v6425
    %v6476 = vpack.c.b16 %v6428, %v6427
    %v6477 = vpack.c.b16 %v6430, %v6429
    %v6478 = vpack.c.b16 %v6432, %v6431
    %v6479 = vpack.c.b16 %v6434, %v6433
    %v6480 = vpack.c.b16 %v6436, %v6435
    %v6481 = vpack.c.b16 %v6438, %v6437
    %v6482 = vpack.c.b16 %v6440, %v6439
    %v6483 = vpack.c.b16 %v6442, %v6441
    %v6484 = vpack.c.b16 %v6444, %v6443
    %v6485 = vpack.c.b16 %v6446, %v6445
    %v6486 = vpack.c.b16 %v6448, %v6447
    %v6487 = vpack.c.b16 %v6450, %v6449
    %v6488 = vpack.c.b16 %v6452, %v6451
    %v6489 = vpack.c.b16 %v6454, %v6453
    %v6490 = vpack.c.b16 %v6456, %v6455
    %v6491 = vpack.c.b16 %v6458, %v6457
    %v6492 = vpack.c.b16 %v6460, %v6459
    %6525 = vmatpush.bf16.msra.mxu0 %v6468
    %6526 = vmatpush.bf16.msra.mxu0 %v6467
    %6527 = vmatpush.bf16.msra.mxu0 %v6466
    %6528 = vmatpush.bf16.msra.mxu0 %v6465
    %6529 = vmatpush.bf16.msra.mxu0 %v6464
    %6530 = vmatpush.bf16.msra.mxu0 %v6463
    %6531 = vmatpush.bf16.msra.mxu0 %v6462
    %6532 = vmatpush.bf16.msra.mxu0 %v6461
    %6533 = vmatmul.bf16.gmra.mxu0 %v6264
    %v6534 = vpop.f32.mrf.mxu0
    %v6535 = vadd.f32 0.0, %v6534
    %v6536 = vpop.f32.mrf.mxu0
    %6537 = vdwg.mxu0
    %6538 = vmatpush.bf16.msra.mxu0 %v6476
    %6539 = vmatpush.bf16.msra.mxu0 %v6475
    %6540 = vmatpush.bf16.msra.mxu0 %v6474
    %6541 = vmatpush.bf16.msra.mxu0 %v6473
    %6542 = vmatpush.bf16.msra.mxu0 %v6472
    %6543 = vmatpush.bf16.msra.mxu0 %v6471
    %6544 = vmatpush.bf16.msra.mxu0 %v6470
    %6545 = vmatpush.bf16.msra.mxu0 %v6469
    %6546 = vmatmul.bf16.gmra.mxu0 %v6265
    %v6547 = vpop.f32.mrf.mxu0
    %v6548 = vadd.f32 %v6535, %v6547
    %v6549 = vpop.f32.mrf.mxu0
    %6550 = vdwg.mxu0
    %6551 = vmatpush.bf16.msra.mxu0 %v6484
    %6552 = vmatpush.bf16.msra.mxu0 %v6483
    %6553 = vmatpush.bf16.msra.mxu0 %v6482
    %6554 = vmatpush.bf16.msra.mxu0 %v6481
    %6555 = vmatpush.bf16.msra.mxu0 %v6480
    %6556 = vmatpush.bf16.msra.mxu0 %v6479
    %6557 = vmatpush.bf16.msra.mxu0 %v6478
    %6558 = vmatpush.bf16.msra.mxu0 %v6477
    %6559 = vmatmul.bf16.gmra.mxu0 %v6266
    %v6560 = vpop.f32.mrf.mxu0
    %v6561 = vadd.f32 %v6548, %v6560
    %v6562 = vpop.f32.mrf.mxu0
    %6563 = vdwg.mxu0
    %6564 = vmatpush.bf16.msra.mxu0 %v6492
    %6565 = vmatpush.bf16.msra.mxu0 %v6491
    %6566 = vmatpush.bf16.msra.mxu0 %v6490
    %6567 = vmatpush.bf16.msra.mxu0 %v6489
    %6568 = vmatpush.bf16.msra.mxu0 %v6488
    %6569 = vmatpush.bf16.msra.mxu0 %v6487
    %6570 = vmatpush.bf16.msra.mxu0 %v6486
    %6571 = vmatpush.bf16.msra.mxu0 %v6485
    %6572 = vmatmul.bf16.gmra.mxu0 %v6267
    %v6573 = vpop.f32.mrf.mxu0
    %v6574 = vadd.f32 %v6561, %v6573
    %v6575 = vpop.f32.mrf.mxu0
    %6576 = vdwg.mxu0
    %v6641 = vunpack.c.l.b16 %v6156
    %v6642 = vunpack.c.l.b16 %v6157
    %v6643 = vunpack.c.l.b16 %v6158
    %v6644 = vunpack.c.l.b16 %v6159
    %v6645 = vunpack.c.l.b16 %v6160
    %v6646 = vunpack.c.l.b16 %v6161
    %v6647 = vunpack.c.l.b16 %v6162
    %v6648 = vunpack.c.l.b16 %v6163
    %v6649 = vunpack.c.l.b16 %v6164
    %v6650 = vunpack.c.l.b16 %v6165
    %v6651 = vunpack.c.l.b16 %v6166
    %v6652 = vunpack.c.l.b16 %v6167
    %v6653 = vunpack.c.l.b16 %v6168
    %v6654 = vunpack.c.l.b16 %v6169
    %v6655 = vunpack.c.l.b16 %v6170
    %v6656 = vunpack.c.l.b16 %v6171
    %v6657 = vunpack.c.l.b16 %v6172
    %v6658 = vunpack.c.l.b16 %v6173
    %v6659 = vunpack.c.l.b16 %v6174
    %v6660 = vunpack.c.l.b16 %v6175
    %v6661 = vunpack.c.l.b16 %v6176
    %v6662 = vunpack.c.l.b16 %v6177
    %v6663 = vunpack.c.l.b16 %v6178
    %v6664 = vunpack.c.l.b16 %v6179
    %v6665 = vunpack.c.l.b16 %v6180
    %v6666 = vunpack.c.l.b16 %v6181
    %v6667 = vunpack.c.l.b16 %v6182
    %v6668 = vunpack.c.l.b16 %v6183
    %v6669 = vunpack.c.l.b16 %v6184
    %v6670 = vunpack.c.l.b16 %v6185
    %v6671 = vunpack.c.l.b16 %v6186
    %v6672 = vunpack.c.l.b16 %v6187
    %v6673 = vunpack.c.l.b16 %v6188
    %v6674 = vunpack.c.l.b16 %v6189
    %v6675 = vunpack.c.l.b16 %v6190
    %v6676 = vunpack.c.l.b16 %v6191
    %v6677 = vunpack.c.l.b16 %v6192
    %v6678 = vunpack.c.l.b16 %v6193
    %v6679 = vunpack.c.l.b16 %v6194
    %v6680 = vunpack.c.l.b16 %v6195
    %v6681 = vunpack.c.l.b16 %v6196
    %v6682 = vunpack.c.l.b16 %v6197
    %v6683 = vunpack.c.l.b16 %v6198
    %v6684 = vunpack.c.l.b16 %v6199
    %v6685 = vunpack.c.l.b16 %v6200
    %v6686 = vunpack.c.l.b16 %v6201
    %v6687 = vunpack.c.l.b16 %v6202
    %v6688 = vunpack.c.l.b16 %v6203
    %v6689 = vunpack.c.l.b16 %v6204
    %v6690 = vunpack.c.l.b16 %v6205
    %v6691 = vunpack.c.l.b16 %v6206
    %v6692 = vunpack.c.l.b16 %v6207
    %v6693 = vunpack.c.l.b16 %v6208
    %v6694 = vunpack.c.l.b16 %v6209
    %v6695 = vunpack.c.l.b16 %v6210
    %v6696 = vunpack.c.l.b16 %v6211
    %v6697 = vunpack.c.l.b16 %v6212
    %v6698 = vunpack.c.l.b16 %v6213
    %v6699 = vunpack.c.l.b16 %v6214
    %v6700 = vunpack.c.l.b16 %v6215
    %v6701 = vunpack.c.l.b16 %v6216
    %v6702 = vunpack.c.l.b16 %v6217
    %v6703 = vunpack.c.l.b16 %v6218
    %v6704 = vunpack.c.l.b16 %v6219
    %v6705 = vpack.c.b16 %v6642, %v6641
    %v6706 = vpack.c.b16 %v6644, %v6643
    %v6707 = vpack.c.b16 %v6646, %v6645
    %v6708 = vpack.c.b16 %v6648, %v6647
    %v6709 = vpack.c.b16 %v6650, %v6649
    %v6710 = vpack.c.b16 %v6652, %v6651
    %v6711 = vpack.c.b16 %v6654, %v6653
    %v6712 = vpack.c.b16 %v6656, %v6655
    %v6713 = vpack.c.b16 %v6658, %v6657
    %v6714 = vpack.c.b16 %v6660, %v6659
    %v6715 = vpack.c.b16 %v6662, %v6661
    %v6716 = vpack.c.b16 %v6664, %v6663
    %v6717 = vpack.c.b16 %v6666, %v6665
    %v6718 = vpack.c.b16 %v6668, %v6667
    %v6719 = vpack.c.b16 %v6670, %v6669
    %v6720 = vpack.c.b16 %v6672, %v6671
    %v6721 = vpack.c.b16 %v6674, %v6673
    %v6722 = vpack.c.b16 %v6676, %v6675
    %v6723 = vpack.c.b16 %v6678, %v6677
    %v6724 = vpack.c.b16 %v6680, %v6679
    %v6725 = vpack.c.b16 %v6682, %v6681
    %v6726 = vpack.c.b16 %v6684, %v6683
    %v6727 = vpack.c.b16 %v6686, %v6685
    %v6728 = vpack.c.b16 %v6688, %v6687
    %v6729 = vpack.c.b16 %v6690, %v6689
    %v6730 = vpack.c.b16 %v6692, %v6691
    %v6731 = vpack.c.b16 %v6694, %v6693
    %v6732 = vpack.c.b16 %v6696, %v6695
    %v6733 = vpack.c.b16 %v6698, %v6697
    %v6734 = vpack.c.b16 %v6700, %v6699
    %v6735 = vpack.c.b16 %v6702, %v6701
    %v6736 = vpack.c.b16 %v6704, %v6703
    %6769 = vmatpush.bf16.msra.mxu0 %v6712
    %6770 = vmatpush.bf16.msra.mxu0 %v6711
    %6771 = vmatpush.bf16.msra.mxu0 %v6710
    %6772 = vmatpush.bf16.msra.mxu0 %v6709
    %6773 = vmatpush.bf16.msra.mxu0 %v6708
    %6774 = vmatpush.bf16.msra.mxu0 %v6707
    %6775 = vmatpush.bf16.msra.mxu0 %v6706
    %6776 = vmatpush.bf16.msra.mxu0 %v6705
    %6777 = vmatmul.bf16.gmra.mxu0 %v6152
    %v6778 = vpop.f32.mrf.mxu0
    %v6779 = vadd.f32 %v6574, %v6778
    %v6780 = vpop.f32.mrf.mxu0
    %6781 = vdwg.mxu0
    %6782 = vmatpush.bf16.msra.mxu0 %v6720
    %6783 = vmatpush.bf16.msra.mxu0 %v6719
    %6784 = vmatpush.bf16.msra.mxu0 %v6718
    %6785 = vmatpush.bf16.msra.mxu0 %v6717
    %6786 = vmatpush.bf16.msra.mxu0 %v6716
    %6787 = vmatpush.bf16.msra.mxu0 %v6715
    %6788 = vmatpush.bf16.msra.mxu0 %v6714
    %6789 = vmatpush.bf16.msra.mxu0 %v6713
    %6790 = vmatmul.bf16.gmra.mxu0 %v6153
    %v6791 = vpop.f32.mrf.mxu0
    %v6792 = vadd.f32 %v6779, %v6791
    %v6793 = vpop.f32.mrf.mxu0
    %6794 = vdwg.mxu0
    %6795 = vmatpush.bf16.msra.mxu0 %v6728
    %6796 = vmatpush.bf16.msra.mxu0 %v6727
    %6797 = vmatpush.bf16.msra.mxu0 %v6726
    %6798 = vmatpush.bf16.msra.mxu0 %v6725
    %6799 = vmatpush.bf16.msra.mxu0 %v6724
    %6800 = vmatpush.bf16.msra.mxu0 %v6723
    %6801 = vmatpush.bf16.msra.mxu0 %v6722
    %6802 = vmatpush.bf16.msra.mxu0 %v6721
    %6803 = vmatmul.bf16.gmra.mxu0 %v6154
    %v6804 = vpop.f32.mrf.mxu0
    %v6805 = vadd.f32 %v6792, %v6804
    %v6806 = vpop.f32.mrf.mxu0
    %6807 = vdwg.mxu0
    %6808 = vmatpush.bf16.msra.mxu0 %v6736
    %6809 = vmatpush.bf16.msra.mxu0 %v6735
    %6810 = vmatpush.bf16.msra.mxu0 %v6734
    %6811 = vmatpush.bf16.msra.mxu0 %v6733
    %6812 = vmatpush.bf16.msra.mxu0 %v6732
    %6813 = vmatpush.bf16.msra.mxu0 %v6731
    %6814 = vmatpush.bf16.msra.mxu0 %v6730
    %6815 = vmatpush.bf16.msra.mxu0 %v6729
    %6816 = vmatmul.bf16.gmra.mxu0 %v6155
    %v6817 = vpop.f32.mrf.mxu0
    %v6818 = vadd.f32 %v6805, %v6817
    %v6819 = vpop.f32.mrf.mxu0
    %6820 = vdwg.mxu0
    %v6821 = vperm.slane %v6100, 2
    %v6822 = vperm.slane %v6100, 6
    %v6823 = vperm.slane %v6101, 2
    %v6824 = vperm.slane %v6101, 6
    %v6829 = vperm.slane %v6821, 2
    %v6830 = vperm.slane %v6822, 2
    %v6831 = vperm.slane %v6823, 2
    %v6832 = vperm.slane %v6824, 2
    %v6833 = vmul.f32 %v6096, %v6829
    %v6834 = vmul.f32 %v6097, %v6830
    %v6835 = vmul.f32 %v6098, %v6831
    %v6836 = vmul.f32 %v6099, %v6832
    %v6837 = vperm.slane %v6102, 2
    %v6838 = vperm.slane %v6102, 6
    %v6839 = vperm.slane %v6103, 2
    %v6840 = vperm.slane %v6103, 6
    %v6845 = vperm.slane %v6837, 2
    %v6846 = vperm.slane %v6838, 2
    %v6847 = vperm.slane %v6839, 2
    %v6848 = vperm.slane %v6840, 2
    %v6849 = vadd.f32 %v6833, %v6845
    %v6850 = vadd.f32 %v6834, %v6846
    %v6851 = vadd.f32 %v6835, %v6847
    %v6852 = vadd.f32 %v6836, %v6848
    %vm6853 = vcmp.ge.f32.partialorder %v6849, 0.0
    %vm6854 = vcmp.ge.f32.partialorder %v6850, 0.0
    %vm6855 = vcmp.ge.f32.partialorder %v6851, 0.0
    %vm6856 = vcmp.ge.f32.partialorder %v6852, 0.0
    %v6857 = vmul.f32 %v6849, 0.01
    %v6858 = vmul.f32 %v6850, 0.01
    %v6859 = vmul.f32 %v6851, 0.01
    %v6860 = vmul.f32 %v6852, 0.01
    %v6861 = vsel %vm6853, %v6849, %v6857
    %v6862 = vsel %vm6854, %v6850, %v6858
    %v6863 = vsel %vm6855, %v6851, %v6859
    %v6864 = vsel %vm6856, %v6852, %v6860
    %v6865 = vpack.c.bf16 %v6861, %v6861
    %v6866 = vpack.c.bf16 %v6862, %v6862
    %v6867 = vpack.c.bf16 %v6863, %v6863
    %v6868 = vpack.c.bf16 %v6864, %v6864
    %s6869 = scalar_lea.vmem [#allocation11], 512
    %v6870 = vld [vmem:[%s6869] sm:$0xf]
    %v6871 = vld [vmem:[%s6869 + $0x4] sm:$0xf]
    %v6872 = vld [vmem:[%s6869 + $0x8] sm:$0xf]
    %v6873 = vld [vmem:[%s6869 + $0xc] sm:$0xf]
    %v6874 = vld [vmem:[%s6869 + $0x10] sm:$0xf]
    %v6875 = vld [vmem:[%s6869 + $0x14] sm:$0xf]
    %v6876 = vld [vmem:[%s6869 + $0x18] sm:$0xf]
    %v6877 = vld [vmem:[%s6869 + $0x1c] sm:$0xf]
    %v6878 = vld [vmem:[%s6869 + $0x20] sm:$0xf]
    %v6879 = vld [vmem:[%s6869 + $0x24] sm:$0xf]
    %v6880 = vld [vmem:[%s6869 + $0x28] sm:$0xf]
    %v6881 = vld [vmem:[%s6869 + $0x2c] sm:$0xf]
    %v6882 = vld [vmem:[%s6869 + $0x30] sm:$0xf]
    %v6883 = vld [vmem:[%s6869 + $0x34] sm:$0xf]
    %v6884 = vld [vmem:[%s6869 + $0x38] sm:$0xf]
    %v6885 = vld [vmem:[%s6869 + $0x3c] sm:$0xf]
    %v6886 = vld [vmem:[%s6869 + $0x40] sm:$0xf]
    %v6887 = vld [vmem:[%s6869 + $0x44] sm:$0xf]
    %v6888 = vld [vmem:[%s6869 + $0x48] sm:$0xf]
    %v6889 = vld [vmem:[%s6869 + $0x4c] sm:$0xf]
    %v6890 = vld [vmem:[%s6869 + $0x50] sm:$0xf]
    %v6891 = vld [vmem:[%s6869 + $0x54] sm:$0xf]
    %v6892 = vld [vmem:[%s6869 + $0x58] sm:$0xf]
    %v6893 = vld [vmem:[%s6869 + $0x5c] sm:$0xf]
    %v6894 = vld [vmem:[%s6869 + $0x60] sm:$0xf]
    %v6895 = vld [vmem:[%s6869 + $0x64] sm:$0xf]
    %v6896 = vld [vmem:[%s6869 + $0x68] sm:$0xf]
    %v6897 = vld [vmem:[%s6869 + $0x6c] sm:$0xf]
    %v6898 = vld [vmem:[%s6869 + $0x70] sm:$0xf]
    %v6899 = vld [vmem:[%s6869 + $0x74] sm:$0xf]
    %v6900 = vld [vmem:[%s6869 + $0x78] sm:$0xf]
    %v6901 = vld [vmem:[%s6869 + $0x7c] sm:$0xf]
    %v6902 = vld [vmem:[%s6869 + $0x80] sm:$0xf]
    %v6903 = vld [vmem:[%s6869 + $0x84] sm:$0xf]
    %v6904 = vld [vmem:[%s6869 + $0x88] sm:$0xf]
    %v6905 = vld [vmem:[%s6869 + $0x8c] sm:$0xf]
    %v6906 = vld [vmem:[%s6869 + $0x90] sm:$0xf]
    %v6907 = vld [vmem:[%s6869 + $0x94] sm:$0xf]
    %v6908 = vld [vmem:[%s6869 + $0x98] sm:$0xf]
    %v6909 = vld [vmem:[%s6869 + $0x9c] sm:$0xf]
    %v6910 = vld [vmem:[%s6869 + $0xa0] sm:$0xf]
    %v6911 = vld [vmem:[%s6869 + $0xa4] sm:$0xf]
    %v6912 = vld [vmem:[%s6869 + $0xa8] sm:$0xf]
    %v6913 = vld [vmem:[%s6869 + $0xac] sm:$0xf]
    %v6914 = vld [vmem:[%s6869 + $0xb0] sm:$0xf]
    %v6915 = vld [vmem:[%s6869 + $0xb4] sm:$0xf]
    %v6916 = vld [vmem:[%s6869 + $0xb8] sm:$0xf]
    %v6917 = vld [vmem:[%s6869 + $0xbc] sm:$0xf]
    %v6918 = vld [vmem:[%s6869 + $0xc0] sm:$0xf]
    %v6919 = vld [vmem:[%s6869 + $0xc4] sm:$0xf]
    %v6920 = vld [vmem:[%s6869 + $0xc8] sm:$0xf]
    %v6921 = vld [vmem:[%s6869 + $0xcc] sm:$0xf]
    %v6922 = vld [vmem:[%s6869 + $0xd0] sm:$0xf]
    %v6923 = vld [vmem:[%s6869 + $0xd4] sm:$0xf]
    %v6924 = vld [vmem:[%s6869 + $0xd8] sm:$0xf]
    %v6925 = vld [vmem:[%s6869 + $0xdc] sm:$0xf]
    %v6926 = vld [vmem:[%s6869 + $0xe0] sm:$0xf]
    %v6927 = vld [vmem:[%s6869 + $0xe4] sm:$0xf]
    %v6928 = vld [vmem:[%s6869 + $0xe8] sm:$0xf]
    %v6929 = vld [vmem:[%s6869 + $0xec] sm:$0xf]
    %v6930 = vld [vmem:[%s6869 + $0xf0] sm:$0xf]
    %v6931 = vld [vmem:[%s6869 + $0xf4] sm:$0xf]
    %v6932 = vld [vmem:[%s6869 + $0xf8] sm:$0xf]
    %v6933 = vld [vmem:[%s6869 + $0xfc] sm:$0xf]
    %v6998 = vunpack.c.l.b16 %v6870
    %v6999 = vunpack.c.l.b16 %v6871
    %v7000 = vunpack.c.l.b16 %v6872
    %v7001 = vunpack.c.l.b16 %v6873
    %v7002 = vunpack.c.l.b16 %v6874
    %v7003 = vunpack.c.l.b16 %v6875
    %v7004 = vunpack.c.l.b16 %v6876
    %v7005 = vunpack.c.l.b16 %v6877
    %v7006 = vunpack.c.l.b16 %v6878
    %v7007 = vunpack.c.l.b16 %v6879
    %v7008 = vunpack.c.l.b16 %v6880
    %v7009 = vunpack.c.l.b16 %v6881
    %v7010 = vunpack.c.l.b16 %v6882
    %v7011 = vunpack.c.l.b16 %v6883
    %v7012 = vunpack.c.l.b16 %v6884
    %v7013 = vunpack.c.l.b16 %v6885
    %v7014 = vunpack.c.l.b16 %v6886
    %v7015 = vunpack.c.l.b16 %v6887
    %v7016 = vunpack.c.l.b16 %v6888
    %v7017 = vunpack.c.l.b16 %v6889
    %v7018 = vunpack.c.l.b16 %v6890
    %v7019 = vunpack.c.l.b16 %v6891
    %v7020 = vunpack.c.l.b16 %v6892
    %v7021 = vunpack.c.l.b16 %v6893
    %v7022 = vunpack.c.l.b16 %v6894
    %v7023 = vunpack.c.l.b16 %v6895
    %v7024 = vunpack.c.l.b16 %v6896
    %v7025 = vunpack.c.l.b16 %v6897
    %v7026 = vunpack.c.l.b16 %v6898
    %v7027 = vunpack.c.l.b16 %v6899
    %v7028 = vunpack.c.l.b16 %v6900
    %v7029 = vunpack.c.l.b16 %v6901
    %v7030 = vunpack.c.l.b16 %v6902
    %v7031 = vunpack.c.l.b16 %v6903
    %v7032 = vunpack.c.l.b16 %v6904
    %v7033 = vunpack.c.l.b16 %v6905
    %v7034 = vunpack.c.l.b16 %v6906
    %v7035 = vunpack.c.l.b16 %v6907
    %v7036 = vunpack.c.l.b16 %v6908
    %v7037 = vunpack.c.l.b16 %v6909
    %v7038 = vunpack.c.l.b16 %v6910
    %v7039 = vunpack.c.l.b16 %v6911
    %v7040 = vunpack.c.l.b16 %v6912
    %v7041 = vunpack.c.l.b16 %v6913
    %v7042 = vunpack.c.l.b16 %v6914
    %v7043 = vunpack.c.l.b16 %v6915
    %v7044 = vunpack.c.l.b16 %v6916
    %v7045 = vunpack.c.l.b16 %v6917
    %v7046 = vunpack.c.l.b16 %v6918
    %v7047 = vunpack.c.l.b16 %v6919
    %v7048 = vunpack.c.l.b16 %v6920
    %v7049 = vunpack.c.l.b16 %v6921
    %v7050 = vunpack.c.l.b16 %v6922
    %v7051 = vunpack.c.l.b16 %v6923
    %v7052 = vunpack.c.l.b16 %v6924
    %v7053 = vunpack.c.l.b16 %v6925
    %v7054 = vunpack.c.l.b16 %v6926
    %v7055 = vunpack.c.l.b16 %v6927
    %v7056 = vunpack.c.l.b16 %v6928
    %v7057 = vunpack.c.l.b16 %v6929
    %v7058 = vunpack.c.l.b16 %v6930
    %v7059 = vunpack.c.l.b16 %v6931
    %v7060 = vunpack.c.l.b16 %v6932
    %v7061 = vunpack.c.l.b16 %v6933
    %v7062 = vpack.c.b16 %v6999, %v6998
    %v7063 = vpack.c.b16 %v7001, %v7000
    %v7064 = vpack.c.b16 %v7003, %v7002
    %v7065 = vpack.c.b16 %v7005, %v7004
    %v7066 = vpack.c.b16 %v7007, %v7006
    %v7067 = vpack.c.b16 %v7009, %v7008
    %v7068 = vpack.c.b16 %v7011, %v7010
    %v7069 = vpack.c.b16 %v7013, %v7012
    %v7070 = vpack.c.b16 %v7015, %v7014
    %v7071 = vpack.c.b16 %v7017, %v7016
    %v7072 = vpack.c.b16 %v7019, %v7018
    %v7073 = vpack.c.b16 %v7021, %v7020
    %v7074 = vpack.c.b16 %v7023, %v7022
    %v7075 = vpack.c.b16 %v7025, %v7024
    %v7076 = vpack.c.b16 %v7027, %v7026
    %v7077 = vpack.c.b16 %v7029, %v7028
    %v7078 = vpack.c.b16 %v7031, %v7030
    %v7079 = vpack.c.b16 %v7033, %v7032
    %v7080 = vpack.c.b16 %v7035, %v7034
    %v7081 = vpack.c.b16 %v7037, %v7036
    %v7082 = vpack.c.b16 %v7039, %v7038
    %v7083 = vpack.c.b16 %v7041, %v7040
    %v7084 = vpack.c.b16 %v7043, %v7042
    %v7085 = vpack.c.b16 %v7045, %v7044
    %v7086 = vpack.c.b16 %v7047, %v7046
    %v7087 = vpack.c.b16 %v7049, %v7048
    %v7088 = vpack.c.b16 %v7051, %v7050
    %v7089 = vpack.c.b16 %v7053, %v7052
    %v7090 = vpack.c.b16 %v7055, %v7054
    %v7091 = vpack.c.b16 %v7057, %v7056
    %v7092 = vpack.c.b16 %v7059, %v7058
    %v7093 = vpack.c.b16 %v7061, %v7060
    %7126 = vmatpush.bf16.msra.mxu0 %v7069
    %7127 = vmatpush.bf16.msra.mxu0 %v7068
    %7128 = vmatpush.bf16.msra.mxu0 %v7067
    %7129 = vmatpush.bf16.msra.mxu0 %v7066
    %7130 = vmatpush.bf16.msra.mxu0 %v7065
    %7131 = vmatpush.bf16.msra.mxu0 %v7064
    %7132 = vmatpush.bf16.msra.mxu0 %v7063
    %7133 = vmatpush.bf16.msra.mxu0 %v7062
    %7134 = vmatmul.bf16.gmra.mxu0 %v6865
    %v7135 = vpop.f32.mrf.mxu0
    %v7136 = vadd.f32 0.0, %v7135
    %v7137 = vpop.f32.mrf.mxu0
    %7138 = vdwg.mxu0
    %7139 = vmatpush.bf16.msra.mxu0 %v7077
    %7140 = vmatpush.bf16.msra.mxu0 %v7076
    %7141 = vmatpush.bf16.msra.mxu0 %v7075
    %7142 = vmatpush.bf16.msra.mxu0 %v7074
    %7143 = vmatpush.bf16.msra.mxu0 %v7073
    %7144 = vmatpush.bf16.msra.mxu0 %v7072
    %7145 = vmatpush.bf16.msra.mxu0 %v7071
    %7146 = vmatpush.bf16.msra.mxu0 %v7070
    %7147 = vmatmul.bf16.gmra.mxu0 %v6866
    %v7148 = vpop.f32.mrf.mxu0
    %v7149 = vadd.f32 %v7136, %v7148
    %v7150 = vpop.f32.mrf.mxu0
    %7151 = vdwg.mxu0
    %7152 = vmatpush.bf16.msra.mxu0 %v7085
    %7153 = vmatpush.bf16.msra.mxu0 %v7084
    %7154 = vmatpush.bf16.msra.mxu0 %v7083
    %7155 = vmatpush.bf16.msra.mxu0 %v7082
    %7156 = vmatpush.bf16.msra.mxu0 %v7081
    %7157 = vmatpush.bf16.msra.mxu0 %v7080
    %7158 = vmatpush.bf16.msra.mxu0 %v7079
    %7159 = vmatpush.bf16.msra.mxu0 %v7078
    %7160 = vmatmul.bf16.gmra.mxu0 %v6867
    %v7161 = vpop.f32.mrf.mxu0
    %v7162 = vadd.f32 %v7149, %v7161
    %v7163 = vpop.f32.mrf.mxu0
    %7164 = vdwg.mxu0
    %7165 = vmatpush.bf16.msra.mxu0 %v7093
    %7166 = vmatpush.bf16.msra.mxu0 %v7092
    %7167 = vmatpush.bf16.msra.mxu0 %v7091
    %7168 = vmatpush.bf16.msra.mxu0 %v7090
    %7169 = vmatpush.bf16.msra.mxu0 %v7089
    %7170 = vmatpush.bf16.msra.mxu0 %v7088
    %7171 = vmatpush.bf16.msra.mxu0 %v7087
    %7172 = vmatpush.bf16.msra.mxu0 %v7086
    %7173 = vmatmul.bf16.gmra.mxu0 %v6868
    %v7174 = vpop.f32.mrf.mxu0
    %v7175 = vadd.f32 %v7162, %v7174
    %v7176 = vpop.f32.mrf.mxu0
    %7177 = vdwg.mxu0
    %v7178 = vadd.f32 %v6818, %v7175
    %v7179 = vperm.slane %v6100, 3
    %v7180 = vperm.slane %v6100, 7
    %v7181 = vperm.slane %v6101, 3
    %v7182 = vperm.slane %v6101, 7
    %v7187 = vperm.slane %v7179, 3
    %v7188 = vperm.slane %v7180, 3
    %v7189 = vperm.slane %v7181, 3
    %v7190 = vperm.slane %v7182, 3
    %v7191 = vmul.f32 %v6096, %v7187
    %v7192 = vmul.f32 %v6097, %v7188
    %v7193 = vmul.f32 %v6098, %v7189
    %v7194 = vmul.f32 %v6099, %v7190
    %v7195 = vperm.slane %v6102, 3
    %v7196 = vperm.slane %v6102, 7
    %v7197 = vperm.slane %v6103, 3
    %v7198 = vperm.slane %v6103, 7
    %v7203 = vperm.slane %v7195, 3
    %v7204 = vperm.slane %v7196, 3
    %v7205 = vperm.slane %v7197, 3
    %v7206 = vperm.slane %v7198, 3
    %v7207 = vadd.f32 %v7191, %v7203
    %v7208 = vadd.f32 %v7192, %v7204
    %v7209 = vadd.f32 %v7193, %v7205
    %v7210 = vadd.f32 %v7194, %v7206
    %vm7211 = vcmp.ge.f32.partialorder %v7207, 0.0
    %vm7212 = vcmp.ge.f32.partialorder %v7208, 0.0
    %vm7213 = vcmp.ge.f32.partialorder %v7209, 0.0
    %vm7214 = vcmp.ge.f32.partialorder %v7210, 0.0
    %v7215 = vmul.f32 %v7207, 0.01
    %v7216 = vmul.f32 %v7208, 0.01
    %v7217 = vmul.f32 %v7209, 0.01
    %v7218 = vmul.f32 %v7210, 0.01
    %v7219 = vsel %vm7211, %v7207, %v7215
    %v7220 = vsel %vm7212, %v7208, %v7216
    %v7221 = vsel %vm7213, %v7209, %v7217
    %v7222 = vsel %vm7214, %v7210, %v7218
    %v7223 = vpack.c.bf16 %v7219, %v7219
    %v7224 = vpack.c.bf16 %v7220, %v7220
    %v7225 = vpack.c.bf16 %v7221, %v7221
    %v7226 = vpack.c.bf16 %v7222, %v7222
    %s7227 = scalar_lea.vmem [#allocation11], 768
    %v7228 = vld [vmem:[%s7227] sm:$0xf]
    %v7229 = vld [vmem:[%s7227 + $0x4] sm:$0xf]
    %v7230 = vld [vmem:[%s7227 + $0x8] sm:$0xf]
    %v7231 = vld [vmem:[%s7227 + $0xc] sm:$0xf]
    %v7232 = vld [vmem:[%s7227 + $0x10] sm:$0xf]
    %v7233 = vld [vmem:[%s7227 + $0x14] sm:$0xf]
    %v7234 = vld [vmem:[%s7227 + $0x18] sm:$0xf]
    %v7235 = vld [vmem:[%s7227 + $0x1c] sm:$0xf]
    %v7236 = vld [vmem:[%s7227 + $0x20] sm:$0xf]
    %v7237 = vld [vmem:[%s7227 + $0x24] sm:$0xf]
    %v7238 = vld [vmem:[%s7227 + $0x28] sm:$0xf]
    %v7239 = vld [vmem:[%s7227 + $0x2c] sm:$0xf]
    %v7240 = vld [vmem:[%s7227 + $0x30] sm:$0xf]
    %v7241 = vld [vmem:[%s7227 + $0x34] sm:$0xf]
    %v7242 = vld [vmem:[%s7227 + $0x38] sm:$0xf]
    %v7243 = vld [vmem:[%s7227 + $0x3c] sm:$0xf]
    %v7244 = vld [vmem:[%s7227 + $0x40] sm:$0xf]
    %v7245 = vld [vmem:[%s7227 + $0x44] sm:$0xf]
    %v7246 = vld [vmem:[%s7227 + $0x48] sm:$0xf]
    %v7247 = vld [vmem:[%s7227 + $0x4c] sm:$0xf]
    %v7248 = vld [vmem:[%s7227 + $0x50] sm:$0xf]
    %v7249 = vld [vmem:[%s7227 + $0x54] sm:$0xf]
    %v7250 = vld [vmem:[%s7227 + $0x58] sm:$0xf]
    %v7251 = vld [vmem:[%s7227 + $0x5c] sm:$0xf]
    %v7252 = vld [vmem:[%s7227 + $0x60] sm:$0xf]
    %v7253 = vld [vmem:[%s7227 + $0x64] sm:$0xf]
    %v7254 = vld [vmem:[%s7227 + $0x68] sm:$0xf]
    %v7255 = vld [vmem:[%s7227 + $0x6c] sm:$0xf]
    %v7256 = vld [vmem:[%s7227 + $0x70] sm:$0xf]
    %v7257 = vld [vmem:[%s7227 + $0x74] sm:$0xf]
    %v7258 = vld [vmem:[%s7227 + $0x78] sm:$0xf]
    %v7259 = vld [vmem:[%s7227 + $0x7c] sm:$0xf]
    %v7260 = vld [vmem:[%s7227 + $0x80] sm:$0xf]
    %v7261 = vld [vmem:[%s7227 + $0x84] sm:$0xf]
    %v7262 = vld [vmem:[%s7227 + $0x88] sm:$0xf]
    %v7263 = vld [vmem:[%s7227 + $0x8c] sm:$0xf]
    %v7264 = vld [vmem:[%s7227 + $0x90] sm:$0xf]
    %v7265 = vld [vmem:[%s7227 + $0x94] sm:$0xf]
    %v7266 = vld [vmem:[%s7227 + $0x98] sm:$0xf]
    %v7267 = vld [vmem:[%s7227 + $0x9c] sm:$0xf]
    %v7268 = vld [vmem:[%s7227 + $0xa0] sm:$0xf]
    %v7269 = vld [vmem:[%s7227 + $0xa4] sm:$0xf]
    %v7270 = vld [vmem:[%s7227 + $0xa8] sm:$0xf]
    %v7271 = vld [vmem:[%s7227 + $0xac] sm:$0xf]
    %v7272 = vld [vmem:[%s7227 + $0xb0] sm:$0xf]
    %v7273 = vld [vmem:[%s7227 + $0xb4] sm:$0xf]
    %v7274 = vld [vmem:[%s7227 + $0xb8] sm:$0xf]
    %v7275 = vld [vmem:[%s7227 + $0xbc] sm:$0xf]
    %v7276 = vld [vmem:[%s7227 + $0xc0] sm:$0xf]
    %v7277 = vld [vmem:[%s7227 + $0xc4] sm:$0xf]
    %v7278 = vld [vmem:[%s7227 + $0xc8] sm:$0xf]
    %v7279 = vld [vmem:[%s7227 + $0xcc] sm:$0xf]
    %v7280 = vld [vmem:[%s7227 + $0xd0] sm:$0xf]
    %v7281 = vld [vmem:[%s7227 + $0xd4] sm:$0xf]
    %v7282 = vld [vmem:[%s7227 + $0xd8] sm:$0xf]
    %v7283 = vld [vmem:[%s7227 + $0xdc] sm:$0xf]
    %v7284 = vld [vmem:[%s7227 + $0xe0] sm:$0xf]
    %v7285 = vld [vmem:[%s7227 + $0xe4] sm:$0xf]
    %v7286 = vld [vmem:[%s7227 + $0xe8] sm:$0xf]
    %v7287 = vld [vmem:[%s7227 + $0xec] sm:$0xf]
    %v7288 = vld [vmem:[%s7227 + $0xf0] sm:$0xf]
    %v7289 = vld [vmem:[%s7227 + $0xf4] sm:$0xf]
    %v7290 = vld [vmem:[%s7227 + $0xf8] sm:$0xf]
    %v7291 = vld [vmem:[%s7227 + $0xfc] sm:$0xf]
    %v7356 = vunpack.c.l.b16 %v7228
    %v7357 = vunpack.c.l.b16 %v7229
    %v7358 = vunpack.c.l.b16 %v7230
    %v7359 = vunpack.c.l.b16 %v7231
    %v7360 = vunpack.c.l.b16 %v7232
    %v7361 = vunpack.c.l.b16 %v7233
    %v7362 = vunpack.c.l.b16 %v7234
    %v7363 = vunpack.c.l.b16 %v7235
    %v7364 = vunpack.c.l.b16 %v7236
    %v7365 = vunpack.c.l.b16 %v7237
    %v7366 = vunpack.c.l.b16 %v7238
    %v7367 = vunpack.c.l.b16 %v7239
    %v7368 = vunpack.c.l.b16 %v7240
    %v7369 = vunpack.c.l.b16 %v7241
    %v7370 = vunpack.c.l.b16 %v7242
    %v7371 = vunpack.c.l.b16 %v7243
    %v7372 = vunpack.c.l.b16 %v7244
    %v7373 = vunpack.c.l.b16 %v7245
    %v7374 = vunpack.c.l.b16 %v7246
    %v7375 = vunpack.c.l.b16 %v7247
    %v7376 = vunpack.c.l.b16 %v7248
    %v7377 = vunpack.c.l.b16 %v7249
    %v7378 = vunpack.c.l.b16 %v7250
    %v7379 = vunpack.c.l.b16 %v7251
    %v7380 = vunpack.c.l.b16 %v7252
    %v7381 = vunpack.c.l.b16 %v7253
    %v7382 = vunpack.c.l.b16 %v7254
    %v7383 = vunpack.c.l.b16 %v7255
    %v7384 = vunpack.c.l.b16 %v7256
    %v7385 = vunpack.c.l.b16 %v7257
    %v7386 = vunpack.c.l.b16 %v7258
    %v7387 = vunpack.c.l.b16 %v7259
    %v7388 = vunpack.c.l.b16 %v7260
    %v7389 = vunpack.c.l.b16 %v7261
    %v7390 = vunpack.c.l.b16 %v7262
    %v7391 = vunpack.c.l.b16 %v7263
    %v7392 = vunpack.c.l.b16 %v7264
    %v7393 = vunpack.c.l.b16 %v7265
    %v7394 = vunpack.c.l.b16 %v7266
    %v7395 = vunpack.c.l.b16 %v7267
    %v7396 = vunpack.c.l.b16 %v7268
    %v7397 = vunpack.c.l.b16 %v7269
    %v7398 = vunpack.c.l.b16 %v7270
    %v7399 = vunpack.c.l.b16 %v7271
    %v7400 = vunpack.c.l.b16 %v7272
    %v7401 = vunpack.c.l.b16 %v7273
    %v7402 = vunpack.c.l.b16 %v7274
    %v7403 = vunpack.c.l.b16 %v7275
    %v7404 = vunpack.c.l.b16 %v7276
    %v7405 = vunpack.c.l.b16 %v7277
    %v7406 = vunpack.c.l.b16 %v7278
    %v7407 = vunpack.c.l.b16 %v7279
    %v7408 = vunpack.c.l.b16 %v7280
    %v7409 = vunpack.c.l.b16 %v7281
    %v7410 = vunpack.c.l.b16 %v7282
    %v7411 = vunpack.c.l.b16 %v7283
    %v7412 = vunpack.c.l.b16 %v7284
    %v7413 = vunpack.c.l.b16 %v7285
    %v7414 = vunpack.c.l.b16 %v7286
    %v7415 = vunpack.c.l.b16 %v7287
    %v7416 = vunpack.c.l.b16 %v7288
    %v7417 = vunpack.c.l.b16 %v7289
    %v7418 = vunpack.c.l.b16 %v7290
    %v7419 = vunpack.c.l.b16 %v7291
    %v7420 = vpack.c.b16 %v7357, %v7356
    %v7421 = vpack.c.b16 %v7359, %v7358
    %v7422 = vpack.c.b16 %v7361, %v7360
    %v7423 = vpack.c.b16 %v7363, %v7362
    %v7424 = vpack.c.b16 %v7365, %v7364
    %v7425 = vpack.c.b16 %v7367, %v7366
    %v7426 = vpack.c.b16 %v7369, %v7368
    %v7427 = vpack.c.b16 %v7371, %v7370
    %v7428 = vpack.c.b16 %v7373, %v7372
    %v7429 = vpack.c.b16 %v7375, %v7374
    %v7430 = vpack.c.b16 %v7377, %v7376
    %v7431 = vpack.c.b16 %v7379, %v7378
    %v7432 = vpack.c.b16 %v7381, %v7380
    %v7433 = vpack.c.b16 %v7383, %v7382
    %v7434 = vpack.c.b16 %v7385, %v7384
    %v7435 = vpack.c.b16 %v7387, %v7386
    %v7436 = vpack.c.b16 %v7389, %v7388
    %v7437 = vpack.c.b16 %v7391, %v7390
    %v7438 = vpack.c.b16 %v7393, %v7392
    %v7439 = vpack.c.b16 %v7395, %v7394
    %v7440 = vpack.c.b16 %v7397, %v7396
    %v7441 = vpack.c.b16 %v7399, %v7398
    %v7442 = vpack.c.b16 %v7401, %v7400
    %v7443 = vpack.c.b16 %v7403, %v7402
    %v7444 = vpack.c.b16 %v7405, %v7404
    %v7445 = vpack.c.b16 %v7407, %v7406
    %v7446 = vpack.c.b16 %v7409, %v7408
    %v7447 = vpack.c.b16 %v7411, %v7410
    %v7448 = vpack.c.b16 %v7413, %v7412
    %v7449 = vpack.c.b16 %v7415, %v7414
    %v7450 = vpack.c.b16 %v7417, %v7416
    %v7451 = vpack.c.b16 %v7419, %v7418
    %7484 = vmatpush.bf16.msra.mxu0 %v7427
    %7485 = vmatpush.bf16.msra.mxu0 %v7426
    %7486 = vmatpush.bf16.msra.mxu0 %v7425
    %7487 = vmatpush.bf16.msra.mxu0 %v7424
    %7488 = vmatpush.bf16.msra.mxu0 %v7423
    %7489 = vmatpush.bf16.msra.mxu0 %v7422
    %7490 = vmatpush.bf16.msra.mxu0 %v7421
    %7491 = vmatpush.bf16.msra.mxu0 %v7420
    %7492 = vmatmul.bf16.gmra.mxu0 %v7223
    %v7493 = vpop.f32.mrf.mxu0
    %v7494 = vadd.f32 0.0, %v7493
    %v7495 = vpop.f32.mrf.mxu0
    %7496 = vdwg.mxu0
    %7497 = vmatpush.bf16.msra.mxu0 %v7435
    %7498 = vmatpush.bf16.msra.mxu0 %v7434
    %7499 = vmatpush.bf16.msra.mxu0 %v7433
    %7500 = vmatpush.bf16.msra.mxu0 %v7432
    %7501 = vmatpush.bf16.msra.mxu0 %v7431
    %7502 = vmatpush.bf16.msra.mxu0 %v7430
    %7503 = vmatpush.bf16.msra.mxu0 %v7429
    %7504 = vmatpush.bf16.msra.mxu0 %v7428
    %7505 = vmatmul.bf16.gmra.mxu0 %v7224
    %v7506 = vpop.f32.mrf.mxu0
    %v7507 = vadd.f32 %v7494, %v7506
    %v7508 = vpop.f32.mrf.mxu0
    %7509 = vdwg.mxu0
    %7510 = vmatpush.bf16.msra.mxu0 %v7443
    %7511 = vmatpush.bf16.msra.mxu0 %v7442
    %7512 = vmatpush.bf16.msra.mxu0 %v7441
    %7513 = vmatpush.bf16.msra.mxu0 %v7440
    %7514 = vmatpush.bf16.msra.mxu0 %v7439
    %7515 = vmatpush.bf16.msra.mxu0 %v7438
    %7516 = vmatpush.bf16.msra.mxu0 %v7437
    %7517 = vmatpush.bf16.msra.mxu0 %v7436
    %7518 = vmatmul.bf16.gmra.mxu0 %v7225
    %v7519 = vpop.f32.mrf.mxu0
    %v7520 = vadd.f32 %v7507, %v7519
    %v7521 = vpop.f32.mrf.mxu0
    %7522 = vdwg.mxu0
    %7523 = vmatpush.bf16.msra.mxu0 %v7451
    %7524 = vmatpush.bf16.msra.mxu0 %v7450
    %7525 = vmatpush.bf16.msra.mxu0 %v7449
    %7526 = vmatpush.bf16.msra.mxu0 %v7448
    %7527 = vmatpush.bf16.msra.mxu0 %v7447
    %7528 = vmatpush.bf16.msra.mxu0 %v7446
    %7529 = vmatpush.bf16.msra.mxu0 %v7445
    %7530 = vmatpush.bf16.msra.mxu0 %v7444
    %7531 = vmatmul.bf16.gmra.mxu0 %v7226
    %v7532 = vpop.f32.mrf.mxu0
    %v7533 = vadd.f32 %v7520, %v7532
    %v7534 = vpop.f32.mrf.mxu0
    %7535 = vdwg.mxu0
    %v7536 = vadd.f32 %v7178, %v7533
    %v7537 = vld [vmem:[#allocation13] sm:$0x1]
    %v7539 = vperm.slane %v7537, 0
    %v7541 = vadd.f32 %v7536, %v7539
    %7542 = vst [vmem:[#allocation14] sm:$0xff] %v7541
    // Predicated region
    $region58: #{tpu_custom_call.1} parent=1 // pred_check
      _
    $region59: #{tpu_custom_call.1} parent=1 // pred_check_branch
      %7544 = sbr.rel (0) target = $region61
    $region60: #{tpu_custom_call.1} parent=1 // pred_region
      %7546 = vsyncadd [#allocation4], 0
      %s7548 = sshll.u32 [#allocation14], 4
      %s7549 = int_to_ptr.vmem [resolvable:$true] %s7548
      %s7550 = sshll.u32 %s7, 4
      %s7551 = int_to_ptr.hbm [resolvable:$true] %s7550
      %7553 = dma.vmem_to_hbm [thread:$0]  %s7549, 128, %s7551, [#allocation4]
    $region61: #{tpu_custom_call.1} parent=1 // pred_fallthru
      _
    // Predicated region
    $region62: #{tpu_custom_call.1} parent=1 // pred_check
      _
    $region63: #{tpu_custom_call.1} parent=1 // pred_check_branch
      %7555 = sbr.rel (0) target = $region65
    $region64: #{tpu_custom_call.1} parent=1 // pred_region
      %7557 = dma.done [#allocation4], 128
    $region65: #{tpu_custom_call.1} parent=1 // pred_fallthru
      _
    %7558 = vsyncpa [#allocation3], 1
    %7559 = vsyncpa [#allocation6], 1
    %7560 = vsyncpa [#allocation9], 1
    %7561 = vsyncpa [#allocation12], 1
    %7562 = vsyncpa [#allocation4], 1

</llo_original>
